<compile_context>
chip_gen: v5e
topology: v5e:2x2
jax: 0.10.0
libtpu: 0.0.40
codegen_flags: <defaults>
</compile_context>

<pallas_src>
import functools

import jax
import jax.numpy as jnp
import numpy as np
from jax import lax
from jax.experimental import pallas as pl
from jax.experimental.pallas import tpu as pltpu


def _pick_tile(total, pref):
    """Largest multiple of 8 that divides `total` and is <= pref, else the full axis."""
    t = min(pref, total)
    t -= t % 8
    while t >= 8:
        if total % t == 0:
            return t
        t -= 8
    return total  # full axis is always a legal block dim


def _kernel(s_ref, t_ref, a_ref, w2_ref, b2_ref, out_ref, max_sc, sum_sc,
            *, half, inv_denom, precision):
    ki = pl.program_id(2)

    @pl.when(ki == 0)
    def _():
        # ReLU outputs are non-negative, so 0 is a valid identity for the running max.
        max_sc[...] = jnp.zeros_like(max_sc)
        sum_sc[...] = jnp.zeros_like(sum_sc)

    s = s_ref[0]          # [TN, Co]   x @ (W1a-W1b-W1c) + b1, this n-block
    t = t_ref[0]          # [TK, Co]   x1 @ W1b, this k-block
    a = a_ref[0]          # [N2, Co]   x2 @ W1c, all of N2
    tn, co = s.shape
    tk = t.shape[0]
    n2 = a.shape[0]

    # First Linear (hoisted projections) + ReLU for every (k, n, j) pair in the block.
    st = t[:, None, :] + s[None, :, :]                                # [TK, TN, Co]
    h1 = jnp.maximum(st[:, :, None, :] + a[None, None, :, :], 0.0)    # [TK, TN, N2, Co]

    # Second Linear as ONE large-M MXU matmul, then bias + ReLU.
    h2 = jnp.dot(h1.reshape(tk * tn * n2, co), w2_ref[...],
                 precision=precision, preferred_element_type=jnp.float32)
    h2 = jnp.maximum(h2 + b2_ref[...], 0.0).reshape(tk, tn, n2, co)

    # Per-step reduction over the leading TK axis only: pure elementwise accumulation.
    max_sc[...] = jnp.maximum(max_sc[...], jnp.max(h2, axis=0))
    sum_sc[...] = sum_sc[...] + jnp.sum(h2, axis=0)

    @pl.when(ki == pl.num_programs(2) - 1)
    def _():
        # Cross-sublane reduce over N2 once per n-block, then one fused [TN, Co] store.
        pw_max = jnp.max(max_sc[...][:, :, :half], axis=1)                  # [TN, half]
        pw_avg = jnp.sum(sum_sc[...][:, :, half:], axis=1) * inv_denom      # [TN, Co-half]
        out_ref[0, :, :] = jnp.concatenate([pw_max, pw_avg],
                                           axis=-1).astype(out_ref.dtype)


def point_pairwise_relation3(x, x1, x2, w1, b1, w2, b2, *,
                             tn=16, tk=16, precision=lax.Precision.HIGHEST):
    """Pallas implementation of PointPairwiseRelation3.forward.

    x : [B, N, C], x1 : [B, N1, C], x2 : [B, N2, C]  ->  out : [B, N, Co]
    """
    B, N, C = x.shape
    _, N1, _ = x1.shape
    _, N2, _ = x2.shape
    Co = w2.shape[1]
    half = Co // 2
    inv_denom = 1.0 / float(N1 * N2)

    TN = _pick_tile(N, tn)
    TK = _pick_tile(N1, tk)

    f32 = jnp.float32
    w1a = w1[:C]
    w1b = w1[C:2 * C]
    w1c = w1[2 * C:]

    # Hoisted first Linear: feat @ W1 == x@(W1a-W1b-W1c) + x1@W1b + x2@W1c  (+ b1).
    s_proj = (jnp.dot(x.astype(f32), (w1a - w1b - w1c).astype(f32), precision=precision)
              + b1.astype(f32))                                              # [B, N, Co]
    t_proj = jnp.dot(x1.astype(f32), w1b.astype(f32), precision=precision)  # [B, N1, Co]
    a_proj = jnp.dot(x2.astype(f32), w1c.astype(f32), precision=precision)  # [B, N2, Co]

    kernel = functools.partial(_kernel, half=half, inv_denom=inv_denom,
                               precision=precision)

    grid_spec = pltpu.PrefetchScalarGridSpec(
        num_scalar_prefetch=0,
        grid=(B, N // TN, N1 // TK),
        in_specs=[
            pl.BlockSpec((1, TN, Co), lambda b, ni, ki: (b, ni, 0)),   # S (per n-block)
            pl.BlockSpec((1, TK, Co), lambda b, ni, ki: (b, ki, 0)),   # T (per k-block)
            pl.BlockSpec((1, N2, Co), lambda b, ni, ki: (b, 0, 0)),    # A (per batch)
            pl.BlockSpec((Co, Co), lambda b, ni, ki: (0, 0)),          # W2
            pl.BlockSpec((1, Co), lambda b, ni, ki: (0, 0)),           # b2
        ],
        out_specs=pl.BlockSpec((1, TN, Co), lambda b, ni, ki: (b, ni, 0)),
        scratch_shapes=[pltpu.VMEM((TN, N2, Co), jnp.float32),   # running max
                        pltpu.VMEM((TN, N2, Co), jnp.float32)],  # running sum
    )

    return pl.pallas_call(
        kernel,
        out_shape=jax.ShapeDtypeStruct((B, N, Co), x.dtype),
        grid_spec=grid_spec,
        compiler_params=pltpu.CompilerParams(
            dimension_semantics=("parallel", "parallel", "arbitrary")),
    )(s_proj, t_proj, a_proj, w2.astype(f32), b2.reshape(1, Co).astype(f32))


def reference(x, x1, x2, w1, b1, w2, b2):
    """Pure-JAX transliteration of the PyTorch forward (builds the full 5-D tensor)."""
    B, N, C = x.shape
    N1 = x1.shape[1]
    N2 = x2.shape[1]
    Co = w2.shape[1]
    hi = lax.Precision.HIGHEST
    xa = jnp.broadcast_to(x[:, :, None, None, :], (B, N, N1, N2, C))
    xb = jnp.broadcast_to(x1[:, None, :, None, :], (B, N, N1, N2, C))
    xc = jnp.broadcast_to(x2[:, None, None, :, :], (B, N, N1, N2, C))
    feat = jnp.concatenate([xa, xb - xa, xc - xa], axis=-1)          # [B,N,N1,N2,3C]
    h1 = jax.nn.relu(jnp.dot(feat, w1, precision=hi) + b1)
    h2 = jax.nn.relu(jnp.dot(h1, w2, precision=hi) + b2)
    half = Co // 2
    pw_max = jnp.max(h2[..., :half], axis=(2, 3))
    pw_avg = jnp.mean(h2[..., half:], axis=(2, 3))
    return jnp.concatenate([pw_max, pw_avg], axis=-1)


if __name__ == "__main__":
    # Small shapes consistent with the module.  tn=tk=8 gives multiple n-blocks and
    # k-blocks so the accumulator init / accumulate / epilogue paths all run.
    B, N, N1, N2, C, Co = 2, 16, 16, 8, 16, 16

    key = jax.random.PRNGKey(0)
    kx, kx1, kx2, kw1, kb1, kw2, kb2 = jax.random.split(key, 7)
    x = jax.random.normal(kx, (B, N, C), jnp.float32)
    x1 = jax.random.normal(kx1, (B, N1, C), jnp.float32)
    x2 = jax.random.normal(kx2, (B, N2, C), jnp.float32)

    # Deterministic nn.Linear-style init: U(-1/sqrt(fan_in), 1/sqrt(fan_in)).
    bnd1 = 1.0 / float(np.sqrt(3 * C))
    bnd2 = 1.0 / float(np.sqrt(Co))
    w1 = jax.random.uniform(kw1, (3 * C, Co), jnp.float32, -bnd1, bnd1)
    b1 = jax.random.uniform(kb1, (Co,), jnp.float32, -bnd1, bnd1)
    w2 = jax.random.uniform(kw2, (Co, Co), jnp.float32, -bnd2, bnd2)
    b2 = jax.random.uniform(kb2, (Co,), jnp.float32, -bnd2, bnd2)

    out = point_pairwise_relation3(x, x1, x2, w1, b1, w2, b2, tn=8, tk=8)
    out = jax.block_until_ready(out)

    ref = reference(x, x1, x2, w1, b1, w2, b2)
    np.testing.assert_allclose(np.asarray(out), np.asarray(ref), rtol=1e-4, atol=1e-4)
    print("KERNEL_OK")
</pallas_src>

<mosaic_0001>
module attributes {stable_mosaic.version = 11 : i64} {
  func.func @_kernel(%arg0: i32, %arg1: i32, %arg2: i32, %arg3: memref<1x8x16xf32, #tpu.memory_space<vmem>>, %arg4: memref<1x8x16xf32, #tpu.memory_space<vmem>>, %arg5: memref<1x8x16xf32, #tpu.memory_space<vmem>>, %arg6: memref<16x16xf32, #tpu.memory_space<vmem>>, %arg7: memref<1x16xf32, #tpu.memory_space<vmem>>, %arg8: memref<1x8x16xf32, #tpu.memory_space<vmem>>, %arg9: memref<8x8x16xf32, #tpu.memory_space<vmem>>, %arg10: memref<8x8x16xf32, #tpu.memory_space<vmem>>) attributes {dimension_semantics = [#tpu.dimension_semantics<parallel>, #tpu.dimension_semantics<parallel>, #tpu.dimension_semantics<arbitrary>], iteration_bounds = array<i64: 2, 2, 2>, scalar_prefetch = 0 : i64, scratch_operands = 2 : i64, tpu.core_type = #tpu.core_type<tc>, window_params = [{transform_indices = @transform_0, window_bounds = array<i64: 1, 8, 16>}, {transform_indices = @transform_1, window_bounds = array<i64: 1, 8, 16>}, {transform_indices = @transform_2, window_bounds = array<i64: 1, 8, 16>}, {pipeline_mode = #tpu.pipeline_mode<synchronous>, transform_indices = @transform_3, window_bounds = array<i64: 16, 16>}, {pipeline_mode = #tpu.pipeline_mode<synchronous>, transform_indices = @transform_4, window_bounds = array<i64: 1, 16>}, {transform_indices = @transform_5, window_bounds = array<i64: 1, 8, 16>}]} {
    %c0_i32 = arith.constant 0 : i32
    %0 = arith.cmpi eq, %arg2, %c0_i32 : i32
    %1 = arith.extui %0 : i1 to i32
    %c0_i32_0 = arith.constant 0 : i32
    %2 = arith.cmpi ne, %1, %c0_i32_0 : i32
    scf.if %2 {
      %cst_30 = arith.constant 0.000000e+00 : f32
      %41 = vector.broadcast %cst_30 : f32 to vector<8x8x16xf32>
      %c0_31 = arith.constant 0 : index
      %c0_32 = arith.constant 0 : index
      %c0_33 = arith.constant 0 : index
      %42 = vector.load %arg9[%c0_31, %c0_32, %c0_33] : memref<8x8x16xf32, #tpu.memory_space<vmem>>, vector<8x8x16xf32>
      tpu.vector_store %arg9[%c0_31, %c0_32, %c0_33], %41 {strides = array<i32>} : memref<8x8x16xf32, #tpu.memory_space<vmem>>, vector<8x8x16xf32>,
      %cst_34 = arith.constant 0.000000e+00 : f32
      %43 = vector.broadcast %cst_34 : f32 to vector<8x8x16xf32>
      %c0_35 = arith.constant 0 : index
      %c0_36 = arith.constant 0 : index
      %c0_37 = arith.constant 0 : index
      %44 = vector.load %arg10[%c0_35, %c0_36, %c0_37] : memref<8x8x16xf32, #tpu.memory_space<vmem>>, vector<8x8x16xf32>
      tpu.vector_store %arg10[%c0_35, %c0_36, %c0_37], %43 {strides = array<i32>} : memref<8x8x16xf32, #tpu.memory_space<vmem>>, vector<8x8x16xf32>,
    } else {
    }
    %c0 = arith.constant 0 : index
    %c0_1 = arith.constant 0 : index
    %c0_2 = arith.constant 0 : index
    %3 = vector.load %arg3[%c0, %c0_1, %c0_2] : memref<1x8x16xf32, #tpu.memory_space<vmem>>, vector<1x8x16xf32>
    %4 = vector.shape_cast %3 : vector<1x8x16xf32> to vector<8x16xf32>
    %c0_3 = arith.constant 0 : index
    %c0_4 = arith.constant 0 : index
    %c0_5 = arith.constant 0 : index
    %5 = vector.load %arg4[%c0_3, %c0_4, %c0_5] : memref<1x8x16xf32, #tpu.memory_space<vmem>>, vector<1x8x16xf32>
    %6 = vector.shape_cast %5 : vector<1x8x16xf32> to vector<8x16xf32>
    %c0_6 = arith.constant 0 : index
    %c0_7 = arith.constant 0 : index
    %c0_8 = arith.constant 0 : index
    %7 = vector.load %arg5[%c0_6, %c0_7, %c0_8] : memref<1x8x16xf32, #tpu.memory_space<vmem>>, vector<1x8x16xf32>
    %8 = vector.shape_cast %7 : vector<1x8x16xf32> to vector<8x16xf32>
    %9 = vector.shape_cast %6 : vector<8x16xf32> to vector<8x1x16xf32>
    %10 = vector.shape_cast %4 : vector<8x16xf32> to vector<1x8x16xf32>
    %11 = vector.broadcast %9 : vector<8x1x16xf32> to vector<8x8x16xf32>
    %12 = vector.broadcast %10 : vector<1x8x16xf32> to vector<8x8x16xf32>
    %13 = arith.addf %11, %12 : vector<8x8x16xf32>
    %14 = vector.shape_cast %13 : vector<8x8x16xf32> to vector<8x8x1x16xf32>
    %15 = vector.shape_cast %8 : vector<8x16xf32> to vector<1x1x8x16xf32>
    %16 = vector.broadcast %14 : vector<8x8x1x16xf32> to vector<8x8x8x16xf32>
    %17 = vector.broadcast %15 : vector<1x1x8x16xf32> to vector<8x8x8x16xf32>
    %18 = arith.addf %16, %17 : vector<8x8x8x16xf32>
    %cst = arith.constant 0.000000e+00 : f32
    %19 = vector.broadcast %cst : f32 to vector<8x8x8x16xf32>
    %20 = arith.maximumf %18, %19 : vector<8x8x8x16xf32>
    %21 = vector.shape_cast %20 : vector<8x8x8x16xf32> to vector<512x16xf32>
    %c0_9 = arith.constant 0 : index
    %c0_10 = arith.constant 0 : index
    %22 = vector.load %arg6[%c0_9, %c0_10] : memref<16x16xf32, #tpu.memory_space<vmem>>, vector<16x16xf32>
    %cst_11 = arith.constant dense<0.000000e+00> : vector<512x16xf32>
    %23 = tpu.matmul %21, %22, %cst_11 {dimension_numbers = #tpu.dot_dimension_numbers<[1], [0], [0], [1], [0, 0, 1, 1], [], []>, precision = #tpu.contract_precision<fp32>} : vector<512x16xf32>, vector<16x16xf32>, vector<512x16xf32> -> vector<512x16xf32>
    %c0_12 = arith.constant 0 : index
    %c0_13 = arith.constant 0 : index
    %24 = vector.load %arg7[%c0_12, %c0_13] : memref<1x16xf32, #tpu.memory_space<vmem>>, vector<1x16xf32>
    %25 = vector.broadcast %24 : vector<1x16xf32> to vector<512x16xf32>
    %26 = arith.addf %23, %25 : vector<512x16xf32>
    %cst_14 = arith.constant 0.000000e+00 : f32
    %27 = vector.broadcast %cst_14 : f32 to vector<512x16xf32>
    %28 = arith.maximumf %26, %27 : vector<512x16xf32>
    %29 = vector.shape_cast %28 : vector<512x16xf32> to vector<8x8x8x16xf32>
    %c0_15 = arith.constant 0 : index
    %c0_16 = arith.constant 0 : index
    %c0_17 = arith.constant 0 : index
    %30 = vector.load %arg9[%c0_15, %c0_16, %c0_17] : memref<8x8x16xf32, #tpu.memory_space<vmem>>, vector<8x8x16xf32>
    %cst_18 = arith.constant dense<0xFF800000> : vector<8x8x16xf32>
    %31 = vector.multi_reduction <maximumf>, %29, %cst_18 [0] : vector<8x8x8x16xf32> to vector<8x8x16xf32>
    %32 = arith.maximumf %30, %31 : vector<8x8x16xf32>
    %c0_19 = arith.constant 0 : index
    %c0_20 = arith.constant 0 : index
    %c0_21 = arith.constant 0 : index
    %33 = vector.load %arg9[%c0_19, %c0_20, %c0_21] : memref<8x8x16xf32, #tpu.memory_space<vmem>>, vector<8x8x16xf32>
    tpu.vector_store %arg9[%c0_19, %c0_20, %c0_21], %32 {strides = array<i32>} : memref<8x8x16xf32, #tpu.memory_space<vmem>>, vector<8x8x16xf32>,
    %c0_22 = arith.constant 0 : index
    %c0_23 = arith.constant 0 : index
    %c0_24 = arith.constant 0 : index
    %34 = vector.load %arg10[%c0_22, %c0_23, %c0_24] : memref<8x8x16xf32, #tpu.memory_space<vmem>>, vector<8x8x16xf32>
    %cst_25 = arith.constant dense<0.000000e+00> : vector<8x8x16xf32>
    %35 = vector.multi_reduction <add>, %29, %cst_25 [0] : vector<8x8x8x16xf32> to vector<8x8x16xf32>
    %36 = arith.addf %34, %35 : vector<8x8x16xf32>
    %c0_26 = arith.constant 0 : index
    %c0_27 = arith.constant 0 : index
    %c0_28 = arith.constant 0 : index
    %37 = vector.load %arg10[%c0_26, %c0_27, %c0_28] : memref<8x8x16xf32, #tpu.memory_space<vmem>>, vector<8x8x16xf32>
    tpu.vector_store %arg10[%c0_26, %c0_27, %c0_28], %36 {strides = array<i32>} : memref<8x8x16xf32, #tpu.memory_space<vmem>>, vector<8x8x16xf32>,
    %c1_i32 = arith.constant 1 : i32
    %38 = arith.cmpi eq, %arg2, %c1_i32 : i32
    %39 = arith.extui %38 : i1 to i32
    %c0_i32_29 = arith.constant 0 : i32
    %40 = arith.cmpi ne, %39, %c0_i32_29 : i32
    scf.if %40 {
      %c0_30 = arith.constant 0 : index
      %c0_31 = arith.constant 0 : index
      %c0_32 = arith.constant 0 : index
      %41 = vector.load %arg9[%c0_30, %c0_31, %c0_32] : memref<8x8x16xf32, #tpu.memory_space<vmem>>, vector<8x8x16xf32>
      %42 = vector.extract_strided_slice %41 {offsets = [0, 0, 0], sizes = [8, 8, 8], strides = [1, 1, 1]} : vector<8x8x16xf32> to vector<8x8x8xf32>
      %cst_33 = arith.constant dense<0xFF800000> : vector<8x8xf32>
      %43 = vector.multi_reduction <maximumf>, %42, %cst_33 [1] : vector<8x8x8xf32> to vector<8x8xf32>
      %c0_34 = arith.constant 0 : index
      %c0_35 = arith.constant 0 : index
      %c0_36 = arith.constant 0 : index
      %44 = vector.load %arg10[%c0_34, %c0_35, %c0_36] : memref<8x8x16xf32, #tpu.memory_space<vmem>>, vector<8x8x16xf32>
      %45 = vector.extract_strided_slice %44 {offsets = [0, 0, 8], sizes = [8, 8, 8], strides = [1, 1, 1]} : vector<8x8x16xf32> to vector<8x8x8xf32>
      %cst_37 = arith.constant dense<0.000000e+00> : vector<8x8xf32>
      %46 = vector.multi_reduction <add>, %45, %cst_37 [1] : vector<8x8x8xf32> to vector<8x8xf32>
      %cst_38 = arith.constant 7.812500e-03 : f32
      %47 = vector.broadcast %cst_38 : f32 to vector<8x8xf32>
      %48 = arith.mulf %46, %47 : vector<8x8xf32>
      %49 = tpu.concatenate %43, %48 in 1 : vector<8x8xf32>, vector<8x8xf32> -> vector<8x16xf32>
      %c0_39 = arith.constant 0 : index
      %c0_40 = arith.constant 0 : index
      %c0_41 = arith.constant 0 : index
      %50 = vector.load %arg8[%c0_39, %c0_40, %c0_41] : memref<1x8x16xf32, #tpu.memory_space<vmem>>, vector<1x8x16xf32>
      %51 = vector.shape_cast %50 : vector<1x8x16xf32> to vector<8x16xf32>
      %52 = vector.shape_cast %49 : vector<8x16xf32> to vector<1x8x16xf32>
      tpu.vector_store %arg8[%c0_39, %c0_40, %c0_41], %52 {strides = array<i32>} : memref<1x8x16xf32, #tpu.memory_space<vmem>>, vector<1x8x16xf32>,
    } else {
    }
    return
  }
  func.func @transform_0(%arg0: i32, %arg1: i32, %arg2: i32) -> (i32, i32, i32) {
    %c0_i32 = arith.constant 0 : i32
    %c0_i32_0 = arith.constant 0 : i32
    return %arg0, %arg1, %c0_i32 : i32, i32, i32
  }
  func.func @transform_1(%arg0: i32, %arg1: i32, %arg2: i32) -> (i32, i32, i32) {
    %c0_i32 = arith.constant 0 : i32
    %c0_i32_0 = arith.constant 0 : i32
    return %arg0, %arg2, %c0_i32 : i32, i32, i32
  }
  func.func @transform_2(%arg0: i32, %arg1: i32, %arg2: i32) -> (i32, i32, i32) {
    %c0_i32 = arith.constant 0 : i32
    %c0_i32_0 = arith.constant 0 : i32
    %c0_i32_1 = arith.constant 0 : i32
    return %arg0, %c0_i32, %c0_i32_0 : i32, i32, i32
  }
  func.func @transform_3(%arg0: i32, %arg1: i32, %arg2: i32) -> (i32, i32) {
    %c0_i32 = arith.constant 0 : i32
    %c0_i32_0 = arith.constant 0 : i32
    %c0_i32_1 = arith.constant 0 : i32
    return %c0_i32, %c0_i32_0 : i32, i32
  }
  func.func @transform_4(%arg0: i32, %arg1: i32, %arg2: i32) -> (i32, i32) {
    %c0_i32 = arith.constant 0 : i32
    %c0_i32_0 = arith.constant 0 : i32
    %c0_i32_1 = arith.constant 0 : i32
    return %c0_i32, %c0_i32_0 : i32, i32
  }
  func.func @transform_5(%arg0: i32, %arg1: i32, %arg2: i32) -> (i32, i32, i32) {
    %c0_i32 = arith.constant 0 : i32
    %c0_i32_0 = arith.constant 0 : i32
    return %arg0, %arg1, %c0_i32 : i32, i32, i32
  }
}

</mosaic_0001>

<llo_original>
// kernel: tpu_custom_call.1
$region0: #{tpu_custom_call.1}
  #allocation0 [shape = 'u32[]', space=smem, size = 0x4, offset = 0x4, fixed_abs, tag = 'smem constant byte address 0x4 - core index']
  #allocation1 [shape = 'u32[72,128]{1,0:T(1,128)}', space=vmem, size = 0x9000, scoped, tag = 'internal scratch']
  #allocation2 [shape = 'f32[8,8,16]{2,1,0:T(8,128)}', space=vmem, size = 0x8000, scoped, tag = 'scratch operand']
  #allocation3 [shape = 'f32[8,8,16]{2,1,0:T(8,128)}', space=vmem, size = 0x8000, scoped, tag = 'scratch operand']
  %s0 = inlined_call_operand.hbm [shape: f32[2,16,16], index: 0, kind: input, shape index: {}]
  %s1 = inlined_call_operand.hbm [shape: f32[2,16,16], index: 1, kind: input, shape index: {}]
  %s2 = inlined_call_operand.hbm [shape: f32[2,8,16], index: 2, kind: input, shape index: {}]
  %s3 = inlined_call_operand.hbm [shape: f32[16,16], index: 3, kind: input, shape index: {}]
  %s4 = inlined_call_operand.vmem [shape: f32[1,16], index: 4, kind: input, shape index: {}]
  %s5 = inlined_call_operand.hbm [shape: f32[2,16,16], index: 5, kind: output, shape index: {}]
  %s6 = sld [smem:[#allocation0]]
  $region77: #{tpu_custom_call.1} parent=0
    _
  %s8 = ssub.s32 1, %s6
  %s9 = scalar_select 0, %s8, %s6
  $region1: #{tpu_custom_call.1} parent=0
    #allocation4 [shape = 'u8[8192]{0}', space=vmem, size = 0x2000, scoped, tag = 'input window, operand 0']
    #allocation5 [shape = 's32[2]{0}', space=sflag, size = 0x8, scoped, tag = 'scoped memory for tpu_custom_call.1']
    #allocation6 [shape = 's32[2]{0}', space=sflag, size = 0x8, scoped, tag = 'scoped memory for tpu_custom_call.1']
    #allocation7 [shape = 'u8[8192]{0}', space=vmem, size = 0x2000, scoped, tag = 'input window, operand 1']
    #allocation8 [shape = 's32[2]{0}', space=sflag, size = 0x8, scoped, tag = 'scoped memory for tpu_custom_call.1']
    #allocation9 [shape = 'u8[8192]{0}', space=vmem, size = 0x2000, scoped, tag = 'input window, operand 2']
    #allocation10 [shape = 'u8[8192]{0}', space=vmem, size = 0x2000, scoped, tag = 'input window, operand 3, single buffered']
    #allocation11 [shape = 's32[1]{0}', space=sflag, size = 0x4, scoped, tag = 'scoped memory for tpu_custom_call.1']
    #allocation12 [shape = 'u8[8192]{0}', space=vmem, size = 0x2000, scoped, tag = 'output window, operand 0']
    %10 = vsyncpa [#allocation5], 0
    %s11 = scalar_lea.sflag [#allocation5], 1
    %12 = vsyncpa %s11, 0
    %13 = vsyncpa [#allocation8], 0
    %s14 = scalar_lea.sflag [#allocation8], 1
    %15 = vsyncpa %s14, 0
    %16 = vsyncpa [#allocation11], 0
    %17 = vsyncpa [#allocation6], 0
    %s18 = scalar_lea.sflag [#allocation6], 1
    %19 = vsyncpa %s18, 0
    loop: start=0, step=1, limit=10
    $region2: #{tpu_custom_call.1} parent=1 // loop_pre_header
      _
    $region3: #{tpu_custom_call.1} parent=1 // loop_header
      %s21 = sphi 0, %s25
      %p22 = scmp.ge.s32.totalorder %s21, 10
      %s28 = sphi 0, %s47
      %s29 = sphi 0, %s43
      %s30 = sphi 0, %s39
      %s31 = sphi 0, %s28
      %s32 = sphi 0, %s29
      %s33 = sphi 0, %s30
      %s34 = sphi 0, %s31
      %s35 = sphi 0, %s32
      %s36 = sphi 0, %s33
      %s52 = sphi 0, %s54
      %s55 = sphi 0, %s52
      %s56 = sphi 0, %s55
      %s72 = sphi 0, %s56
      %s80 = sphi 0, %s82
      %s83 = sphi 0, %s80
      %s84 = sphi 0, %s83
      %s100 = sphi 0, %s84
      %s106 = sphi 0, %s108
      %s109 = sphi 0, %s106
      %s110 = sphi 0, %s109
      %s126 = sphi 0, %s110
      %s130 = sphi 0, %s130
      %s132 = sphi 0, %s130
      %s133 = sphi 0, %s132
      %s147 = sphi 0, %s133
      %s151 = sphi 0, %s151
      %s153 = sphi 0, %s151
      %s154 = sphi 0, %s153
      %s168 = sphi 0, %s154
      %s176 = sphi 0, %s178
      %s179 = sphi 0, %s176
      %s180 = sphi 0, %s179
      %s196 = sphi 0, %s180
    $region4: #{tpu_custom_call.1} parent=1 // loop_header_branch
      %24 = sbr.rel (%p22) target = $region8
    $region5: #{tpu_custom_call.1} parent=1 // loop_body
      %s26 = ssub.s32 %s21, 1
      %s27 = ssub.s32 %s21, 2
      %s37 = sadd.s32 1, %s30
      %p38 = scmp.ge.s32.totalorder %s37, 2
      %s39 = scalar_select %p38, 0, %s37
      %s40 = sadd.s32 1, %s29
      %s41 = scalar_select %p38, %s40, %s29
      %p42 = scmp.ge.s32.totalorder %s41, 2
      %s43 = scalar_select %p42, 0, %s41
      %s44 = sadd.s32 1, %s28
      %s45 = scalar_select %p42, %s44, %s28
      %p46 = scmp.ge.s32.totalorder %s45, 2
      %s47 = scalar_select %p46, 0, %s45
      %s48 = ssub.s32 %s28, %s47
      %s49 = ssub.s32 %s29, %s43
      %s50 = sor.u32 %s48, %s49
      %p51 = scmp.eq.s32.totalorder %s50, 0
      %s53 = sadd.s32 %s52, 1
      %s54 = scalar_select %p51, %s52, %s53
      %p57 = pneg %p51
      %p58 = scmp.eq.s32.totalorder %s21, 7
      %p59 = por %p57, %p58
      %p60 = scmp.ne.s32.totalorder %s52, %s55
      %p61 = scmp.eq.s32.totalorder %s21, 0
      %p62 = por %p60, %p61
      %p63 = scmp.ne.s32.totalorder %s52, %s55
      %p64 = scmp.eq.s32.totalorder %s26, 7
      %p65 = por %p63, %p64
      %p66 = scmp.ne.s32.totalorder %s55, %s56
      %p67 = scmp.eq.s32.totalorder %s26, 0
      %p68 = por %p66, %p67
      %p69 = scmp.ne.s32.totalorder %s55, %s56
      %p70 = scmp.eq.s32.totalorder %s27, 7
      %p71 = por %p69, %p70
      %p73 = scmp.ne.s32.totalorder %s56, %s72
      %p74 = scmp.eq.s32.totalorder %s27, 0
      %p75 = por %p73, %p74
      %s76 = ssub.s32 %s28, %s47
      %s77 = ssub.s32 %s30, %s39
      %s78 = sor.u32 %s76, %s77
      %p79 = scmp.eq.s32.totalorder %s78, 0
      %s81 = sadd.s32 %s80, 1
      %s82 = scalar_select %p79, %s80, %s81
      %p85 = pneg %p79
      %p86 = scmp.eq.s32.totalorder %s21, 7
      %p87 = por %p85, %p86
      %p88 = scmp.ne.s32.totalorder %s80, %s83
      %p89 = scmp.eq.s32.totalorder %s21, 0
      %p90 = por %p88, %p89
      %p91 = scmp.ne.s32.totalorder %s80, %s83
      %p92 = scmp.eq.s32.totalorder %s26, 7
      %p93 = por %p91, %p92
      %p94 = scmp.ne.s32.totalorder %s83, %s84
      %p95 = scmp.eq.s32.totalorder %s26, 0
      %p96 = por %p94, %p95
      %p97 = scmp.ne.s32.totalorder %s83, %s84
      %p98 = scmp.eq.s32.totalorder %s27, 7
      %p99 = por %p97, %p98
      %p101 = scmp.ne.s32.totalorder %s84, %s100
      %p102 = scmp.eq.s32.totalorder %s27, 0
      %p103 = por %p101, %p102
      %s104 = ssub.s32 %s28, %s47
      %p105 = scmp.eq.s32.totalorder %s104, 0
      %s107 = sadd.s32 %s106, 1
      %s108 = scalar_select %p105, %s106, %s107
      %p111 = pneg %p105
      %p112 = scmp.eq.s32.totalorder %s21, 7
      %p113 = por %p111, %p112
      %p114 = scmp.ne.s32.totalorder %s106, %s109
      %p115 = scmp.eq.s32.totalorder %s21, 0
      %p116 = por %p114, %p115
      %p117 = scmp.ne.s32.totalorder %s106, %s109
      %p118 = scmp.eq.s32.totalorder %s26, 7
      %p119 = por %p117, %p118
      %p120 = scmp.ne.s32.totalorder %s109, %s110
      %p121 = scmp.eq.s32.totalorder %s26, 0
      %p122 = por %p120, %p121
      %p123 = scmp.ne.s32.totalorder %s109, %s110
      %p124 = scmp.eq.s32.totalorder %s27, 7
      %p125 = por %p123, %p124
      %p127 = scmp.ne.s32.totalorder %s110, %s126
      %p128 = scmp.eq.s32.totalorder %s27, 0
      %p129 = por %p127, %p128
      %s131 = sadd.s32 %s130, 1
      %p134 = scmp.eq.s32.totalorder %s21, 7
      %p135 = scmp.ne.s32.totalorder %s130, %s132
      %p136 = scmp.eq.s32.totalorder %s21, 0
      %p137 = por %p135, %p136
      %p138 = scmp.ne.s32.totalorder %s130, %s132
      %p139 = scmp.eq.s32.totalorder %s26, 7
      %p140 = por %p138, %p139
      %p141 = scmp.ne.s32.totalorder %s132, %s133
      %p142 = scmp.eq.s32.totalorder %s26, 0
      %p143 = por %p141, %p142
      %p144 = scmp.ne.s32.totalorder %s132, %s133
      %p145 = scmp.eq.s32.totalorder %s27, 7
      %p146 = por %p144, %p145
      %p148 = scmp.ne.s32.totalorder %s133, %s147
      %p149 = scmp.eq.s32.totalorder %s27, 0
      %p150 = por %p148, %p149
      %s152 = sadd.s32 %s151, 1
      %p155 = scmp.eq.s32.totalorder %s21, 7
      %p156 = scmp.ne.s32.totalorder %s151, %s153
      %p157 = scmp.eq.s32.totalorder %s21, 0
      %p158 = por %p156, %p157
      %p159 = scmp.ne.s32.totalorder %s151, %s153
      %p160 = scmp.eq.s32.totalorder %s26, 7
      %p161 = por %p159, %p160
      %p162 = scmp.ne.s32.totalorder %s153, %s154
      %p163 = scmp.eq.s32.totalorder %s26, 0
      %p164 = por %p162, %p163
      %p165 = scmp.ne.s32.totalorder %s153, %s154
      %p166 = scmp.eq.s32.totalorder %s27, 7
      %p167 = por %p165, %p166
      %p169 = scmp.ne.s32.totalorder %s154, %s168
      %p170 = scmp.eq.s32.totalorder %s27, 0
      %p171 = por %p169, %p170
      %s172 = ssub.s32 %s28, %s47
      %s173 = ssub.s32 %s29, %s43
      %s174 = sor.u32 %s172, %s173
      %p175 = scmp.eq.s32.totalorder %s174, 0
      %s177 = sadd.s32 %s176, 1
      %s178 = scalar_select %p175, %s176, %s177
      %p181 = pneg %p175
      %p182 = scmp.eq.s32.totalorder %s21, 7
      %p183 = por %p181, %p182
      %p184 = scmp.ne.s32.totalorder %s176, %s179
      %p185 = scmp.eq.s32.totalorder %s21, 0
      %p186 = por %p184, %p185
      %p187 = scmp.ne.s32.totalorder %s176, %s179
      %p188 = scmp.eq.s32.totalorder %s26, 7
      %p189 = por %p187, %p188
      %p190 = scmp.ne.s32.totalorder %s179, %s180
      %p191 = scmp.eq.s32.totalorder %s26, 0
      %p192 = por %p190, %p191
      %p193 = scmp.ne.s32.totalorder %s179, %s180
      %p194 = scmp.eq.s32.totalorder %s27, 7
      %p195 = por %p193, %p194
      %p197 = scmp.ne.s32.totalorder %s180, %s196
      %p198 = scmp.eq.s32.totalorder %s27, 0
      %p199 = por %p197, %p198
      %p200 = scmp.le.s32.totalorder 1, %s21
      %p201 = scmp.lt.s32.totalorder %s21, 9
      %p202 = pnand %p200, %p201
      %p203 = pneg %p202
      // Predicated region
      $region9: #{tpu_custom_call.1} parent=5 // pred_check
        _
      $region10: #{tpu_custom_call.1} parent=5 // pred_check_branch
        %205 = sbr.rel (%p202) target = $region12
      $region11: #{tpu_custom_call.1} parent=5 // pred_region
        %s206 = ssub.s32 %s21, 1
        // Predicated region
        $region13: #{tpu_custom_call.1} parent=11 // pred_check
          %p207 = pneg %p143
        $region14: #{tpu_custom_call.1} parent=11 // pred_check_branch
          %209 = sbr.rel (%p207) target = $region16
        $region15: #{tpu_custom_call.1} parent=11 // pred_region
          %211 = vsyncadd [#allocation11], 0
          %s212 = sshll.u32 %s3, 4
          %s213 = int_to_ptr.hbm [resolvable:$true] %s212
          %s214 = sshll.u32 [#allocation10], 4
          %s215 = int_to_ptr.vmem [resolvable:$true] %s214
          %220 = dma.hbm_to_vmem [thread:$0]  %s213, 256, %s215, [#allocation11], 128, 128, 8
        $region16: #{tpu_custom_call.1} parent=11 // pred_fallthru
          _
        // Predicated region
        $region17: #{tpu_custom_call.1} parent=11 // pred_check
          %p221 = pneg %p164
        $region18: #{tpu_custom_call.1} parent=11 // pred_check_branch
          %223 = sbr.rel (%p221) target = $region20
        $region19: #{tpu_custom_call.1} parent=11 // pred_region
          _
        $region20: #{tpu_custom_call.1} parent=11 // pred_fallthru
          _
      $region12: #{tpu_custom_call.1} parent=5 // pred_fallthru
        _
      %p224 = scmp.lt.s32.totalorder %s21, 8
      // Predicated region
      $region21: #{tpu_custom_call.1} parent=5 // pred_check
        %p225 = pneg %p224
      $region22: #{tpu_custom_call.1} parent=5 // pred_check_branch
        %227 = sbr.rel (%p225) target = $region24
      $region23: #{tpu_custom_call.1} parent=5 // pred_region
        // Predicated region
        $region25: #{tpu_custom_call.1} parent=23 // pred_check
          %p228 = pneg %p62
        $region26: #{tpu_custom_call.1} parent=23 // pred_check_branch
          %230 = sbr.rel (%p228) target = $region28
        $region27: #{tpu_custom_call.1} parent=23 // pred_region
          %s231 = sand.u32 %s52, 1
          %s232 = scalar_lea.sflag [#allocation5], %s231
          %s233 = sand.u32 %s52, 1
          %s234 = smul.addr %s233, 8
          %s235 = scalar_lea.vmem [#allocation4], %s234
          %237 = vsyncadd %s232, 0
          %s238 = smul.addr %s28, 2
          %s239 = sadd.s32 %s29, %s238
          %s240 = smul.addr %s239, 8
          %s241 = scalar_lea.hbm %s0, %s240
          %s243 = sshll.u32 %s241, 4
          %s244 = int_to_ptr.hbm [resolvable:$true] %s243
          %s245 = sshll.u32 %s235, 4
          %s246 = int_to_ptr.vmem [resolvable:$true] %s245
          %248 = dma.hbm_to_vmem [thread:$0]  %s244, 128, %s246, %s232
        $region28: #{tpu_custom_call.1} parent=23 // pred_fallthru
          _
        // Predicated region
        $region29: #{tpu_custom_call.1} parent=23 // pred_check
          %p249 = pneg %p90
        $region30: #{tpu_custom_call.1} parent=23 // pred_check_branch
          %251 = sbr.rel (%p249) target = $region32
        $region31: #{tpu_custom_call.1} parent=23 // pred_region
          %s252 = sand.u32 %s21, 1
          %s253 = scalar_lea.sflag [#allocation8], %s252
          %s254 = sand.u32 %s80, 1
          %s255 = smul.addr %s254, 8
          %s256 = scalar_lea.vmem [#allocation7], %s255
          %258 = vsyncadd %s253, 0
          %s259 = smul.addr %s28, 2
          %s260 = sadd.s32 %s30, %s259
          %s261 = smul.addr %s260, 8
          %s262 = scalar_lea.hbm %s1, %s261
          %s264 = sshll.u32 %s262, 4
          %s265 = int_to_ptr.hbm [resolvable:$true] %s264
          %s266 = sshll.u32 %s256, 4
          %s267 = int_to_ptr.vmem [resolvable:$true] %s266
          %269 = dma.hbm_to_vmem [thread:$0]  %s265, 128, %s267, %s253
        $region32: #{tpu_custom_call.1} parent=23 // pred_fallthru
          _
        // Predicated region
        $region33: #{tpu_custom_call.1} parent=23 // pred_check
          %p270 = pneg %p116
        $region34: #{tpu_custom_call.1} parent=23 // pred_check_branch
          %272 = sbr.rel (%p270) target = $region36
        $region35: #{tpu_custom_call.1} parent=23 // pred_region
          %s273 = sand.u32 %s21, 1
          %s274 = scalar_lea.sflag [#allocation8], %s273
          %s275 = sand.u32 %s106, 1
          %s276 = smul.addr %s275, 8
          %s277 = scalar_lea.vmem [#allocation9], %s276
          %279 = vsyncadd %s274, 0
          %s280 = smul.addr %s28, 8
          %s281 = scalar_lea.hbm %s2, %s280
          %s283 = sshll.u32 %s281, 4
          %s284 = int_to_ptr.hbm [resolvable:$true] %s283
          %s285 = sshll.u32 %s277, 4
          %s286 = int_to_ptr.vmem [resolvable:$true] %s285
          %288 = dma.hbm_to_vmem [thread:$0]  %s284, 128, %s286, %s274
        $region36: #{tpu_custom_call.1} parent=23 // pred_fallthru
          _
      $region24: #{tpu_custom_call.1} parent=5 // pred_fallthru
        _
      %p289 = scmp.le.s32.totalorder 1, %s21
      %p290 = scmp.lt.s32.totalorder %s21, 9
      %p291 = pnand %p289, %p290
      %p292 = pneg %p291
      // Predicated region
      $region37: #{tpu_custom_call.1} parent=5 // pred_check
        _
      $region38: #{tpu_custom_call.1} parent=5 // pred_check_branch
        %294 = sbr.rel (%p291) target = $region40
      $region39: #{tpu_custom_call.1} parent=5 // pred_region
        %s295 = ssub.s32 %s21, 1
        %s296 = sand.u32 %s55, 1
        %s297 = scalar_lea.sflag [#allocation5], %s296
        %s298 = sand.u32 %s55, 1
        %s299 = smul.addr %s298, 8
        %s300 = scalar_lea.vmem [#allocation4], %s299
        // Predicated region
        $region41: #{tpu_custom_call.1} parent=39 // pred_check
          %p301 = pneg %p68
        $region42: #{tpu_custom_call.1} parent=39 // pred_check_branch
          %303 = sbr.rel (%p301) target = $region44
        $region43: #{tpu_custom_call.1} parent=39 // pred_region
          %305 = dma.done %s297, 128
        $region44: #{tpu_custom_call.1} parent=39 // pred_fallthru
          _
        %s306 = sand.u32 %s26, 1
        %s307 = scalar_lea.sflag [#allocation8], %s306
        %s308 = sand.u32 %s83, 1
        %s309 = smul.addr %s308, 8
        %s310 = scalar_lea.vmem [#allocation7], %s309
        // Predicated region
        $region45: #{tpu_custom_call.1} parent=39 // pred_check
          %p311 = pneg %p96
        $region46: #{tpu_custom_call.1} parent=39 // pred_check_branch
          %313 = sbr.rel (%p311) target = $region48
        $region47: #{tpu_custom_call.1} parent=39 // pred_region
          %315 = dma.done %s307, 128
        $region48: #{tpu_custom_call.1} parent=39 // pred_fallthru
          _
        %s316 = sand.u32 %s26, 1
        %s317 = scalar_lea.sflag [#allocation8], %s316
        %s318 = sand.u32 %s109, 1
        %s319 = smul.addr %s318, 8
        %s320 = scalar_lea.vmem [#allocation9], %s319
        // Predicated region
        $region49: #{tpu_custom_call.1} parent=39 // pred_check
          %p321 = pneg %p122
        $region50: #{tpu_custom_call.1} parent=39 // pred_check_branch
          %323 = sbr.rel (%p321) target = $region52
        $region51: #{tpu_custom_call.1} parent=39 // pred_region
          %325 = dma.done %s317, 128
        $region52: #{tpu_custom_call.1} parent=39 // pred_fallthru
          _
        // Predicated region
        $region53: #{tpu_custom_call.1} parent=39 // pred_check
          %p326 = pneg %p143
        $region54: #{tpu_custom_call.1} parent=39 // pred_check_branch
          %328 = sbr.rel (%p326) target = $region56
        $region55: #{tpu_custom_call.1} parent=39 // pred_region
          %330 = dma.done [#allocation11], 256
        $region56: #{tpu_custom_call.1} parent=39 // pred_fallthru
          _
        %s331 = sand.u32 %s55, 1
        %s332 = scalar_lea.sflag [#allocation5], %s331
        %s333 = sand.u32 %s55, 1
        %s334 = smul.addr %s333, 8
        %s335 = scalar_lea.vmem [#allocation4], %s334
        %p336 = pneg %p68
        %p337 = pneg %p65
        %s338 = sand.u32 %s26, 1
        %s339 = scalar_lea.sflag [#allocation8], %s338
        %s340 = sand.u32 %s83, 1
        %s341 = smul.addr %s340, 8
        %s342 = scalar_lea.vmem [#allocation7], %s341
        %p343 = pneg %p96
        %p344 = pneg %p93
        %s345 = sand.u32 %s26, 1
        %s346 = scalar_lea.sflag [#allocation8], %s345
        %s347 = sand.u32 %s109, 1
        %s348 = smul.addr %s347, 8
        %s349 = scalar_lea.vmem [#allocation9], %s348
        %p350 = pneg %p122
        %p351 = pneg %p119
        %p352 = pneg %p143
        %p353 = pneg %p140
        %p354 = pneg %p164
        %p355 = pneg %p161
        %p356 = pneg %p192
        %p357 = pneg %p189
        %s358 = sand.u32 %s179, 1
        %s359 = scalar_lea.sflag [#allocation6], %s358
        %s360 = sand.u32 %s179, 1
        %s361 = smul.addr %s360, 8
        %s362 = scalar_lea.vmem [#allocation12], %s361
        %p363 = scmp.eq.s32.totalorder %s33, 0
        // Predicated region
        $region57: #{tpu_custom_call.1} parent=39 // pred_check
          %p364 = pneg %p363
        $region58: #{tpu_custom_call.1} parent=39 // pred_check_branch
          %366 = sbr.rel (%p364) target = $region60
        $region59: #{tpu_custom_call.1} parent=39 // pred_region
          %vm367 = vcmask 130048
          %368 = vst.msk [vmem:[#allocation2] sm:$0xff] %vm367, 0.0
          %369 = vst.msk [vmem:[#allocation2 + $0x8] sm:$0xff] %vm367, 0.0
          %370 = vst.msk [vmem:[#allocation2 + $0x10] sm:$0xff] %vm367, 0.0
          %371 = vst.msk [vmem:[#allocation2 + $0x18] sm:$0xff] %vm367, 0.0
          %372 = vst.msk [vmem:[#allocation2 + $0x20] sm:$0xff] %vm367, 0.0
          %373 = vst.msk [vmem:[#allocation2 + $0x28] sm:$0xff] %vm367, 0.0
          %374 = vst.msk [vmem:[#allocation2 + $0x30] sm:$0xff] %vm367, 0.0
          %375 = vst.msk [vmem:[#allocation2 + $0x38] sm:$0xff] %vm367, 0.0
          %376 = vst.msk [vmem:[#allocation3] sm:$0xff] %vm367, 0.0
          %377 = vst.msk [vmem:[#allocation3 + $0x8] sm:$0xff] %vm367, 0.0
          %378 = vst.msk [vmem:[#allocation3 + $0x10] sm:$0xff] %vm367, 0.0
          %379 = vst.msk [vmem:[#allocation3 + $0x18] sm:$0xff] %vm367, 0.0
          %380 = vst.msk [vmem:[#allocation3 + $0x20] sm:$0xff] %vm367, 0.0
          %381 = vst.msk [vmem:[#allocation3 + $0x28] sm:$0xff] %vm367, 0.0
          %382 = vst.msk [vmem:[#allocation3 + $0x30] sm:$0xff] %vm367, 0.0
          %383 = vst.msk [vmem:[#allocation3 + $0x38] sm:$0xff] %vm367, 0.0
        $region60: #{tpu_custom_call.1} parent=39 // pred_fallthru
          _
        %v384 = vld [vmem:[%s300] sm:$0xff]
        %v385 = vld [vmem:[%s310] sm:$0xff]
        %v386 = vld [vmem:[%s320] sm:$0xff]
        %v388 = vrot.slane %v385, 1
        %v389 = vrot.slane %v385, 2
        %v390 = vrot.slane %v385, 3
        %v391 = vrot.slane %v385, 4
        %v392 = vrot.slane %v385, 5
        %v393 = vrot.slane %v385, 6
        %v394 = vrot.slane %v385, 7
        %v395 = vperm.slane %v385, 0
        %v396 = vperm.slane %v388, 0
        %v397 = vperm.slane %v389, 0
        %v398 = vperm.slane %v390, 0
        %v399 = vperm.slane %v391, 0
        %v400 = vperm.slane %v392, 0
        %v401 = vperm.slane %v393, 0
        %v402 = vperm.slane %v394, 0
        %v411 = vadd.f32 %v395, %v384
        %v412 = vadd.f32 %v396, %v384
        %v413 = vadd.f32 %v397, %v384
        %v414 = vadd.f32 %v398, %v384
        %v415 = vadd.f32 %v399, %v384
        %v416 = vadd.f32 %v400, %v384
        %v417 = vadd.f32 %v401, %v384
        %v418 = vadd.f32 %v402, %v384
        %v427 = vrot.slane %v411, 1
        %v428 = vrot.slane %v411, 2
        %v429 = vrot.slane %v411, 3
        %v430 = vrot.slane %v411, 4
        %v431 = vrot.slane %v411, 5
        %v432 = vrot.slane %v411, 6
        %v433 = vrot.slane %v411, 7
        %v434 = vrot.slane %v412, 1
        %v435 = vrot.slane %v412, 2
        %v436 = vrot.slane %v412, 3
        %v437 = vrot.slane %v412, 4
        %v438 = vrot.slane %v412, 5
        %v439 = vrot.slane %v412, 6
        %v440 = vrot.slane %v412, 7
        %v441 = vrot.slane %v413, 1
        %v442 = vrot.slane %v413, 2
        %v443 = vrot.slane %v413, 3
        %v444 = vrot.slane %v413, 4
        %v445 = vrot.slane %v413, 5
        %v446 = vrot.slane %v413, 6
        %v447 = vrot.slane %v413, 7
        %v448 = vrot.slane %v414, 1
        %v449 = vrot.slane %v414, 2
        %v450 = vrot.slane %v414, 3
        %v451 = vrot.slane %v414, 4
        %v452 = vrot.slane %v414, 5
        %v453 = vrot.slane %v414, 6
        %v454 = vrot.slane %v414, 7
        %v455 = vrot.slane %v415, 1
        %v456 = vrot.slane %v415, 2
        %v457 = vrot.slane %v415, 3
        %v458 = vrot.slane %v415, 4
        %v459 = vrot.slane %v415, 5
        %v460 = vrot.slane %v415, 6
        %v461 = vrot.slane %v415, 7
        %v462 = vrot.slane %v416, 1
        %v463 = vrot.slane %v416, 2
        %v464 = vrot.slane %v416, 3
        %v465 = vrot.slane %v416, 4
        %v466 = vrot.slane %v416, 5
        %v467 = vrot.slane %v416, 6
        %v468 = vrot.slane %v416, 7
        %v469 = vrot.slane %v417, 1
        %v470 = vrot.slane %v417, 2
        %v471 = vrot.slane %v417, 3
        %v472 = vrot.slane %v417, 4
        %v473 = vrot.slane %v417, 5
        %v474 = vrot.slane %v417, 6
        %v475 = vrot.slane %v417, 7
        %v476 = vrot.slane %v418, 1
        %v477 = vrot.slane %v418, 2
        %v478 = vrot.slane %v418, 3
        %v479 = vrot.slane %v418, 4
        %v480 = vrot.slane %v418, 5
        %v481 = vrot.slane %v418, 6
        %v482 = vrot.slane %v418, 7
        %v483 = vperm.slane %v411, 0
        %v484 = vperm.slane %v427, 0
        %v485 = vperm.slane %v428, 0
        %v486 = vperm.slane %v429, 0
        %v487 = vperm.slane %v430, 0
        %v488 = vperm.slane %v431, 0
        %v489 = vperm.slane %v432, 0
        %v490 = vperm.slane %v433, 0
        %v491 = vperm.slane %v412, 0
        %v492 = vperm.slane %v434, 0
        %v493 = vperm.slane %v435, 0
        %v494 = vperm.slane %v436, 0
        %v495 = vperm.slane %v437, 0
        %v496 = vperm.slane %v438, 0
        %v497 = vperm.slane %v439, 0
        %v498 = vperm.slane %v440, 0
        %v499 = vperm.slane %v413, 0
        %v500 = vperm.slane %v441, 0
        %v501 = vperm.slane %v442, 0
        %v502 = vperm.slane %v443, 0
        %v503 = vperm.slane %v444, 0
        %v504 = vperm.slane %v445, 0
        %v505 = vperm.slane %v446, 0
        %v506 = vperm.slane %v447, 0
        %v507 = vperm.slane %v414, 0
        %v508 = vperm.slane %v448, 0
        %v509 = vperm.slane %v449, 0
        %v510 = vperm.slane %v450, 0
        %v511 = vperm.slane %v451, 0
        %v512 = vperm.slane %v452, 0
        %v513 = vperm.slane %v453, 0
        %v514 = vperm.slane %v454, 0
        %v515 = vperm.slane %v415, 0
        %v516 = vperm.slane %v455, 0
        %v517 = vperm.slane %v456, 0
        %v518 = vperm.slane %v457, 0
        %v519 = vperm.slane %v458, 0
        %v520 = vperm.slane %v459, 0
        %v521 = vperm.slane %v460, 0
        %v522 = vperm.slane %v461, 0
        %v523 = vperm.slane %v416, 0
        %v524 = vperm.slane %v462, 0
        %v525 = vperm.slane %v463, 0
        %v526 = vperm.slane %v464, 0
        %v527 = vperm.slane %v465, 0
        %v528 = vperm.slane %v466, 0
        %v529 = vperm.slane %v467, 0
        %v530 = vperm.slane %v468, 0
        %v531 = vperm.slane %v417, 0
        %v532 = vperm.slane %v469, 0
        %v533 = vperm.slane %v470, 0
        %v534 = vperm.slane %v471, 0
        %v535 = vperm.slane %v472, 0
        %v536 = vperm.slane %v473, 0
        %v537 = vperm.slane %v474, 0
        %v538 = vperm.slane %v475, 0
        %v539 = vperm.slane %v418, 0
        %v540 = vperm.slane %v476, 0
        %v541 = vperm.slane %v477, 0
        %v542 = vperm.slane %v478, 0
        %v543 = vperm.slane %v479, 0
        %v544 = vperm.slane %v480, 0
        %v545 = vperm.slane %v481, 0
        %v546 = vperm.slane %v482, 0
        %v611 = vadd.f32 %v483, %v386
        %v612 = vadd.f32 %v484, %v386
        %v613 = vadd.f32 %v485, %v386
        %v614 = vadd.f32 %v486, %v386
        %v615 = vadd.f32 %v487, %v386
        %v616 = vadd.f32 %v488, %v386
        %v617 = vadd.f32 %v489, %v386
        %v618 = vadd.f32 %v490, %v386
        %v619 = vadd.f32 %v491, %v386
        %v620 = vadd.f32 %v492, %v386
        %v621 = vadd.f32 %v493, %v386
        %v622 = vadd.f32 %v494, %v386
        %v623 = vadd.f32 %v495, %v386
        %v624 = vadd.f32 %v496, %v386
        %v625 = vadd.f32 %v497, %v386
        %v626 = vadd.f32 %v498, %v386
        %v627 = vadd.f32 %v499, %v386
        %v628 = vadd.f32 %v500, %v386
        %v629 = vadd.f32 %v501, %v386
        %v630 = vadd.f32 %v502, %v386
        %v631 = vadd.f32 %v503, %v386
        %v632 = vadd.f32 %v504, %v386
        %v633 = vadd.f32 %v505, %v386
        %v634 = vadd.f32 %v506, %v386
        %v635 = vadd.f32 %v507, %v386
        %v636 = vadd.f32 %v508, %v386
        %v637 = vadd.f32 %v509, %v386
        %v638 = vadd.f32 %v510, %v386
        %v639 = vadd.f32 %v511, %v386
        %v640 = vadd.f32 %v512, %v386
        %v641 = vadd.f32 %v513, %v386
        %v642 = vadd.f32 %v514, %v386
        %v643 = vadd.f32 %v515, %v386
        %v644 = vadd.f32 %v516, %v386
        %v645 = vadd.f32 %v517, %v386
        %v646 = vadd.f32 %v518, %v386
        %v647 = vadd.f32 %v519, %v386
        %v648 = vadd.f32 %v520, %v386
        %v649 = vadd.f32 %v521, %v386
        %v650 = vadd.f32 %v522, %v386
        %v651 = vadd.f32 %v523, %v386
        %v652 = vadd.f32 %v524, %v386
        %v653 = vadd.f32 %v525, %v386
        %v654 = vadd.f32 %v526, %v386
        %v655 = vadd.f32 %v527, %v386
        %v656 = vadd.f32 %v528, %v386
        %v657 = vadd.f32 %v529, %v386
        %v658 = vadd.f32 %v530, %v386
        %v659 = vadd.f32 %v531, %v386
        %v660 = vadd.f32 %v532, %v386
        %v661 = vadd.f32 %v533, %v386
        %v662 = vadd.f32 %v534, %v386
        %v663 = vadd.f32 %v535, %v386
        %v664 = vadd.f32 %v536, %v386
        %v665 = vadd.f32 %v537, %v386
        %v666 = vadd.f32 %v538, %v386
        %v667 = vadd.f32 %v539, %v386
        %v668 = vadd.f32 %v540, %v386
        %v669 = vadd.f32 %v541, %v386
        %v670 = vadd.f32 %v542, %v386
        %v671 = vadd.f32 %v543, %v386
        %v672 = vadd.f32 %v544, %v386
        %v673 = vadd.f32 %v545, %v386
        %v674 = vadd.f32 %v546, %v386
        %v675 = vmax.f32 %v611, 0.0
        %v676 = vmax.f32 %v612, 0.0
        %v677 = vmax.f32 %v613, 0.0
        %v678 = vmax.f32 %v614, 0.0
        %v679 = vmax.f32 %v615, 0.0
        %v680 = vmax.f32 %v616, 0.0
        %v681 = vmax.f32 %v617, 0.0
        %v682 = vmax.f32 %v618, 0.0
        %v683 = vmax.f32 %v619, 0.0
        %v684 = vmax.f32 %v620, 0.0
        %v685 = vmax.f32 %v621, 0.0
        %v686 = vmax.f32 %v622, 0.0
        %v687 = vmax.f32 %v623, 0.0
        %v688 = vmax.f32 %v624, 0.0
        %v689 = vmax.f32 %v625, 0.0
        %v690 = vmax.f32 %v626, 0.0
        %v691 = vmax.f32 %v627, 0.0
        %v692 = vmax.f32 %v628, 0.0
        %v693 = vmax.f32 %v629, 0.0
        %v694 = vmax.f32 %v630, 0.0
        %v695 = vmax.f32 %v631, 0.0
        %v696 = vmax.f32 %v632, 0.0
        %v697 = vmax.f32 %v633, 0.0
        %v698 = vmax.f32 %v634, 0.0
        %v699 = vmax.f32 %v635, 0.0
        %v700 = vmax.f32 %v636, 0.0
        %v701 = vmax.f32 %v637, 0.0
        %v702 = vmax.f32 %v638, 0.0
        %v703 = vmax.f32 %v639, 0.0
        %v704 = vmax.f32 %v640, 0.0
        %v705 = vmax.f32 %v641, 0.0
        %v706 = vmax.f32 %v642, 0.0
        %v707 = vmax.f32 %v643, 0.0
        %v708 = vmax.f32 %v644, 0.0
        %v709 = vmax.f32 %v645, 0.0
        %v710 = vmax.f32 %v646, 0.0
        %v711 = vmax.f32 %v647, 0.0
        %v712 = vmax.f32 %v648, 0.0
        %v713 = vmax.f32 %v649, 0.0
        %v714 = vmax.f32 %v650, 0.0
        %v715 = vmax.f32 %v651, 0.0
        %v716 = vmax.f32 %v652, 0.0
        %v717 = vmax.f32 %v653, 0.0
        %v718 = vmax.f32 %v654, 0.0
        %v719 = vmax.f32 %v655, 0.0
        %v720 = vmax.f32 %v656, 0.0
        %v721 = vmax.f32 %v657, 0.0
        %v722 = vmax.f32 %v658, 0.0
        %v723 = vmax.f32 %v659, 0.0
        %v724 = vmax.f32 %v660, 0.0
        %v725 = vmax.f32 %v661, 0.0
        %v726 = vmax.f32 %v662, 0.0
        %v727 = vmax.f32 %v663, 0.0
        %v728 = vmax.f32 %v664, 0.0
        %v729 = vmax.f32 %v665, 0.0
        %v730 = vmax.f32 %v666, 0.0
        %v731 = vmax.f32 %v667, 0.0
        %v732 = vmax.f32 %v668, 0.0
        %v733 = vmax.f32 %v669, 0.0
        %v734 = vmax.f32 %v670, 0.0
        %v735 = vmax.f32 %v671, 0.0
        %v736 = vmax.f32 %v672, 0.0
        %v737 = vmax.f32 %v673, 0.0
        %v738 = vmax.f32 %v674, 0.0
        %v739 = vld [vmem:[#allocation10] sm:$0xff]
        %v740 = vld [vmem:[#allocation10 + $0x8] sm:$0xff]
        %v741 = vld [vmem:[%s4] sm:$0x1]
        %v743 = vperm.slane %v741, 0
        %vm745 = vcmask 130048
        %v747 = vsel %vm745, %v675, 0
        %v750 = vsel %vm745, %v676, 0
        %v753 = vsel %vm745, %v677, 0
        %v756 = vsel %vm745, %v678, 0
        %v759 = vsel %vm745, %v679, 0
        %v762 = vsel %vm745, %v680, 0
        %v765 = vsel %vm745, %v681, 0
        %v768 = vsel %vm745, %v682, 0
        %v771 = vsel %vm745, %v683, 0
        %v774 = vsel %vm745, %v684, 0
        %v777 = vsel %vm745, %v685, 0
        %v780 = vsel %vm745, %v686, 0
        %v783 = vsel %vm745, %v687, 0
        %v786 = vsel %vm745, %v688, 0
        %v789 = vsel %vm745, %v689, 0
        %v792 = vsel %vm745, %v690, 0
        %v795 = vsel %vm745, %v691, 0
        %v798 = vsel %vm745, %v692, 0
        %v801 = vsel %vm745, %v693, 0
        %v804 = vsel %vm745, %v694, 0
        %v807 = vsel %vm745, %v695, 0
        %v810 = vsel %vm745, %v696, 0
        %v813 = vsel %vm745, %v697, 0
        %v816 = vsel %vm745, %v698, 0
        %v819 = vsel %vm745, %v699, 0
        %v822 = vsel %vm745, %v700, 0
        %v825 = vsel %vm745, %v701, 0
        %v828 = vsel %vm745, %v702, 0
        %v831 = vsel %vm745, %v703, 0
        %v834 = vsel %vm745, %v704, 0
        %v837 = vsel %vm745, %v705, 0
        %v840 = vsel %vm745, %v706, 0
        %v843 = vsel %vm745, %v707, 0
        %v846 = vsel %vm745, %v708, 0
        %v849 = vsel %vm745, %v709, 0
        %v852 = vsel %vm745, %v710, 0
        %v855 = vsel %vm745, %v711, 0
        %v858 = vsel %vm745, %v712, 0
        %v861 = vsel %vm745, %v713, 0
        %v864 = vsel %vm745, %v714, 0
        %v867 = vsel %vm745, %v715, 0
        %v870 = vsel %vm745, %v716, 0
        %v873 = vsel %vm745, %v717, 0
        %v876 = vsel %vm745, %v718, 0
        %v879 = vsel %vm745, %v719, 0
        %v882 = vsel %vm745, %v720, 0
        %v885 = vsel %vm745, %v721, 0
        %v888 = vsel %vm745, %v722, 0
        %v891 = vsel %vm745, %v723, 0
        %v894 = vsel %vm745, %v724, 0
        %v897 = vsel %vm745, %v725, 0
        %v900 = vsel %vm745, %v726, 0
        %v903 = vsel %vm745, %v727, 0
        %v906 = vsel %vm745, %v728, 0
        %v909 = vsel %vm745, %v729, 0
        %v912 = vsel %vm745, %v730, 0
        %v915 = vsel %vm745, %v731, 0
        %v918 = vsel %vm745, %v732, 0
        %v921 = vsel %vm745, %v733, 0
        %v924 = vsel %vm745, %v734, 0
        %v927 = vsel %vm745, %v735, 0
        %v930 = vsel %vm745, %v736, 0
        %v933 = vsel %vm745, %v737, 0
        %v936 = vsel %vm745, %v738, 0
        %938 = vmatpush.msra.mxu0 0.0
        %939 = vmatpush.msra.mxu0 0.0
        %940 = vmatpush.msra.mxu0 0.0
        %941 = vmatpush.msra.mxu0 0.0
        %942 = vmatpush.msra.mxu0 0.0
        %943 = vmatpush.msra.mxu0 0.0
        %944 = vmatpush.msra.mxu0 0.0
        %945 = vmatpush.msra.mxu0 0.0
        %946 = vmatpush.msra.mxu0 0.0
        %947 = vmatpush.msra.mxu0 0.0
        %948 = vmatpush.msra.mxu0 0.0
        %949 = vmatpush.msra.mxu0 0.0
        %950 = vmatpush.msra.mxu0 0.0
        %951 = vmatpush.msra.mxu0 0.0
        %v952 = vand.u32 %v740, 4294901760
        %953 = vmatpush.msra.mxu0 %v952
        %v954 = vand.u32 %v739, 4294901760
        %955 = vmatpush.msra.mxu0 %v954
        %v956 = vand.u32 %v747, 4294901760
        %v957 = vsub.f32 %v747, %v956
        %v958 = vand.u32 %v957, 4294901760
        %v959 = vsub.f32 %v957, %v958
        %v960 = vand.u32 %v959, 4294901760
        %961 = vmatmul.f32.gmra.mxu0 %v960
        %v962 = vpop.f32.mrf.mxu0
        %v963 = vadd.f32 %v743, %v962
        %v964 = vand.u32 %v750, 4294901760
        %v965 = vsub.f32 %v750, %v964
        %v966 = vand.u32 %v965, 4294901760
        %v967 = vsub.f32 %v965, %v966
        %v968 = vand.u32 %v967, 4294901760
        %969 = vmatmul.f32.gmra.mxu0 %v968
        %v970 = vpop.f32.mrf.mxu0
        %v971 = vadd.f32 %v743, %v970
        %v972 = vand.u32 %v753, 4294901760
        %v973 = vsub.f32 %v753, %v972
        %v974 = vand.u32 %v973, 4294901760
        %v975 = vsub.f32 %v973, %v974
        %v976 = vand.u32 %v975, 4294901760
        %977 = vmatmul.f32.gmra.mxu0 %v976
        %v978 = vpop.f32.mrf.mxu0
        %v979 = vadd.f32 %v743, %v978
        %v980 = vand.u32 %v756, 4294901760
        %v981 = vsub.f32 %v756, %v980
        %v982 = vand.u32 %v981, 4294901760
        %v983 = vsub.f32 %v981, %v982
        %v984 = vand.u32 %v983, 4294901760
        %985 = vmatmul.f32.gmra.mxu0 %v984
        %v986 = vpop.f32.mrf.mxu0
        %v987 = vadd.f32 %v743, %v986
        %v988 = vand.u32 %v759, 4294901760
        %v989 = vsub.f32 %v759, %v988
        %v990 = vand.u32 %v989, 4294901760
        %v991 = vsub.f32 %v989, %v990
        %v992 = vand.u32 %v991, 4294901760
        %993 = vmatmul.f32.gmra.mxu0 %v992
        %v994 = vpop.f32.mrf.mxu0
        %v995 = vadd.f32 %v743, %v994
        %v996 = vand.u32 %v762, 4294901760
        %v997 = vsub.f32 %v762, %v996
        %v998 = vand.u32 %v997, 4294901760
        %v999 = vsub.f32 %v997, %v998
        %v1000 = vand.u32 %v999, 4294901760
        %1001 = vmatmul.f32.gmra.mxu0 %v1000
        %v1002 = vpop.f32.mrf.mxu0
        %v1003 = vadd.f32 %v743, %v1002
        %v1004 = vand.u32 %v765, 4294901760
        %v1005 = vsub.f32 %v765, %v1004
        %v1006 = vand.u32 %v1005, 4294901760
        %v1007 = vsub.f32 %v1005, %v1006
        %v1008 = vand.u32 %v1007, 4294901760
        %1009 = vmatmul.f32.gmra.mxu0 %v1008
        %v1010 = vpop.f32.mrf.mxu0
        %v1011 = vadd.f32 %v743, %v1010
        %v1012 = vand.u32 %v768, 4294901760
        %v1013 = vsub.f32 %v768, %v1012
        %v1014 = vand.u32 %v1013, 4294901760
        %v1015 = vsub.f32 %v1013, %v1014
        %v1016 = vand.u32 %v1015, 4294901760
        %1017 = vmatmul.f32.gmra.mxu0 %v1016
        %v1018 = vpop.f32.mrf.mxu0
        %v1019 = vadd.f32 %v743, %v1018
        %v1020 = vand.u32 %v771, 4294901760
        %v1021 = vsub.f32 %v771, %v1020
        %v1022 = vand.u32 %v1021, 4294901760
        %v1023 = vsub.f32 %v1021, %v1022
        %v1024 = vand.u32 %v1023, 4294901760
        %1025 = vmatmul.f32.gmra.mxu0 %v1024
        %v1026 = vpop.f32.mrf.mxu0
        %v1027 = vadd.f32 %v743, %v1026
        %v1028 = vand.u32 %v774, 4294901760
        %v1029 = vsub.f32 %v774, %v1028
        %v1030 = vand.u32 %v1029, 4294901760
        %v1031 = vsub.f32 %v1029, %v1030
        %v1032 = vand.u32 %v1031, 4294901760
        %1033 = vmatmul.f32.gmra.mxu0 %v1032
        %v1034 = vpop.f32.mrf.mxu0
        %v1035 = vadd.f32 %v743, %v1034
        %v1036 = vand.u32 %v777, 4294901760
        %v1037 = vsub.f32 %v777, %v1036
        %v1038 = vand.u32 %v1037, 4294901760
        %v1039 = vsub.f32 %v1037, %v1038
        %v1040 = vand.u32 %v1039, 4294901760
        %1041 = vmatmul.f32.gmra.mxu0 %v1040
        %v1042 = vpop.f32.mrf.mxu0
        %v1043 = vadd.f32 %v743, %v1042
        %v1044 = vand.u32 %v780, 4294901760
        %v1045 = vsub.f32 %v780, %v1044
        %v1046 = vand.u32 %v1045, 4294901760
        %v1047 = vsub.f32 %v1045, %v1046
        %v1048 = vand.u32 %v1047, 4294901760
        %1049 = vmatmul.f32.gmra.mxu0 %v1048
        %v1050 = vpop.f32.mrf.mxu0
        %v1051 = vadd.f32 %v743, %v1050
        %v1052 = vand.u32 %v783, 4294901760
        %v1053 = vsub.f32 %v783, %v1052
        %v1054 = vand.u32 %v1053, 4294901760
        %v1055 = vsub.f32 %v1053, %v1054
        %v1056 = vand.u32 %v1055, 4294901760
        %1057 = vmatmul.f32.gmra.mxu0 %v1056
        %v1058 = vpop.f32.mrf.mxu0
        %v1059 = vadd.f32 %v743, %v1058
        %v1060 = vand.u32 %v786, 4294901760
        %v1061 = vsub.f32 %v786, %v1060
        %v1062 = vand.u32 %v1061, 4294901760
        %v1063 = vsub.f32 %v1061, %v1062
        %v1064 = vand.u32 %v1063, 4294901760
        %1065 = vmatmul.f32.gmra.mxu0 %v1064
        %v1066 = vpop.f32.mrf.mxu0
        %v1067 = vadd.f32 %v743, %v1066
        %v1068 = vand.u32 %v789, 4294901760
        %v1069 = vsub.f32 %v789, %v1068
        %v1070 = vand.u32 %v1069, 4294901760
        %v1071 = vsub.f32 %v1069, %v1070
        %v1072 = vand.u32 %v1071, 4294901760
        %1073 = vmatmul.f32.gmra.mxu0 %v1072
        %v1074 = vpop.f32.mrf.mxu0
        %v1075 = vadd.f32 %v743, %v1074
        %v1076 = vand.u32 %v792, 4294901760
        %v1077 = vsub.f32 %v792, %v1076
        %v1078 = vand.u32 %v1077, 4294901760
        %v1079 = vsub.f32 %v1077, %v1078
        %v1080 = vand.u32 %v1079, 4294901760
        %1081 = vmatmul.f32.gmra.mxu0 %v1080
        %v1082 = vpop.f32.mrf.mxu0
        %v1083 = vadd.f32 %v743, %v1082
        %v1084 = vand.u32 %v795, 4294901760
        %v1085 = vsub.f32 %v795, %v1084
        %v1086 = vand.u32 %v1085, 4294901760
        %v1087 = vsub.f32 %v1085, %v1086
        %v1088 = vand.u32 %v1087, 4294901760
        %1089 = vmatmul.f32.gmra.mxu0 %v1088
        %v1090 = vpop.f32.mrf.mxu0
        %v1091 = vadd.f32 %v743, %v1090
        %v1092 = vand.u32 %v798, 4294901760
        %v1093 = vsub.f32 %v798, %v1092
        %v1094 = vand.u32 %v1093, 4294901760
        %v1095 = vsub.f32 %v1093, %v1094
        %v1096 = vand.u32 %v1095, 4294901760
        %1097 = vmatmul.f32.gmra.mxu0 %v1096
        %v1098 = vpop.f32.mrf.mxu0
        %v1099 = vadd.f32 %v743, %v1098
        %v1100 = vand.u32 %v801, 4294901760
        %v1101 = vsub.f32 %v801, %v1100
        %v1102 = vand.u32 %v1101, 4294901760
        %v1103 = vsub.f32 %v1101, %v1102
        %v1104 = vand.u32 %v1103, 4294901760
        %1105 = vmatmul.f32.gmra.mxu0 %v1104
        %v1106 = vpop.f32.mrf.mxu0
        %v1107 = vadd.f32 %v743, %v1106
        %v1108 = vand.u32 %v804, 4294901760
        %v1109 = vsub.f32 %v804, %v1108
        %v1110 = vand.u32 %v1109, 4294901760
        %v1111 = vsub.f32 %v1109, %v1110
        %v1112 = vand.u32 %v1111, 4294901760
        %1113 = vmatmul.f32.gmra.mxu0 %v1112
        %v1114 = vpop.f32.mrf.mxu0
        %v1115 = vadd.f32 %v743, %v1114
        %v1116 = vand.u32 %v807, 4294901760
        %v1117 = vsub.f32 %v807, %v1116
        %v1118 = vand.u32 %v1117, 4294901760
        %v1119 = vsub.f32 %v1117, %v1118
        %v1120 = vand.u32 %v1119, 4294901760
        %1121 = vmatmul.f32.gmra.mxu0 %v1120
        %v1122 = vpop.f32.mrf.mxu0
        %v1123 = vadd.f32 %v743, %v1122
        %v1124 = vand.u32 %v810, 4294901760
        %v1125 = vsub.f32 %v810, %v1124
        %v1126 = vand.u32 %v1125, 4294901760
        %v1127 = vsub.f32 %v1125, %v1126
        %v1128 = vand.u32 %v1127, 4294901760
        %1129 = vmatmul.f32.gmra.mxu0 %v1128
        %v1130 = vpop.f32.mrf.mxu0
        %v1131 = vadd.f32 %v743, %v1130
        %v1132 = vand.u32 %v813, 4294901760
        %v1133 = vsub.f32 %v813, %v1132
        %v1134 = vand.u32 %v1133, 4294901760
        %v1135 = vsub.f32 %v1133, %v1134
        %v1136 = vand.u32 %v1135, 4294901760
        %1137 = vmatmul.f32.gmra.mxu0 %v1136
        %v1138 = vpop.f32.mrf.mxu0
        %v1139 = vadd.f32 %v743, %v1138
        %v1140 = vand.u32 %v816, 4294901760
        %v1141 = vsub.f32 %v816, %v1140
        %v1142 = vand.u32 %v1141, 4294901760
        %v1143 = vsub.f32 %v1141, %v1142
        %v1144 = vand.u32 %v1143, 4294901760
        %1145 = vmatmul.f32.gmra.mxu0 %v1144
        %v1146 = vpop.f32.mrf.mxu0
        %v1147 = vadd.f32 %v743, %v1146
        %v1148 = vand.u32 %v819, 4294901760
        %v1149 = vsub.f32 %v819, %v1148
        %v1150 = vand.u32 %v1149, 4294901760
        %v1151 = vsub.f32 %v1149, %v1150
        %v1152 = vand.u32 %v1151, 4294901760
        %1153 = vmatmul.f32.gmra.mxu0 %v1152
        %v1154 = vpop.f32.mrf.mxu0
        %v1155 = vadd.f32 %v743, %v1154
        %v1156 = vand.u32 %v822, 4294901760
        %v1157 = vsub.f32 %v822, %v1156
        %v1158 = vand.u32 %v1157, 4294901760
        %v1159 = vsub.f32 %v1157, %v1158
        %v1160 = vand.u32 %v1159, 4294901760
        %1161 = vmatmul.f32.gmra.mxu0 %v1160
        %v1162 = vpop.f32.mrf.mxu0
        %v1163 = vadd.f32 %v743, %v1162
        %v1164 = vand.u32 %v825, 4294901760
        %v1165 = vsub.f32 %v825, %v1164
        %v1166 = vand.u32 %v1165, 4294901760
        %v1167 = vsub.f32 %v1165, %v1166
        %v1168 = vand.u32 %v1167, 4294901760
        %1169 = vmatmul.f32.gmra.mxu0 %v1168
        %v1170 = vpop.f32.mrf.mxu0
        %v1171 = vadd.f32 %v743, %v1170
        %v1172 = vand.u32 %v828, 4294901760
        %v1173 = vsub.f32 %v828, %v1172
        %v1174 = vand.u32 %v1173, 4294901760
        %v1175 = vsub.f32 %v1173, %v1174
        %v1176 = vand.u32 %v1175, 4294901760
        %1177 = vmatmul.f32.gmra.mxu0 %v1176
        %v1178 = vpop.f32.mrf.mxu0
        %v1179 = vadd.f32 %v743, %v1178
        %v1180 = vand.u32 %v831, 4294901760
        %v1181 = vsub.f32 %v831, %v1180
        %v1182 = vand.u32 %v1181, 4294901760
        %v1183 = vsub.f32 %v1181, %v1182
        %v1184 = vand.u32 %v1183, 4294901760
        %1185 = vmatmul.f32.gmra.mxu0 %v1184
        %v1186 = vpop.f32.mrf.mxu0
        %v1187 = vadd.f32 %v743, %v1186
        %v1188 = vand.u32 %v834, 4294901760
        %v1189 = vsub.f32 %v834, %v1188
        %v1190 = vand.u32 %v1189, 4294901760
        %v1191 = vsub.f32 %v1189, %v1190
        %v1192 = vand.u32 %v1191, 4294901760
        %1193 = vmatmul.f32.gmra.mxu0 %v1192
        %v1194 = vpop.f32.mrf.mxu0
        %v1195 = vadd.f32 %v743, %v1194
        %v1196 = vand.u32 %v837, 4294901760
        %v1197 = vsub.f32 %v837, %v1196
        %v1198 = vand.u32 %v1197, 4294901760
        %v1199 = vsub.f32 %v1197, %v1198
        %v1200 = vand.u32 %v1199, 4294901760
        %1201 = vmatmul.f32.gmra.mxu0 %v1200
        %v1202 = vpop.f32.mrf.mxu0
        %v1203 = vadd.f32 %v743, %v1202
        %v1204 = vand.u32 %v840, 4294901760
        %v1205 = vsub.f32 %v840, %v1204
        %v1206 = vand.u32 %v1205, 4294901760
        %v1207 = vsub.f32 %v1205, %v1206
        %v1208 = vand.u32 %v1207, 4294901760
        %1209 = vmatmul.f32.gmra.mxu0 %v1208
        %v1210 = vpop.f32.mrf.mxu0
        %v1211 = vadd.f32 %v743, %v1210
        %v1212 = vand.u32 %v843, 4294901760
        %v1213 = vsub.f32 %v843, %v1212
        %v1214 = vand.u32 %v1213, 4294901760
        %v1215 = vsub.f32 %v1213, %v1214
        %v1216 = vand.u32 %v1215, 4294901760
        %1217 = vmatmul.f32.gmra.mxu0 %v1216
        %v1218 = vpop.f32.mrf.mxu0
        %v1219 = vadd.f32 %v743, %v1218
        %v1220 = vand.u32 %v846, 4294901760
        %v1221 = vsub.f32 %v846, %v1220
        %v1222 = vand.u32 %v1221, 4294901760
        %v1223 = vsub.f32 %v1221, %v1222
        %v1224 = vand.u32 %v1223, 4294901760
        %1225 = vmatmul.f32.gmra.mxu0 %v1224
        %v1226 = vpop.f32.mrf.mxu0
        %v1227 = vadd.f32 %v743, %v1226
        %v1228 = vand.u32 %v849, 4294901760
        %v1229 = vsub.f32 %v849, %v1228
        %v1230 = vand.u32 %v1229, 4294901760
        %v1231 = vsub.f32 %v1229, %v1230
        %v1232 = vand.u32 %v1231, 4294901760
        %1233 = vmatmul.f32.gmra.mxu0 %v1232
        %v1234 = vpop.f32.mrf.mxu0
        %v1235 = vadd.f32 %v743, %v1234
        %v1236 = vand.u32 %v852, 4294901760
        %v1237 = vsub.f32 %v852, %v1236
        %v1238 = vand.u32 %v1237, 4294901760
        %v1239 = vsub.f32 %v1237, %v1238
        %v1240 = vand.u32 %v1239, 4294901760
        %1241 = vmatmul.f32.gmra.mxu0 %v1240
        %v1242 = vpop.f32.mrf.mxu0
        %v1243 = vadd.f32 %v743, %v1242
        %v1244 = vand.u32 %v855, 4294901760
        %v1245 = vsub.f32 %v855, %v1244
        %v1246 = vand.u32 %v1245, 4294901760
        %v1247 = vsub.f32 %v1245, %v1246
        %v1248 = vand.u32 %v1247, 4294901760
        %1249 = vmatmul.f32.gmra.mxu0 %v1248
        %v1250 = vpop.f32.mrf.mxu0
        %v1251 = vadd.f32 %v743, %v1250
        %v1252 = vand.u32 %v858, 4294901760
        %v1253 = vsub.f32 %v858, %v1252
        %v1254 = vand.u32 %v1253, 4294901760
        %v1255 = vsub.f32 %v1253, %v1254
        %v1256 = vand.u32 %v1255, 4294901760
        %1257 = vmatmul.f32.gmra.mxu0 %v1256
        %v1258 = vpop.f32.mrf.mxu0
        %v1259 = vadd.f32 %v743, %v1258
        %v1260 = vand.u32 %v861, 4294901760
        %v1261 = vsub.f32 %v861, %v1260
        %v1262 = vand.u32 %v1261, 4294901760
        %v1263 = vsub.f32 %v1261, %v1262
        %v1264 = vand.u32 %v1263, 4294901760
        %1265 = vmatmul.f32.gmra.mxu0 %v1264
        %v1266 = vpop.f32.mrf.mxu0
        %v1267 = vadd.f32 %v743, %v1266
        %v1268 = vand.u32 %v864, 4294901760
        %v1269 = vsub.f32 %v864, %v1268
        %v1270 = vand.u32 %v1269, 4294901760
        %v1271 = vsub.f32 %v1269, %v1270
        %v1272 = vand.u32 %v1271, 4294901760
        %1273 = vmatmul.f32.gmra.mxu0 %v1272
        %v1274 = vpop.f32.mrf.mxu0
        %v1275 = vadd.f32 %v743, %v1274
        %v1276 = vand.u32 %v867, 4294901760
        %v1277 = vsub.f32 %v867, %v1276
        %v1278 = vand.u32 %v1277, 4294901760
        %v1279 = vsub.f32 %v1277, %v1278
        %v1280 = vand.u32 %v1279, 4294901760
        %1281 = vmatmul.f32.gmra.mxu0 %v1280
        %v1282 = vpop.f32.mrf.mxu0
        %v1283 = vadd.f32 %v743, %v1282
        %v1284 = vand.u32 %v870, 4294901760
        %v1285 = vsub.f32 %v870, %v1284
        %v1286 = vand.u32 %v1285, 4294901760
        %v1287 = vsub.f32 %v1285, %v1286
        %v1288 = vand.u32 %v1287, 4294901760
        %1289 = vmatmul.f32.gmra.mxu0 %v1288
        %v1290 = vpop.f32.mrf.mxu0
        %v1291 = vadd.f32 %v743, %v1290
        %v1292 = vand.u32 %v873, 4294901760
        %v1293 = vsub.f32 %v873, %v1292
        %v1294 = vand.u32 %v1293, 4294901760
        %v1295 = vsub.f32 %v1293, %v1294
        %v1296 = vand.u32 %v1295, 4294901760
        %1297 = vmatmul.f32.gmra.mxu0 %v1296
        %v1298 = vpop.f32.mrf.mxu0
        %v1299 = vadd.f32 %v743, %v1298
        %v1300 = vand.u32 %v876, 4294901760
        %v1301 = vsub.f32 %v876, %v1300
        %v1302 = vand.u32 %v1301, 4294901760
        %v1303 = vsub.f32 %v1301, %v1302
        %v1304 = vand.u32 %v1303, 4294901760
        %1305 = vmatmul.f32.gmra.mxu0 %v1304
        %v1306 = vpop.f32.mrf.mxu0
        %v1307 = vadd.f32 %v743, %v1306
        %v1308 = vand.u32 %v879, 4294901760
        %v1309 = vsub.f32 %v879, %v1308
        %v1310 = vand.u32 %v1309, 4294901760
        %v1311 = vsub.f32 %v1309, %v1310
        %v1312 = vand.u32 %v1311, 4294901760
        %1313 = vmatmul.f32.gmra.mxu0 %v1312
        %v1314 = vpop.f32.mrf.mxu0
        %v1315 = vadd.f32 %v743, %v1314
        %v1316 = vand.u32 %v882, 4294901760
        %v1317 = vsub.f32 %v882, %v1316
        %v1318 = vand.u32 %v1317, 4294901760
        %v1319 = vsub.f32 %v1317, %v1318
        %v1320 = vand.u32 %v1319, 4294901760
        %1321 = vmatmul.f32.gmra.mxu0 %v1320
        %v1322 = vpop.f32.mrf.mxu0
        %v1323 = vadd.f32 %v743, %v1322
        %v1324 = vand.u32 %v885, 4294901760
        %v1325 = vsub.f32 %v885, %v1324
        %v1326 = vand.u32 %v1325, 4294901760
        %v1327 = vsub.f32 %v1325, %v1326
        %v1328 = vand.u32 %v1327, 4294901760
        %1329 = vmatmul.f32.gmra.mxu0 %v1328
        %v1330 = vpop.f32.mrf.mxu0
        %v1331 = vadd.f32 %v743, %v1330
        %v1332 = vand.u32 %v888, 4294901760
        %v1333 = vsub.f32 %v888, %v1332
        %v1334 = vand.u32 %v1333, 4294901760
        %v1335 = vsub.f32 %v1333, %v1334
        %v1336 = vand.u32 %v1335, 4294901760
        %1337 = vmatmul.f32.gmra.mxu0 %v1336
        %v1338 = vpop.f32.mrf.mxu0
        %v1339 = vadd.f32 %v743, %v1338
        %v1340 = vand.u32 %v891, 4294901760
        %v1341 = vsub.f32 %v891, %v1340
        %v1342 = vand.u32 %v1341, 4294901760
        %v1343 = vsub.f32 %v1341, %v1342
        %v1344 = vand.u32 %v1343, 4294901760
        %1345 = vmatmul.f32.gmra.mxu0 %v1344
        %v1346 = vpop.f32.mrf.mxu0
        %v1347 = vadd.f32 %v743, %v1346
        %v1348 = vand.u32 %v894, 4294901760
        %v1349 = vsub.f32 %v894, %v1348
        %v1350 = vand.u32 %v1349, 4294901760
        %v1351 = vsub.f32 %v1349, %v1350
        %v1352 = vand.u32 %v1351, 4294901760
        %1353 = vmatmul.f32.gmra.mxu0 %v1352
        %v1354 = vpop.f32.mrf.mxu0
        %v1355 = vadd.f32 %v743, %v1354
        %v1356 = vand.u32 %v897, 4294901760
        %v1357 = vsub.f32 %v897, %v1356
        %v1358 = vand.u32 %v1357, 4294901760
        %v1359 = vsub.f32 %v1357, %v1358
        %v1360 = vand.u32 %v1359, 4294901760
        %1361 = vmatmul.f32.gmra.mxu0 %v1360
        %v1362 = vpop.f32.mrf.mxu0
        %v1363 = vadd.f32 %v743, %v1362
        %v1364 = vand.u32 %v900, 4294901760
        %v1365 = vsub.f32 %v900, %v1364
        %v1366 = vand.u32 %v1365, 4294901760
        %v1367 = vsub.f32 %v1365, %v1366
        %v1368 = vand.u32 %v1367, 4294901760
        %1369 = vmatmul.f32.gmra.mxu0 %v1368
        %v1370 = vpop.f32.mrf.mxu0
        %v1371 = vadd.f32 %v743, %v1370
        %v1372 = vand.u32 %v903, 4294901760
        %v1373 = vsub.f32 %v903, %v1372
        %v1374 = vand.u32 %v1373, 4294901760
        %v1375 = vsub.f32 %v1373, %v1374
        %v1376 = vand.u32 %v1375, 4294901760
        %1377 = vmatmul.f32.gmra.mxu0 %v1376
        %v1378 = vpop.f32.mrf.mxu0
        %v1379 = vadd.f32 %v743, %v1378
        %v1380 = vand.u32 %v906, 4294901760
        %v1381 = vsub.f32 %v906, %v1380
        %v1382 = vand.u32 %v1381, 4294901760
        %v1383 = vsub.f32 %v1381, %v1382
        %v1384 = vand.u32 %v1383, 4294901760
        %1385 = vmatmul.f32.gmra.mxu0 %v1384
        %v1386 = vpop.f32.mrf.mxu0
        %v1387 = vadd.f32 %v743, %v1386
        %v1388 = vand.u32 %v909, 4294901760
        %v1389 = vsub.f32 %v909, %v1388
        %v1390 = vand.u32 %v1389, 4294901760
        %v1391 = vsub.f32 %v1389, %v1390
        %v1392 = vand.u32 %v1391, 4294901760
        %1393 = vmatmul.f32.gmra.mxu0 %v1392
        %v1394 = vpop.f32.mrf.mxu0
        %v1395 = vadd.f32 %v743, %v1394
        %v1396 = vand.u32 %v912, 4294901760
        %v1397 = vsub.f32 %v912, %v1396
        %v1398 = vand.u32 %v1397, 4294901760
        %v1399 = vsub.f32 %v1397, %v1398
        %v1400 = vand.u32 %v1399, 4294901760
        %1401 = vmatmul.f32.gmra.mxu0 %v1400
        %v1402 = vpop.f32.mrf.mxu0
        %v1403 = vadd.f32 %v743, %v1402
        %v1404 = vand.u32 %v915, 4294901760
        %v1405 = vsub.f32 %v915, %v1404
        %v1406 = vand.u32 %v1405, 4294901760
        %v1407 = vsub.f32 %v1405, %v1406
        %v1408 = vand.u32 %v1407, 4294901760
        %1409 = vmatmul.f32.gmra.mxu0 %v1408
        %v1410 = vpop.f32.mrf.mxu0
        %v1411 = vadd.f32 %v743, %v1410
        %v1412 = vand.u32 %v918, 4294901760
        %v1413 = vsub.f32 %v918, %v1412
        %v1414 = vand.u32 %v1413, 4294901760
        %v1415 = vsub.f32 %v1413, %v1414
        %v1416 = vand.u32 %v1415, 4294901760
        %1417 = vmatmul.f32.gmra.mxu0 %v1416
        %v1418 = vpop.f32.mrf.mxu0
        %v1419 = vadd.f32 %v743, %v1418
        %v1420 = vand.u32 %v921, 4294901760
        %v1421 = vsub.f32 %v921, %v1420
        %v1422 = vand.u32 %v1421, 4294901760
        %v1423 = vsub.f32 %v1421, %v1422
        %v1424 = vand.u32 %v1423, 4294901760
        %1425 = vmatmul.f32.gmra.mxu0 %v1424
        %v1426 = vpop.f32.mrf.mxu0
        %v1427 = vadd.f32 %v743, %v1426
        %v1428 = vand.u32 %v924, 4294901760
        %v1429 = vsub.f32 %v924, %v1428
        %v1430 = vand.u32 %v1429, 4294901760
        %v1431 = vsub.f32 %v1429, %v1430
        %v1432 = vand.u32 %v1431, 4294901760
        %1433 = vmatmul.f32.gmra.mxu0 %v1432
        %v1434 = vpop.f32.mrf.mxu0
        %v1435 = vadd.f32 %v743, %v1434
        %v1436 = vand.u32 %v927, 4294901760
        %v1437 = vsub.f32 %v927, %v1436
        %v1438 = vand.u32 %v1437, 4294901760
        %v1439 = vsub.f32 %v1437, %v1438
        %v1440 = vand.u32 %v1439, 4294901760
        %1441 = vmatmul.f32.gmra.mxu0 %v1440
        %v1442 = vpop.f32.mrf.mxu0
        %v1443 = vadd.f32 %v743, %v1442
        %v1444 = vand.u32 %v930, 4294901760
        %v1445 = vsub.f32 %v930, %v1444
        %v1446 = vand.u32 %v1445, 4294901760
        %v1447 = vsub.f32 %v1445, %v1446
        %v1448 = vand.u32 %v1447, 4294901760
        %1449 = vmatmul.f32.gmra.mxu0 %v1448
        %v1450 = vpop.f32.mrf.mxu0
        %v1451 = vadd.f32 %v743, %v1450
        %v1452 = vand.u32 %v933, 4294901760
        %v1453 = vsub.f32 %v933, %v1452
        %v1454 = vand.u32 %v1453, 4294901760
        %v1455 = vsub.f32 %v1453, %v1454
        %v1456 = vand.u32 %v1455, 4294901760
        %1457 = vmatmul.f32.gmra.mxu0 %v1456
        %v1458 = vpop.f32.mrf.mxu0
        %v1459 = vadd.f32 %v743, %v1458
        %v1460 = vand.u32 %v936, 4294901760
        %v1461 = vsub.f32 %v936, %v1460
        %v1462 = vand.u32 %v1461, 4294901760
        %v1463 = vsub.f32 %v1461, %v1462
        %v1464 = vand.u32 %v1463, 4294901760
        %1465 = vmatmul.f32.gmra.mxu0 %v1464
        %v1466 = vpop.f32.mrf.mxu0
        %v1467 = vadd.f32 %v743, %v1466
        %1468 = vdwg.mxu0
        %1469 = vmatpush.msra.mxu0 0.0
        %1470 = vmatpush.msra.mxu0 0.0
        %1471 = vmatpush.msra.mxu0 0.0
        %1472 = vmatpush.msra.mxu0 0.0
        %1473 = vmatpush.msra.mxu0 0.0
        %1474 = vmatpush.msra.mxu0 0.0
        %1475 = vmatpush.msra.mxu0 0.0
        %1476 = vmatpush.msra.mxu0 0.0
        %1477 = vmatpush.msra.mxu0 0.0
        %1478 = vmatpush.msra.mxu0 0.0
        %1479 = vmatpush.msra.mxu0 0.0
        %1480 = vmatpush.msra.mxu0 0.0
        %1481 = vmatpush.msra.mxu0 0.0
        %1482 = vmatpush.msra.mxu0 0.0
        %v1483 = vand.u32 %v740, 4294901760
        %v1484 = vsub.f32 %v740, %v1483
        %v1485 = vand.u32 %v1484, 4294901760
        %v1486 = vsub.f32 %v1484, %v1485
        %v1487 = vand.u32 %v1486, 4294901760
        %1488 = vmatpush.msra.mxu0 %v1487
        %v1489 = vand.u32 %v739, 4294901760
        %v1490 = vsub.f32 %v739, %v1489
        %v1491 = vand.u32 %v1490, 4294901760
        %v1492 = vsub.f32 %v1490, %v1491
        %v1493 = vand.u32 %v1492, 4294901760
        %1494 = vmatpush.msra.mxu0 %v1493
        %v1495 = vand.u32 %v747, 4294901760
        %1496 = vmatmul.f32.gmra.mxu0 %v1495
        %v1497 = vpop.f32.mrf.mxu0
        %v1498 = vadd.f32 %v963, %v1497
        %v1499 = vand.u32 %v750, 4294901760
        %1500 = vmatmul.f32.gmra.mxu0 %v1499
        %v1501 = vpop.f32.mrf.mxu0
        %v1502 = vadd.f32 %v971, %v1501
        %v1503 = vand.u32 %v753, 4294901760
        %1504 = vmatmul.f32.gmra.mxu0 %v1503
        %v1505 = vpop.f32.mrf.mxu0
        %v1506 = vadd.f32 %v979, %v1505
        %v1507 = vand.u32 %v756, 4294901760
        %1508 = vmatmul.f32.gmra.mxu0 %v1507
        %v1509 = vpop.f32.mrf.mxu0
        %v1510 = vadd.f32 %v987, %v1509
        %v1511 = vand.u32 %v759, 4294901760
        %1512 = vmatmul.f32.gmra.mxu0 %v1511
        %v1513 = vpop.f32.mrf.mxu0
        %v1514 = vadd.f32 %v995, %v1513
        %v1515 = vand.u32 %v762, 4294901760
        %1516 = vmatmul.f32.gmra.mxu0 %v1515
        %v1517 = vpop.f32.mrf.mxu0
        %v1518 = vadd.f32 %v1003, %v1517
        %v1519 = vand.u32 %v765, 4294901760
        %1520 = vmatmul.f32.gmra.mxu0 %v1519
        %v1521 = vpop.f32.mrf.mxu0
        %v1522 = vadd.f32 %v1011, %v1521
        %v1523 = vand.u32 %v768, 4294901760
        %1524 = vmatmul.f32.gmra.mxu0 %v1523
        %v1525 = vpop.f32.mrf.mxu0
        %v1526 = vadd.f32 %v1019, %v1525
        %v1527 = vand.u32 %v771, 4294901760
        %1528 = vmatmul.f32.gmra.mxu0 %v1527
        %v1529 = vpop.f32.mrf.mxu0
        %v1530 = vadd.f32 %v1027, %v1529
        %v1531 = vand.u32 %v774, 4294901760
        %1532 = vmatmul.f32.gmra.mxu0 %v1531
        %v1533 = vpop.f32.mrf.mxu0
        %v1534 = vadd.f32 %v1035, %v1533
        %v1535 = vand.u32 %v777, 4294901760
        %1536 = vmatmul.f32.gmra.mxu0 %v1535
        %v1537 = vpop.f32.mrf.mxu0
        %v1538 = vadd.f32 %v1043, %v1537
        %v1539 = vand.u32 %v780, 4294901760
        %1540 = vmatmul.f32.gmra.mxu0 %v1539
        %v1541 = vpop.f32.mrf.mxu0
        %v1542 = vadd.f32 %v1051, %v1541
        %v1543 = vand.u32 %v783, 4294901760
        %1544 = vmatmul.f32.gmra.mxu0 %v1543
        %v1545 = vpop.f32.mrf.mxu0
        %v1546 = vadd.f32 %v1059, %v1545
        %v1547 = vand.u32 %v786, 4294901760
        %1548 = vmatmul.f32.gmra.mxu0 %v1547
        %v1549 = vpop.f32.mrf.mxu0
        %v1550 = vadd.f32 %v1067, %v1549
        %v1551 = vand.u32 %v789, 4294901760
        %1552 = vmatmul.f32.gmra.mxu0 %v1551
        %v1553 = vpop.f32.mrf.mxu0
        %v1554 = vadd.f32 %v1075, %v1553
        %v1555 = vand.u32 %v792, 4294901760
        %1556 = vmatmul.f32.gmra.mxu0 %v1555
        %v1557 = vpop.f32.mrf.mxu0
        %v1558 = vadd.f32 %v1083, %v1557
        %v1559 = vand.u32 %v795, 4294901760
        %1560 = vmatmul.f32.gmra.mxu0 %v1559
        %v1561 = vpop.f32.mrf.mxu0
        %v1562 = vadd.f32 %v1091, %v1561
        %v1563 = vand.u32 %v798, 4294901760
        %1564 = vmatmul.f32.gmra.mxu0 %v1563
        %v1565 = vpop.f32.mrf.mxu0
        %v1566 = vadd.f32 %v1099, %v1565
        %v1567 = vand.u32 %v801, 4294901760
        %1568 = vmatmul.f32.gmra.mxu0 %v1567
        %v1569 = vpop.f32.mrf.mxu0
        %v1570 = vadd.f32 %v1107, %v1569
        %v1571 = vand.u32 %v804, 4294901760
        %1572 = vmatmul.f32.gmra.mxu0 %v1571
        %v1573 = vpop.f32.mrf.mxu0
        %v1574 = vadd.f32 %v1115, %v1573
        %v1575 = vand.u32 %v807, 4294901760
        %1576 = vmatmul.f32.gmra.mxu0 %v1575
        %v1577 = vpop.f32.mrf.mxu0
        %v1578 = vadd.f32 %v1123, %v1577
        %v1579 = vand.u32 %v810, 4294901760
        %1580 = vmatmul.f32.gmra.mxu0 %v1579
        %v1581 = vpop.f32.mrf.mxu0
        %v1582 = vadd.f32 %v1131, %v1581
        %v1583 = vand.u32 %v813, 4294901760
        %1584 = vmatmul.f32.gmra.mxu0 %v1583
        %v1585 = vpop.f32.mrf.mxu0
        %v1586 = vadd.f32 %v1139, %v1585
        %v1587 = vand.u32 %v816, 4294901760
        %1588 = vmatmul.f32.gmra.mxu0 %v1587
        %v1589 = vpop.f32.mrf.mxu0
        %v1590 = vadd.f32 %v1147, %v1589
        %v1591 = vand.u32 %v819, 4294901760
        %1592 = vmatmul.f32.gmra.mxu0 %v1591
        %v1593 = vpop.f32.mrf.mxu0
        %v1594 = vadd.f32 %v1155, %v1593
        %v1595 = vand.u32 %v822, 4294901760
        %1596 = vmatmul.f32.gmra.mxu0 %v1595
        %v1597 = vpop.f32.mrf.mxu0
        %v1598 = vadd.f32 %v1163, %v1597
        %v1599 = vand.u32 %v825, 4294901760
        %1600 = vmatmul.f32.gmra.mxu0 %v1599
        %v1601 = vpop.f32.mrf.mxu0
        %v1602 = vadd.f32 %v1171, %v1601
        %v1603 = vand.u32 %v828, 4294901760
        %1604 = vmatmul.f32.gmra.mxu0 %v1603
        %v1605 = vpop.f32.mrf.mxu0
        %v1606 = vadd.f32 %v1179, %v1605
        %v1607 = vand.u32 %v831, 4294901760
        %1608 = vmatmul.f32.gmra.mxu0 %v1607
        %v1609 = vpop.f32.mrf.mxu0
        %v1610 = vadd.f32 %v1187, %v1609
        %v1611 = vand.u32 %v834, 4294901760
        %1612 = vmatmul.f32.gmra.mxu0 %v1611
        %v1613 = vpop.f32.mrf.mxu0
        %v1614 = vadd.f32 %v1195, %v1613
        %v1615 = vand.u32 %v837, 4294901760
        %1616 = vmatmul.f32.gmra.mxu0 %v1615
        %v1617 = vpop.f32.mrf.mxu0
        %v1618 = vadd.f32 %v1203, %v1617
        %v1619 = vand.u32 %v840, 4294901760
        %1620 = vmatmul.f32.gmra.mxu0 %v1619
        %v1621 = vpop.f32.mrf.mxu0
        %v1622 = vadd.f32 %v1211, %v1621
        %v1623 = vand.u32 %v843, 4294901760
        %1624 = vmatmul.f32.gmra.mxu0 %v1623
        %v1625 = vpop.f32.mrf.mxu0
        %v1626 = vadd.f32 %v1219, %v1625
        %v1627 = vand.u32 %v846, 4294901760
        %1628 = vmatmul.f32.gmra.mxu0 %v1627
        %v1629 = vpop.f32.mrf.mxu0
        %v1630 = vadd.f32 %v1227, %v1629
        %v1631 = vand.u32 %v849, 4294901760
        %1632 = vmatmul.f32.gmra.mxu0 %v1631
        %v1633 = vpop.f32.mrf.mxu0
        %v1634 = vadd.f32 %v1235, %v1633
        %v1635 = vand.u32 %v852, 4294901760
        %1636 = vmatmul.f32.gmra.mxu0 %v1635
        %v1637 = vpop.f32.mrf.mxu0
        %v1638 = vadd.f32 %v1243, %v1637
        %v1639 = vand.u32 %v855, 4294901760
        %1640 = vmatmul.f32.gmra.mxu0 %v1639
        %v1641 = vpop.f32.mrf.mxu0
        %v1642 = vadd.f32 %v1251, %v1641
        %v1643 = vand.u32 %v858, 4294901760
        %1644 = vmatmul.f32.gmra.mxu0 %v1643
        %v1645 = vpop.f32.mrf.mxu0
        %v1646 = vadd.f32 %v1259, %v1645
        %v1647 = vand.u32 %v861, 4294901760
        %1648 = vmatmul.f32.gmra.mxu0 %v1647
        %v1649 = vpop.f32.mrf.mxu0
        %v1650 = vadd.f32 %v1267, %v1649
        %v1651 = vand.u32 %v864, 4294901760
        %1652 = vmatmul.f32.gmra.mxu0 %v1651
        %v1653 = vpop.f32.mrf.mxu0
        %v1654 = vadd.f32 %v1275, %v1653
        %v1655 = vand.u32 %v867, 4294901760
        %1656 = vmatmul.f32.gmra.mxu0 %v1655
        %v1657 = vpop.f32.mrf.mxu0
        %v1658 = vadd.f32 %v1283, %v1657
        %v1659 = vand.u32 %v870, 4294901760
        %1660 = vmatmul.f32.gmra.mxu0 %v1659
        %v1661 = vpop.f32.mrf.mxu0
        %v1662 = vadd.f32 %v1291, %v1661
        %v1663 = vand.u32 %v873, 4294901760
        %1664 = vmatmul.f32.gmra.mxu0 %v1663
        %v1665 = vpop.f32.mrf.mxu0
        %v1666 = vadd.f32 %v1299, %v1665
        %v1667 = vand.u32 %v876, 4294901760
        %1668 = vmatmul.f32.gmra.mxu0 %v1667
        %v1669 = vpop.f32.mrf.mxu0
        %v1670 = vadd.f32 %v1307, %v1669
        %v1671 = vand.u32 %v879, 4294901760
        %1672 = vmatmul.f32.gmra.mxu0 %v1671
        %v1673 = vpop.f32.mrf.mxu0
        %v1674 = vadd.f32 %v1315, %v1673
        %v1675 = vand.u32 %v882, 4294901760
        %1676 = vmatmul.f32.gmra.mxu0 %v1675
        %v1677 = vpop.f32.mrf.mxu0
        %v1678 = vadd.f32 %v1323, %v1677
        %v1679 = vand.u32 %v885, 4294901760
        %1680 = vmatmul.f32.gmra.mxu0 %v1679
        %v1681 = vpop.f32.mrf.mxu0
        %v1682 = vadd.f32 %v1331, %v1681
        %v1683 = vand.u32 %v888, 4294901760
        %1684 = vmatmul.f32.gmra.mxu0 %v1683
        %v1685 = vpop.f32.mrf.mxu0
        %v1686 = vadd.f32 %v1339, %v1685
        %v1687 = vand.u32 %v891, 4294901760
        %1688 = vmatmul.f32.gmra.mxu0 %v1687
        %v1689 = vpop.f32.mrf.mxu0
        %v1690 = vadd.f32 %v1347, %v1689
        %v1691 = vand.u32 %v894, 4294901760
        %1692 = vmatmul.f32.gmra.mxu0 %v1691
        %v1693 = vpop.f32.mrf.mxu0
        %v1694 = vadd.f32 %v1355, %v1693
        %v1695 = vand.u32 %v897, 4294901760
        %1696 = vmatmul.f32.gmra.mxu0 %v1695
        %v1697 = vpop.f32.mrf.mxu0
        %v1698 = vadd.f32 %v1363, %v1697
        %v1699 = vand.u32 %v900, 4294901760
        %1700 = vmatmul.f32.gmra.mxu0 %v1699
        %v1701 = vpop.f32.mrf.mxu0
        %v1702 = vadd.f32 %v1371, %v1701
        %v1703 = vand.u32 %v903, 4294901760
        %1704 = vmatmul.f32.gmra.mxu0 %v1703
        %v1705 = vpop.f32.mrf.mxu0
        %v1706 = vadd.f32 %v1379, %v1705
        %v1707 = vand.u32 %v906, 4294901760
        %1708 = vmatmul.f32.gmra.mxu0 %v1707
        %v1709 = vpop.f32.mrf.mxu0
        %v1710 = vadd.f32 %v1387, %v1709
        %v1711 = vand.u32 %v909, 4294901760
        %1712 = vmatmul.f32.gmra.mxu0 %v1711
        %v1713 = vpop.f32.mrf.mxu0
        %v1714 = vadd.f32 %v1395, %v1713
        %v1715 = vand.u32 %v912, 4294901760
        %1716 = vmatmul.f32.gmra.mxu0 %v1715
        %v1717 = vpop.f32.mrf.mxu0
        %v1718 = vadd.f32 %v1403, %v1717
        %v1719 = vand.u32 %v915, 4294901760
        %1720 = vmatmul.f32.gmra.mxu0 %v1719
        %v1721 = vpop.f32.mrf.mxu0
        %v1722 = vadd.f32 %v1411, %v1721
        %v1723 = vand.u32 %v918, 4294901760
        %1724 = vmatmul.f32.gmra.mxu0 %v1723
        %v1725 = vpop.f32.mrf.mxu0
        %v1726 = vadd.f32 %v1419, %v1725
        %v1727 = vand.u32 %v921, 4294901760
        %1728 = vmatmul.f32.gmra.mxu0 %v1727
        %v1729 = vpop.f32.mrf.mxu0
        %v1730 = vadd.f32 %v1427, %v1729
        %v1731 = vand.u32 %v924, 4294901760
        %1732 = vmatmul.f32.gmra.mxu0 %v1731
        %v1733 = vpop.f32.mrf.mxu0
        %v1734 = vadd.f32 %v1435, %v1733
        %v1735 = vand.u32 %v927, 4294901760
        %1736 = vmatmul.f32.gmra.mxu0 %v1735
        %v1737 = vpop.f32.mrf.mxu0
        %v1738 = vadd.f32 %v1443, %v1737
        %v1739 = vand.u32 %v930, 4294901760
        %1740 = vmatmul.f32.gmra.mxu0 %v1739
        %v1741 = vpop.f32.mrf.mxu0
        %v1742 = vadd.f32 %v1451, %v1741
        %v1743 = vand.u32 %v933, 4294901760
        %1744 = vmatmul.f32.gmra.mxu0 %v1743
        %v1745 = vpop.f32.mrf.mxu0
        %v1746 = vadd.f32 %v1459, %v1745
        %v1747 = vand.u32 %v936, 4294901760
        %1748 = vmatmul.f32.gmra.mxu0 %v1747
        %v1749 = vpop.f32.mrf.mxu0
        %v1750 = vadd.f32 %v1467, %v1749
        %1751 = vdwg.mxu0
        %1752 = vmatpush.msra.mxu0 0.0
        %1753 = vmatpush.msra.mxu0 0.0
        %1754 = vmatpush.msra.mxu0 0.0
        %1755 = vmatpush.msra.mxu0 0.0
        %1756 = vmatpush.msra.mxu0 0.0
        %1757 = vmatpush.msra.mxu0 0.0
        %1758 = vmatpush.msra.mxu0 0.0
        %1759 = vmatpush.msra.mxu0 0.0
        %1760 = vmatpush.msra.mxu0 0.0
        %1761 = vmatpush.msra.mxu0 0.0
        %1762 = vmatpush.msra.mxu0 0.0
        %1763 = vmatpush.msra.mxu0 0.0
        %1764 = vmatpush.msra.mxu0 0.0
        %1765 = vmatpush.msra.mxu0 0.0
        %v1766 = vand.u32 %v740, 4294901760
        %v1767 = vsub.f32 %v740, %v1766
        %1768 = vmatpush.msra.mxu0 %v1767
        %v1769 = vand.u32 %v739, 4294901760
        %v1770 = vsub.f32 %v739, %v1769
        %1771 = vmatpush.msra.mxu0 %v1770
        %v1772 = vand.u32 %v747, 4294901760
        %v1773 = vsub.f32 %v747, %v1772
        %1774 = vmatmul.f32.gmra.mxu0 %v1773
        %v1775 = vpop.f32.mrf.mxu0
        %v1776 = vadd.f32 %v1498, %v1775
        %v1777 = vand.u32 %v750, 4294901760
        %v1778 = vsub.f32 %v750, %v1777
        %1779 = vmatmul.f32.gmra.mxu0 %v1778
        %v1780 = vpop.f32.mrf.mxu0
        %v1781 = vadd.f32 %v1502, %v1780
        %v1782 = vand.u32 %v753, 4294901760
        %v1783 = vsub.f32 %v753, %v1782
        %1784 = vmatmul.f32.gmra.mxu0 %v1783
        %v1785 = vpop.f32.mrf.mxu0
        %v1786 = vadd.f32 %v1506, %v1785
        %v1787 = vand.u32 %v756, 4294901760
        %v1788 = vsub.f32 %v756, %v1787
        %1789 = vmatmul.f32.gmra.mxu0 %v1788
        %v1790 = vpop.f32.mrf.mxu0
        %v1791 = vadd.f32 %v1510, %v1790
        %v1792 = vand.u32 %v759, 4294901760
        %v1793 = vsub.f32 %v759, %v1792
        %1794 = vmatmul.f32.gmra.mxu0 %v1793
        %v1795 = vpop.f32.mrf.mxu0
        %v1796 = vadd.f32 %v1514, %v1795
        %v1797 = vand.u32 %v762, 4294901760
        %v1798 = vsub.f32 %v762, %v1797
        %1799 = vmatmul.f32.gmra.mxu0 %v1798
        %v1800 = vpop.f32.mrf.mxu0
        %v1801 = vadd.f32 %v1518, %v1800
        %v1802 = vand.u32 %v765, 4294901760
        %v1803 = vsub.f32 %v765, %v1802
        %1804 = vmatmul.f32.gmra.mxu0 %v1803
        %v1805 = vpop.f32.mrf.mxu0
        %v1806 = vadd.f32 %v1522, %v1805
        %v1807 = vand.u32 %v768, 4294901760
        %v1808 = vsub.f32 %v768, %v1807
        %1809 = vmatmul.f32.gmra.mxu0 %v1808
        %v1810 = vpop.f32.mrf.mxu0
        %v1811 = vadd.f32 %v1526, %v1810
        %v1812 = vand.u32 %v771, 4294901760
        %v1813 = vsub.f32 %v771, %v1812
        %1814 = vmatmul.f32.gmra.mxu0 %v1813
        %v1815 = vpop.f32.mrf.mxu0
        %v1816 = vadd.f32 %v1530, %v1815
        %v1817 = vand.u32 %v774, 4294901760
        %v1818 = vsub.f32 %v774, %v1817
        %1819 = vmatmul.f32.gmra.mxu0 %v1818
        %v1820 = vpop.f32.mrf.mxu0
        %v1821 = vadd.f32 %v1534, %v1820
        %v1822 = vand.u32 %v777, 4294901760
        %v1823 = vsub.f32 %v777, %v1822
        %1824 = vmatmul.f32.gmra.mxu0 %v1823
        %v1825 = vpop.f32.mrf.mxu0
        %v1826 = vadd.f32 %v1538, %v1825
        %v1827 = vand.u32 %v780, 4294901760
        %v1828 = vsub.f32 %v780, %v1827
        %1829 = vmatmul.f32.gmra.mxu0 %v1828
        %v1830 = vpop.f32.mrf.mxu0
        %v1831 = vadd.f32 %v1542, %v1830
        %v1832 = vand.u32 %v783, 4294901760
        %v1833 = vsub.f32 %v783, %v1832
        %1834 = vmatmul.f32.gmra.mxu0 %v1833
        %v1835 = vpop.f32.mrf.mxu0
        %v1836 = vadd.f32 %v1546, %v1835
        %v1837 = vand.u32 %v786, 4294901760
        %v1838 = vsub.f32 %v786, %v1837
        %1839 = vmatmul.f32.gmra.mxu0 %v1838
        %v1840 = vpop.f32.mrf.mxu0
        %v1841 = vadd.f32 %v1550, %v1840
        %v1842 = vand.u32 %v789, 4294901760
        %v1843 = vsub.f32 %v789, %v1842
        %1844 = vmatmul.f32.gmra.mxu0 %v1843
        %v1845 = vpop.f32.mrf.mxu0
        %v1846 = vadd.f32 %v1554, %v1845
        %v1847 = vand.u32 %v792, 4294901760
        %v1848 = vsub.f32 %v792, %v1847
        %1849 = vmatmul.f32.gmra.mxu0 %v1848
        %v1850 = vpop.f32.mrf.mxu0
        %v1851 = vadd.f32 %v1558, %v1850
        %v1852 = vand.u32 %v795, 4294901760
        %v1853 = vsub.f32 %v795, %v1852
        %1854 = vmatmul.f32.gmra.mxu0 %v1853
        %v1855 = vpop.f32.mrf.mxu0
        %v1856 = vadd.f32 %v1562, %v1855
        %v1857 = vand.u32 %v798, 4294901760
        %v1858 = vsub.f32 %v798, %v1857
        %1859 = vmatmul.f32.gmra.mxu0 %v1858
        %v1860 = vpop.f32.mrf.mxu0
        %v1861 = vadd.f32 %v1566, %v1860
        %v1862 = vand.u32 %v801, 4294901760
        %v1863 = vsub.f32 %v801, %v1862
        %1864 = vmatmul.f32.gmra.mxu0 %v1863
        %v1865 = vpop.f32.mrf.mxu0
        %v1866 = vadd.f32 %v1570, %v1865
        %v1867 = vand.u32 %v804, 4294901760
        %v1868 = vsub.f32 %v804, %v1867
        %1869 = vmatmul.f32.gmra.mxu0 %v1868
        %v1870 = vpop.f32.mrf.mxu0
        %v1871 = vadd.f32 %v1574, %v1870
        %v1872 = vand.u32 %v807, 4294901760
        %v1873 = vsub.f32 %v807, %v1872
        %1874 = vmatmul.f32.gmra.mxu0 %v1873
        %v1875 = vpop.f32.mrf.mxu0
        %v1876 = vadd.f32 %v1578, %v1875
        %v1877 = vand.u32 %v810, 4294901760
        %v1878 = vsub.f32 %v810, %v1877
        %1879 = vmatmul.f32.gmra.mxu0 %v1878
        %v1880 = vpop.f32.mrf.mxu0
        %v1881 = vadd.f32 %v1582, %v1880
        %v1882 = vand.u32 %v813, 4294901760
        %v1883 = vsub.f32 %v813, %v1882
        %1884 = vmatmul.f32.gmra.mxu0 %v1883
        %v1885 = vpop.f32.mrf.mxu0
        %v1886 = vadd.f32 %v1586, %v1885
        %v1887 = vand.u32 %v816, 4294901760
        %v1888 = vsub.f32 %v816, %v1887
        %1889 = vmatmul.f32.gmra.mxu0 %v1888
        %v1890 = vpop.f32.mrf.mxu0
        %v1891 = vadd.f32 %v1590, %v1890
        %v1892 = vand.u32 %v819, 4294901760
        %v1893 = vsub.f32 %v819, %v1892
        %1894 = vmatmul.f32.gmra.mxu0 %v1893
        %v1895 = vpop.f32.mrf.mxu0
        %v1896 = vadd.f32 %v1594, %v1895
        %v1897 = vand.u32 %v822, 4294901760
        %v1898 = vsub.f32 %v822, %v1897
        %1899 = vmatmul.f32.gmra.mxu0 %v1898
        %v1900 = vpop.f32.mrf.mxu0
        %v1901 = vadd.f32 %v1598, %v1900
        %v1902 = vand.u32 %v825, 4294901760
        %v1903 = vsub.f32 %v825, %v1902
        %1904 = vmatmul.f32.gmra.mxu0 %v1903
        %v1905 = vpop.f32.mrf.mxu0
        %v1906 = vadd.f32 %v1602, %v1905
        %v1907 = vand.u32 %v828, 4294901760
        %v1908 = vsub.f32 %v828, %v1907
        %1909 = vmatmul.f32.gmra.mxu0 %v1908
        %v1910 = vpop.f32.mrf.mxu0
        %v1911 = vadd.f32 %v1606, %v1910
        %v1912 = vand.u32 %v831, 4294901760
        %v1913 = vsub.f32 %v831, %v1912
        %1914 = vmatmul.f32.gmra.mxu0 %v1913
        %v1915 = vpop.f32.mrf.mxu0
        %v1916 = vadd.f32 %v1610, %v1915
        %v1917 = vand.u32 %v834, 4294901760
        %v1918 = vsub.f32 %v834, %v1917
        %1919 = vmatmul.f32.gmra.mxu0 %v1918
        %v1920 = vpop.f32.mrf.mxu0
        %v1921 = vadd.f32 %v1614, %v1920
        %v1922 = vand.u32 %v837, 4294901760
        %v1923 = vsub.f32 %v837, %v1922
        %1924 = vmatmul.f32.gmra.mxu0 %v1923
        %v1925 = vpop.f32.mrf.mxu0
        %v1926 = vadd.f32 %v1618, %v1925
        %v1927 = vand.u32 %v840, 4294901760
        %v1928 = vsub.f32 %v840, %v1927
        %1929 = vmatmul.f32.gmra.mxu0 %v1928
        %v1930 = vpop.f32.mrf.mxu0
        %v1931 = vadd.f32 %v1622, %v1930
        %v1932 = vand.u32 %v843, 4294901760
        %v1933 = vsub.f32 %v843, %v1932
        %1934 = vmatmul.f32.gmra.mxu0 %v1933
        %v1935 = vpop.f32.mrf.mxu0
        %v1936 = vadd.f32 %v1626, %v1935
        %v1937 = vand.u32 %v846, 4294901760
        %v1938 = vsub.f32 %v846, %v1937
        %1939 = vmatmul.f32.gmra.mxu0 %v1938
        %v1940 = vpop.f32.mrf.mxu0
        %v1941 = vadd.f32 %v1630, %v1940
        %v1942 = vand.u32 %v849, 4294901760
        %v1943 = vsub.f32 %v849, %v1942
        %1944 = vmatmul.f32.gmra.mxu0 %v1943
        %v1945 = vpop.f32.mrf.mxu0
        %v1946 = vadd.f32 %v1634, %v1945
        %v1947 = vand.u32 %v852, 4294901760
        %v1948 = vsub.f32 %v852, %v1947
        %1949 = vmatmul.f32.gmra.mxu0 %v1948
        %v1950 = vpop.f32.mrf.mxu0
        %v1951 = vadd.f32 %v1638, %v1950
        %v1952 = vand.u32 %v855, 4294901760
        %v1953 = vsub.f32 %v855, %v1952
        %1954 = vmatmul.f32.gmra.mxu0 %v1953
        %v1955 = vpop.f32.mrf.mxu0
        %v1956 = vadd.f32 %v1642, %v1955
        %v1957 = vand.u32 %v858, 4294901760
        %v1958 = vsub.f32 %v858, %v1957
        %1959 = vmatmul.f32.gmra.mxu0 %v1958
        %v1960 = vpop.f32.mrf.mxu0
        %v1961 = vadd.f32 %v1646, %v1960
        %v1962 = vand.u32 %v861, 4294901760
        %v1963 = vsub.f32 %v861, %v1962
        %1964 = vmatmul.f32.gmra.mxu0 %v1963
        %v1965 = vpop.f32.mrf.mxu0
        %v1966 = vadd.f32 %v1650, %v1965
        %v1967 = vand.u32 %v864, 4294901760
        %v1968 = vsub.f32 %v864, %v1967
        %1969 = vmatmul.f32.gmra.mxu0 %v1968
        %v1970 = vpop.f32.mrf.mxu0
        %v1971 = vadd.f32 %v1654, %v1970
        %v1972 = vand.u32 %v867, 4294901760
        %v1973 = vsub.f32 %v867, %v1972
        %1974 = vmatmul.f32.gmra.mxu0 %v1973
        %v1975 = vpop.f32.mrf.mxu0
        %v1976 = vadd.f32 %v1658, %v1975
        %v1977 = vand.u32 %v870, 4294901760
        %v1978 = vsub.f32 %v870, %v1977
        %1979 = vmatmul.f32.gmra.mxu0 %v1978
        %v1980 = vpop.f32.mrf.mxu0
        %v1981 = vadd.f32 %v1662, %v1980
        %v1982 = vand.u32 %v873, 4294901760
        %v1983 = vsub.f32 %v873, %v1982
        %1984 = vmatmul.f32.gmra.mxu0 %v1983
        %v1985 = vpop.f32.mrf.mxu0
        %v1986 = vadd.f32 %v1666, %v1985
        %v1987 = vand.u32 %v876, 4294901760
        %v1988 = vsub.f32 %v876, %v1987
        %1989 = vmatmul.f32.gmra.mxu0 %v1988
        %v1990 = vpop.f32.mrf.mxu0
        %v1991 = vadd.f32 %v1670, %v1990
        %v1992 = vand.u32 %v879, 4294901760
        %v1993 = vsub.f32 %v879, %v1992
        %1994 = vmatmul.f32.gmra.mxu0 %v1993
        %v1995 = vpop.f32.mrf.mxu0
        %v1996 = vadd.f32 %v1674, %v1995
        %v1997 = vand.u32 %v882, 4294901760
        %v1998 = vsub.f32 %v882, %v1997
        %1999 = vmatmul.f32.gmra.mxu0 %v1998
        %v2000 = vpop.f32.mrf.mxu0
        %v2001 = vadd.f32 %v1678, %v2000
        %v2002 = vand.u32 %v885, 4294901760
        %v2003 = vsub.f32 %v885, %v2002
        %2004 = vmatmul.f32.gmra.mxu0 %v2003
        %v2005 = vpop.f32.mrf.mxu0
        %v2006 = vadd.f32 %v1682, %v2005
        %v2007 = vand.u32 %v888, 4294901760
        %v2008 = vsub.f32 %v888, %v2007
        %2009 = vmatmul.f32.gmra.mxu0 %v2008
        %v2010 = vpop.f32.mrf.mxu0
        %v2011 = vadd.f32 %v1686, %v2010
        %v2012 = vand.u32 %v891, 4294901760
        %v2013 = vsub.f32 %v891, %v2012
        %2014 = vmatmul.f32.gmra.mxu0 %v2013
        %v2015 = vpop.f32.mrf.mxu0
        %v2016 = vadd.f32 %v1690, %v2015
        %v2017 = vand.u32 %v894, 4294901760
        %v2018 = vsub.f32 %v894, %v2017
        %2019 = vmatmul.f32.gmra.mxu0 %v2018
        %v2020 = vpop.f32.mrf.mxu0
        %v2021 = vadd.f32 %v1694, %v2020
        %v2022 = vand.u32 %v897, 4294901760
        %v2023 = vsub.f32 %v897, %v2022
        %2024 = vmatmul.f32.gmra.mxu0 %v2023
        %v2025 = vpop.f32.mrf.mxu0
        %v2026 = vadd.f32 %v1698, %v2025
        %v2027 = vand.u32 %v900, 4294901760
        %v2028 = vsub.f32 %v900, %v2027
        %2029 = vmatmul.f32.gmra.mxu0 %v2028
        %v2030 = vpop.f32.mrf.mxu0
        %v2031 = vadd.f32 %v1702, %v2030
        %v2032 = vand.u32 %v903, 4294901760
        %v2033 = vsub.f32 %v903, %v2032
        %2034 = vmatmul.f32.gmra.mxu0 %v2033
        %v2035 = vpop.f32.mrf.mxu0
        %v2036 = vadd.f32 %v1706, %v2035
        %v2037 = vand.u32 %v906, 4294901760
        %v2038 = vsub.f32 %v906, %v2037
        %2039 = vmatmul.f32.gmra.mxu0 %v2038
        %v2040 = vpop.f32.mrf.mxu0
        %v2041 = vadd.f32 %v1710, %v2040
        %v2042 = vand.u32 %v909, 4294901760
        %v2043 = vsub.f32 %v909, %v2042
        %2044 = vmatmul.f32.gmra.mxu0 %v2043
        %v2045 = vpop.f32.mrf.mxu0
        %v2046 = vadd.f32 %v1714, %v2045
        %v2047 = vand.u32 %v912, 4294901760
        %v2048 = vsub.f32 %v912, %v2047
        %2049 = vmatmul.f32.gmra.mxu0 %v2048
        %v2050 = vpop.f32.mrf.mxu0
        %v2051 = vadd.f32 %v1718, %v2050
        %v2052 = vand.u32 %v915, 4294901760
        %v2053 = vsub.f32 %v915, %v2052
        %2054 = vmatmul.f32.gmra.mxu0 %v2053
        %v2055 = vpop.f32.mrf.mxu0
        %v2056 = vadd.f32 %v1722, %v2055
        %v2057 = vand.u32 %v918, 4294901760
        %v2058 = vsub.f32 %v918, %v2057
        %2059 = vmatmul.f32.gmra.mxu0 %v2058
        %v2060 = vpop.f32.mrf.mxu0
        %v2061 = vadd.f32 %v1726, %v2060
        %v2062 = vand.u32 %v921, 4294901760
        %v2063 = vsub.f32 %v921, %v2062
        %2064 = vmatmul.f32.gmra.mxu0 %v2063
        %v2065 = vpop.f32.mrf.mxu0
        %v2066 = vadd.f32 %v1730, %v2065
        %v2067 = vand.u32 %v924, 4294901760
        %v2068 = vsub.f32 %v924, %v2067
        %2069 = vmatmul.f32.gmra.mxu0 %v2068
        %v2070 = vpop.f32.mrf.mxu0
        %v2071 = vadd.f32 %v1734, %v2070
        %v2072 = vand.u32 %v927, 4294901760
        %v2073 = vsub.f32 %v927, %v2072
        %2074 = vmatmul.f32.gmra.mxu0 %v2073
        %v2075 = vpop.f32.mrf.mxu0
        %v2076 = vadd.f32 %v1738, %v2075
        %v2077 = vand.u32 %v930, 4294901760
        %v2078 = vsub.f32 %v930, %v2077
        %2079 = vmatmul.f32.gmra.mxu0 %v2078
        %v2080 = vpop.f32.mrf.mxu0
        %v2081 = vadd.f32 %v1742, %v2080
        %v2082 = vand.u32 %v933, 4294901760
        %v2083 = vsub.f32 %v933, %v2082
        %2084 = vmatmul.f32.gmra.mxu0 %v2083
        %v2085 = vpop.f32.mrf.mxu0
        %v2086 = vadd.f32 %v1746, %v2085
        %v2087 = vand.u32 %v936, 4294901760
        %v2088 = vsub.f32 %v936, %v2087
        %2089 = vmatmul.f32.gmra.mxu0 %v2088
        %v2090 = vpop.f32.mrf.mxu0
        %v2091 = vadd.f32 %v1750, %v2090
        %2092 = vdwg.mxu0
        %2093 = vmatpush.msra.mxu0 0.0
        %2094 = vmatpush.msra.mxu0 0.0
        %2095 = vmatpush.msra.mxu0 0.0
        %2096 = vmatpush.msra.mxu0 0.0
        %2097 = vmatpush.msra.mxu0 0.0
        %2098 = vmatpush.msra.mxu0 0.0
        %2099 = vmatpush.msra.mxu0 0.0
        %2100 = vmatpush.msra.mxu0 0.0
        %2101 = vmatpush.msra.mxu0 0.0
        %2102 = vmatpush.msra.mxu0 0.0
        %2103 = vmatpush.msra.mxu0 0.0
        %2104 = vmatpush.msra.mxu0 0.0
        %2105 = vmatpush.msra.mxu0 0.0
        %2106 = vmatpush.msra.mxu0 0.0
        %v2107 = vand.u32 %v740, 4294901760
        %2108 = vmatpush.msra.mxu0 %v2107
        %v2109 = vand.u32 %v739, 4294901760
        %2110 = vmatpush.msra.mxu0 %v2109
        %v2111 = vand.u32 %v747, 4294901760
        %v2112 = vsub.f32 %v747, %v2111
        %v2113 = vand.u32 %v2112, 4294901760
        %2114 = vmatmul.f32.gmra.mxu0 %v2113
        %v2115 = vpop.f32.mrf.mxu0
        %v2116 = vadd.f32 %v1776, %v2115
        %v2117 = vand.u32 %v750, 4294901760
        %v2118 = vsub.f32 %v750, %v2117
        %v2119 = vand.u32 %v2118, 4294901760
        %2120 = vmatmul.f32.gmra.mxu0 %v2119
        %v2121 = vpop.f32.mrf.mxu0
        %v2122 = vadd.f32 %v1781, %v2121
        %v2123 = vand.u32 %v753, 4294901760
        %v2124 = vsub.f32 %v753, %v2123
        %v2125 = vand.u32 %v2124, 4294901760
        %2126 = vmatmul.f32.gmra.mxu0 %v2125
        %v2127 = vpop.f32.mrf.mxu0
        %v2128 = vadd.f32 %v1786, %v2127
        %v2129 = vand.u32 %v756, 4294901760
        %v2130 = vsub.f32 %v756, %v2129
        %v2131 = vand.u32 %v2130, 4294901760
        %2132 = vmatmul.f32.gmra.mxu0 %v2131
        %v2133 = vpop.f32.mrf.mxu0
        %v2134 = vadd.f32 %v1791, %v2133
        %v2135 = vand.u32 %v759, 4294901760
        %v2136 = vsub.f32 %v759, %v2135
        %v2137 = vand.u32 %v2136, 4294901760
        %2138 = vmatmul.f32.gmra.mxu0 %v2137
        %v2139 = vpop.f32.mrf.mxu0
        %v2140 = vadd.f32 %v1796, %v2139
        %v2141 = vand.u32 %v762, 4294901760
        %v2142 = vsub.f32 %v762, %v2141
        %v2143 = vand.u32 %v2142, 4294901760
        %2144 = vmatmul.f32.gmra.mxu0 %v2143
        %v2145 = vpop.f32.mrf.mxu0
        %v2146 = vadd.f32 %v1801, %v2145
        %v2147 = vand.u32 %v765, 4294901760
        %v2148 = vsub.f32 %v765, %v2147
        %v2149 = vand.u32 %v2148, 4294901760
        %2150 = vmatmul.f32.gmra.mxu0 %v2149
        %v2151 = vpop.f32.mrf.mxu0
        %v2152 = vadd.f32 %v1806, %v2151
        %v2153 = vand.u32 %v768, 4294901760
        %v2154 = vsub.f32 %v768, %v2153
        %v2155 = vand.u32 %v2154, 4294901760
        %2156 = vmatmul.f32.gmra.mxu0 %v2155
        %v2157 = vpop.f32.mrf.mxu0
        %v2158 = vadd.f32 %v1811, %v2157
        %v2159 = vand.u32 %v771, 4294901760
        %v2160 = vsub.f32 %v771, %v2159
        %v2161 = vand.u32 %v2160, 4294901760
        %2162 = vmatmul.f32.gmra.mxu0 %v2161
        %v2163 = vpop.f32.mrf.mxu0
        %v2164 = vadd.f32 %v1816, %v2163
        %v2165 = vand.u32 %v774, 4294901760
        %v2166 = vsub.f32 %v774, %v2165
        %v2167 = vand.u32 %v2166, 4294901760
        %2168 = vmatmul.f32.gmra.mxu0 %v2167
        %v2169 = vpop.f32.mrf.mxu0
        %v2170 = vadd.f32 %v1821, %v2169
        %v2171 = vand.u32 %v777, 4294901760
        %v2172 = vsub.f32 %v777, %v2171
        %v2173 = vand.u32 %v2172, 4294901760
        %2174 = vmatmul.f32.gmra.mxu0 %v2173
        %v2175 = vpop.f32.mrf.mxu0
        %v2176 = vadd.f32 %v1826, %v2175
        %v2177 = vand.u32 %v780, 4294901760
        %v2178 = vsub.f32 %v780, %v2177
        %v2179 = vand.u32 %v2178, 4294901760
        %2180 = vmatmul.f32.gmra.mxu0 %v2179
        %v2181 = vpop.f32.mrf.mxu0
        %v2182 = vadd.f32 %v1831, %v2181
        %v2183 = vand.u32 %v783, 4294901760
        %v2184 = vsub.f32 %v783, %v2183
        %v2185 = vand.u32 %v2184, 4294901760
        %2186 = vmatmul.f32.gmra.mxu0 %v2185
        %v2187 = vpop.f32.mrf.mxu0
        %v2188 = vadd.f32 %v1836, %v2187
        %v2189 = vand.u32 %v786, 4294901760
        %v2190 = vsub.f32 %v786, %v2189
        %v2191 = vand.u32 %v2190, 4294901760
        %2192 = vmatmul.f32.gmra.mxu0 %v2191
        %v2193 = vpop.f32.mrf.mxu0
        %v2194 = vadd.f32 %v1841, %v2193
        %v2195 = vand.u32 %v789, 4294901760
        %v2196 = vsub.f32 %v789, %v2195
        %v2197 = vand.u32 %v2196, 4294901760
        %2198 = vmatmul.f32.gmra.mxu0 %v2197
        %v2199 = vpop.f32.mrf.mxu0
        %v2200 = vadd.f32 %v1846, %v2199
        %v2201 = vand.u32 %v792, 4294901760
        %v2202 = vsub.f32 %v792, %v2201
        %v2203 = vand.u32 %v2202, 4294901760
        %2204 = vmatmul.f32.gmra.mxu0 %v2203
        %v2205 = vpop.f32.mrf.mxu0
        %v2206 = vadd.f32 %v1851, %v2205
        %v2207 = vand.u32 %v795, 4294901760
        %v2208 = vsub.f32 %v795, %v2207
        %v2209 = vand.u32 %v2208, 4294901760
        %2210 = vmatmul.f32.gmra.mxu0 %v2209
        %v2211 = vpop.f32.mrf.mxu0
        %v2212 = vadd.f32 %v1856, %v2211
        %v2213 = vand.u32 %v798, 4294901760
        %v2214 = vsub.f32 %v798, %v2213
        %v2215 = vand.u32 %v2214, 4294901760
        %2216 = vmatmul.f32.gmra.mxu0 %v2215
        %v2217 = vpop.f32.mrf.mxu0
        %v2218 = vadd.f32 %v1861, %v2217
        %v2219 = vand.u32 %v801, 4294901760
        %v2220 = vsub.f32 %v801, %v2219
        %v2221 = vand.u32 %v2220, 4294901760
        %2222 = vmatmul.f32.gmra.mxu0 %v2221
        %v2223 = vpop.f32.mrf.mxu0
        %v2224 = vadd.f32 %v1866, %v2223
        %v2225 = vand.u32 %v804, 4294901760
        %v2226 = vsub.f32 %v804, %v2225
        %v2227 = vand.u32 %v2226, 4294901760
        %2228 = vmatmul.f32.gmra.mxu0 %v2227
        %v2229 = vpop.f32.mrf.mxu0
        %v2230 = vadd.f32 %v1871, %v2229
        %v2231 = vand.u32 %v807, 4294901760
        %v2232 = vsub.f32 %v807, %v2231
        %v2233 = vand.u32 %v2232, 4294901760
        %2234 = vmatmul.f32.gmra.mxu0 %v2233
        %v2235 = vpop.f32.mrf.mxu0
        %v2236 = vadd.f32 %v1876, %v2235
        %v2237 = vand.u32 %v810, 4294901760
        %v2238 = vsub.f32 %v810, %v2237
        %v2239 = vand.u32 %v2238, 4294901760
        %2240 = vmatmul.f32.gmra.mxu0 %v2239
        %v2241 = vpop.f32.mrf.mxu0
        %v2242 = vadd.f32 %v1881, %v2241
        %v2243 = vand.u32 %v813, 4294901760
        %v2244 = vsub.f32 %v813, %v2243
        %v2245 = vand.u32 %v2244, 4294901760
        %2246 = vmatmul.f32.gmra.mxu0 %v2245
        %v2247 = vpop.f32.mrf.mxu0
        %v2248 = vadd.f32 %v1886, %v2247
        %v2249 = vand.u32 %v816, 4294901760
        %v2250 = vsub.f32 %v816, %v2249
        %v2251 = vand.u32 %v2250, 4294901760
        %2252 = vmatmul.f32.gmra.mxu0 %v2251
        %v2253 = vpop.f32.mrf.mxu0
        %v2254 = vadd.f32 %v1891, %v2253
        %v2255 = vand.u32 %v819, 4294901760
        %v2256 = vsub.f32 %v819, %v2255
        %v2257 = vand.u32 %v2256, 4294901760
        %2258 = vmatmul.f32.gmra.mxu0 %v2257
        %v2259 = vpop.f32.mrf.mxu0
        %v2260 = vadd.f32 %v1896, %v2259
        %v2261 = vand.u32 %v822, 4294901760
        %v2262 = vsub.f32 %v822, %v2261
        %v2263 = vand.u32 %v2262, 4294901760
        %2264 = vmatmul.f32.gmra.mxu0 %v2263
        %v2265 = vpop.f32.mrf.mxu0
        %v2266 = vadd.f32 %v1901, %v2265
        %v2267 = vand.u32 %v825, 4294901760
        %v2268 = vsub.f32 %v825, %v2267
        %v2269 = vand.u32 %v2268, 4294901760
        %2270 = vmatmul.f32.gmra.mxu0 %v2269
        %v2271 = vpop.f32.mrf.mxu0
        %v2272 = vadd.f32 %v1906, %v2271
        %v2273 = vand.u32 %v828, 4294901760
        %v2274 = vsub.f32 %v828, %v2273
        %v2275 = vand.u32 %v2274, 4294901760
        %2276 = vmatmul.f32.gmra.mxu0 %v2275
        %v2277 = vpop.f32.mrf.mxu0
        %v2278 = vadd.f32 %v1911, %v2277
        %v2279 = vand.u32 %v831, 4294901760
        %v2280 = vsub.f32 %v831, %v2279
        %v2281 = vand.u32 %v2280, 4294901760
        %2282 = vmatmul.f32.gmra.mxu0 %v2281
        %v2283 = vpop.f32.mrf.mxu0
        %v2284 = vadd.f32 %v1916, %v2283
        %v2285 = vand.u32 %v834, 4294901760
        %v2286 = vsub.f32 %v834, %v2285
        %v2287 = vand.u32 %v2286, 4294901760
        %2288 = vmatmul.f32.gmra.mxu0 %v2287
        %v2289 = vpop.f32.mrf.mxu0
        %v2290 = vadd.f32 %v1921, %v2289
        %v2291 = vand.u32 %v837, 4294901760
        %v2292 = vsub.f32 %v837, %v2291
        %v2293 = vand.u32 %v2292, 4294901760
        %2294 = vmatmul.f32.gmra.mxu0 %v2293
        %v2295 = vpop.f32.mrf.mxu0
        %v2296 = vadd.f32 %v1926, %v2295
        %v2297 = vand.u32 %v840, 4294901760
        %v2298 = vsub.f32 %v840, %v2297
        %v2299 = vand.u32 %v2298, 4294901760
        %2300 = vmatmul.f32.gmra.mxu0 %v2299
        %v2301 = vpop.f32.mrf.mxu0
        %v2302 = vadd.f32 %v1931, %v2301
        %v2303 = vand.u32 %v843, 4294901760
        %v2304 = vsub.f32 %v843, %v2303
        %v2305 = vand.u32 %v2304, 4294901760
        %2306 = vmatmul.f32.gmra.mxu0 %v2305
        %v2307 = vpop.f32.mrf.mxu0
        %v2308 = vadd.f32 %v1936, %v2307
        %v2309 = vand.u32 %v846, 4294901760
        %v2310 = vsub.f32 %v846, %v2309
        %v2311 = vand.u32 %v2310, 4294901760
        %2312 = vmatmul.f32.gmra.mxu0 %v2311
        %v2313 = vpop.f32.mrf.mxu0
        %v2314 = vadd.f32 %v1941, %v2313
        %v2315 = vand.u32 %v849, 4294901760
        %v2316 = vsub.f32 %v849, %v2315
        %v2317 = vand.u32 %v2316, 4294901760
        %2318 = vmatmul.f32.gmra.mxu0 %v2317
        %v2319 = vpop.f32.mrf.mxu0
        %v2320 = vadd.f32 %v1946, %v2319
        %v2321 = vand.u32 %v852, 4294901760
        %v2322 = vsub.f32 %v852, %v2321
        %v2323 = vand.u32 %v2322, 4294901760
        %2324 = vmatmul.f32.gmra.mxu0 %v2323
        %v2325 = vpop.f32.mrf.mxu0
        %v2326 = vadd.f32 %v1951, %v2325
        %v2327 = vand.u32 %v855, 4294901760
        %v2328 = vsub.f32 %v855, %v2327
        %v2329 = vand.u32 %v2328, 4294901760
        %2330 = vmatmul.f32.gmra.mxu0 %v2329
        %v2331 = vpop.f32.mrf.mxu0
        %v2332 = vadd.f32 %v1956, %v2331
        %v2333 = vand.u32 %v858, 4294901760
        %v2334 = vsub.f32 %v858, %v2333
        %v2335 = vand.u32 %v2334, 4294901760
        %2336 = vmatmul.f32.gmra.mxu0 %v2335
        %v2337 = vpop.f32.mrf.mxu0
        %v2338 = vadd.f32 %v1961, %v2337
        %v2339 = vand.u32 %v861, 4294901760
        %v2340 = vsub.f32 %v861, %v2339
        %v2341 = vand.u32 %v2340, 4294901760
        %2342 = vmatmul.f32.gmra.mxu0 %v2341
        %v2343 = vpop.f32.mrf.mxu0
        %v2344 = vadd.f32 %v1966, %v2343
        %v2345 = vand.u32 %v864, 4294901760
        %v2346 = vsub.f32 %v864, %v2345
        %v2347 = vand.u32 %v2346, 4294901760
        %2348 = vmatmul.f32.gmra.mxu0 %v2347
        %v2349 = vpop.f32.mrf.mxu0
        %v2350 = vadd.f32 %v1971, %v2349
        %v2351 = vand.u32 %v867, 4294901760
        %v2352 = vsub.f32 %v867, %v2351
        %v2353 = vand.u32 %v2352, 4294901760
        %2354 = vmatmul.f32.gmra.mxu0 %v2353
        %v2355 = vpop.f32.mrf.mxu0
        %v2356 = vadd.f32 %v1976, %v2355
        %v2357 = vand.u32 %v870, 4294901760
        %v2358 = vsub.f32 %v870, %v2357
        %v2359 = vand.u32 %v2358, 4294901760
        %2360 = vmatmul.f32.gmra.mxu0 %v2359
        %v2361 = vpop.f32.mrf.mxu0
        %v2362 = vadd.f32 %v1981, %v2361
        %v2363 = vand.u32 %v873, 4294901760
        %v2364 = vsub.f32 %v873, %v2363
        %v2365 = vand.u32 %v2364, 4294901760
        %2366 = vmatmul.f32.gmra.mxu0 %v2365
        %v2367 = vpop.f32.mrf.mxu0
        %v2368 = vadd.f32 %v1986, %v2367
        %v2369 = vand.u32 %v876, 4294901760
        %v2370 = vsub.f32 %v876, %v2369
        %v2371 = vand.u32 %v2370, 4294901760
        %2372 = vmatmul.f32.gmra.mxu0 %v2371
        %v2373 = vpop.f32.mrf.mxu0
        %v2374 = vadd.f32 %v1991, %v2373
        %v2375 = vand.u32 %v879, 4294901760
        %v2376 = vsub.f32 %v879, %v2375
        %v2377 = vand.u32 %v2376, 4294901760
        %2378 = vmatmul.f32.gmra.mxu0 %v2377
        %v2379 = vpop.f32.mrf.mxu0
        %v2380 = vadd.f32 %v1996, %v2379
        %v2381 = vand.u32 %v882, 4294901760
        %v2382 = vsub.f32 %v882, %v2381
        %v2383 = vand.u32 %v2382, 4294901760
        %2384 = vmatmul.f32.gmra.mxu0 %v2383
        %v2385 = vpop.f32.mrf.mxu0
        %v2386 = vadd.f32 %v2001, %v2385
        %v2387 = vand.u32 %v885, 4294901760
        %v2388 = vsub.f32 %v885, %v2387
        %v2389 = vand.u32 %v2388, 4294901760
        %2390 = vmatmul.f32.gmra.mxu0 %v2389
        %v2391 = vpop.f32.mrf.mxu0
        %v2392 = vadd.f32 %v2006, %v2391
        %v2393 = vand.u32 %v888, 4294901760
        %v2394 = vsub.f32 %v888, %v2393
        %v2395 = vand.u32 %v2394, 4294901760
        %2396 = vmatmul.f32.gmra.mxu0 %v2395
        %v2397 = vpop.f32.mrf.mxu0
        %v2398 = vadd.f32 %v2011, %v2397
        %v2399 = vand.u32 %v891, 4294901760
        %v2400 = vsub.f32 %v891, %v2399
        %v2401 = vand.u32 %v2400, 4294901760
        %2402 = vmatmul.f32.gmra.mxu0 %v2401
        %v2403 = vpop.f32.mrf.mxu0
        %v2404 = vadd.f32 %v2016, %v2403
        %v2405 = vand.u32 %v894, 4294901760
        %v2406 = vsub.f32 %v894, %v2405
        %v2407 = vand.u32 %v2406, 4294901760
        %2408 = vmatmul.f32.gmra.mxu0 %v2407
        %v2409 = vpop.f32.mrf.mxu0
        %v2410 = vadd.f32 %v2021, %v2409
        %v2411 = vand.u32 %v897, 4294901760
        %v2412 = vsub.f32 %v897, %v2411
        %v2413 = vand.u32 %v2412, 4294901760
        %2414 = vmatmul.f32.gmra.mxu0 %v2413
        %v2415 = vpop.f32.mrf.mxu0
        %v2416 = vadd.f32 %v2026, %v2415
        %v2417 = vand.u32 %v900, 4294901760
        %v2418 = vsub.f32 %v900, %v2417
        %v2419 = vand.u32 %v2418, 4294901760
        %2420 = vmatmul.f32.gmra.mxu0 %v2419
        %v2421 = vpop.f32.mrf.mxu0
        %v2422 = vadd.f32 %v2031, %v2421
        %v2423 = vand.u32 %v903, 4294901760
        %v2424 = vsub.f32 %v903, %v2423
        %v2425 = vand.u32 %v2424, 4294901760
        %2426 = vmatmul.f32.gmra.mxu0 %v2425
        %v2427 = vpop.f32.mrf.mxu0
        %v2428 = vadd.f32 %v2036, %v2427
        %v2429 = vand.u32 %v906, 4294901760
        %v2430 = vsub.f32 %v906, %v2429
        %v2431 = vand.u32 %v2430, 4294901760
        %2432 = vmatmul.f32.gmra.mxu0 %v2431
        %v2433 = vpop.f32.mrf.mxu0
        %v2434 = vadd.f32 %v2041, %v2433
        %v2435 = vand.u32 %v909, 4294901760
        %v2436 = vsub.f32 %v909, %v2435
        %v2437 = vand.u32 %v2436, 4294901760
        %2438 = vmatmul.f32.gmra.mxu0 %v2437
        %v2439 = vpop.f32.mrf.mxu0
        %v2440 = vadd.f32 %v2046, %v2439
        %v2441 = vand.u32 %v912, 4294901760
        %v2442 = vsub.f32 %v912, %v2441
        %v2443 = vand.u32 %v2442, 4294901760
        %2444 = vmatmul.f32.gmra.mxu0 %v2443
        %v2445 = vpop.f32.mrf.mxu0
        %v2446 = vadd.f32 %v2051, %v2445
        %v2447 = vand.u32 %v915, 4294901760
        %v2448 = vsub.f32 %v915, %v2447
        %v2449 = vand.u32 %v2448, 4294901760
        %2450 = vmatmul.f32.gmra.mxu0 %v2449
        %v2451 = vpop.f32.mrf.mxu0
        %v2452 = vadd.f32 %v2056, %v2451
        %v2453 = vand.u32 %v918, 4294901760
        %v2454 = vsub.f32 %v918, %v2453
        %v2455 = vand.u32 %v2454, 4294901760
        %2456 = vmatmul.f32.gmra.mxu0 %v2455
        %v2457 = vpop.f32.mrf.mxu0
        %v2458 = vadd.f32 %v2061, %v2457
        %v2459 = vand.u32 %v921, 4294901760
        %v2460 = vsub.f32 %v921, %v2459
        %v2461 = vand.u32 %v2460, 4294901760
        %2462 = vmatmul.f32.gmra.mxu0 %v2461
        %v2463 = vpop.f32.mrf.mxu0
        %v2464 = vadd.f32 %v2066, %v2463
        %v2465 = vand.u32 %v924, 4294901760
        %v2466 = vsub.f32 %v924, %v2465
        %v2467 = vand.u32 %v2466, 4294901760
        %2468 = vmatmul.f32.gmra.mxu0 %v2467
        %v2469 = vpop.f32.mrf.mxu0
        %v2470 = vadd.f32 %v2071, %v2469
        %v2471 = vand.u32 %v927, 4294901760
        %v2472 = vsub.f32 %v927, %v2471
        %v2473 = vand.u32 %v2472, 4294901760
        %2474 = vmatmul.f32.gmra.mxu0 %v2473
        %v2475 = vpop.f32.mrf.mxu0
        %v2476 = vadd.f32 %v2076, %v2475
        %v2477 = vand.u32 %v930, 4294901760
        %v2478 = vsub.f32 %v930, %v2477
        %v2479 = vand.u32 %v2478, 4294901760
        %2480 = vmatmul.f32.gmra.mxu0 %v2479
        %v2481 = vpop.f32.mrf.mxu0
        %v2482 = vadd.f32 %v2081, %v2481
        %v2483 = vand.u32 %v933, 4294901760
        %v2484 = vsub.f32 %v933, %v2483
        %v2485 = vand.u32 %v2484, 4294901760
        %2486 = vmatmul.f32.gmra.mxu0 %v2485
        %v2487 = vpop.f32.mrf.mxu0
        %v2488 = vadd.f32 %v2086, %v2487
        %v2489 = vand.u32 %v936, 4294901760
        %v2490 = vsub.f32 %v936, %v2489
        %v2491 = vand.u32 %v2490, 4294901760
        %2492 = vmatmul.f32.gmra.mxu0 %v2491
        %v2493 = vpop.f32.mrf.mxu0
        %v2494 = vadd.f32 %v2091, %v2493
        %2495 = vdwg.mxu0
        %2496 = vmatpush.msra.mxu0 0.0
        %2497 = vmatpush.msra.mxu0 0.0
        %2498 = vmatpush.msra.mxu0 0.0
        %2499 = vmatpush.msra.mxu0 0.0
        %2500 = vmatpush.msra.mxu0 0.0
        %2501 = vmatpush.msra.mxu0 0.0
        %2502 = vmatpush.msra.mxu0 0.0
        %2503 = vmatpush.msra.mxu0 0.0
        %2504 = vmatpush.msra.mxu0 0.0
        %2505 = vmatpush.msra.mxu0 0.0
        %2506 = vmatpush.msra.mxu0 0.0
        %2507 = vmatpush.msra.mxu0 0.0
        %2508 = vmatpush.msra.mxu0 0.0
        %2509 = vmatpush.msra.mxu0 0.0
        %v2510 = vand.u32 %v740, 4294901760
        %v2511 = vsub.f32 %v740, %v2510
        %v2512 = vand.u32 %v2511, 4294901760
        %2513 = vmatpush.msra.mxu0 %v2512
        %v2514 = vand.u32 %v739, 4294901760
        %v2515 = vsub.f32 %v739, %v2514
        %v2516 = vand.u32 %v2515, 4294901760
        %2517 = vmatpush.msra.mxu0 %v2516
        %v2518 = vand.u32 %v747, 4294901760
        %2519 = vmatmul.f32.gmra.mxu0 %v2518
        %v2520 = vpop.f32.mrf.mxu0
        %v2521 = vadd.f32 %v2116, %v2520
        %v2522 = vand.u32 %v750, 4294901760
        %2523 = vmatmul.f32.gmra.mxu0 %v2522
        %v2524 = vpop.f32.mrf.mxu0
        %v2525 = vadd.f32 %v2122, %v2524
        %v2526 = vand.u32 %v753, 4294901760
        %2527 = vmatmul.f32.gmra.mxu0 %v2526
        %v2528 = vpop.f32.mrf.mxu0
        %v2529 = vadd.f32 %v2128, %v2528
        %v2530 = vand.u32 %v756, 4294901760
        %2531 = vmatmul.f32.gmra.mxu0 %v2530
        %v2532 = vpop.f32.mrf.mxu0
        %v2533 = vadd.f32 %v2134, %v2532
        %v2534 = vand.u32 %v759, 4294901760
        %2535 = vmatmul.f32.gmra.mxu0 %v2534
        %v2536 = vpop.f32.mrf.mxu0
        %v2537 = vadd.f32 %v2140, %v2536
        %v2538 = vand.u32 %v762, 4294901760
        %2539 = vmatmul.f32.gmra.mxu0 %v2538
        %v2540 = vpop.f32.mrf.mxu0
        %v2541 = vadd.f32 %v2146, %v2540
        %v2542 = vand.u32 %v765, 4294901760
        %2543 = vmatmul.f32.gmra.mxu0 %v2542
        %v2544 = vpop.f32.mrf.mxu0
        %v2545 = vadd.f32 %v2152, %v2544
        %v2546 = vand.u32 %v768, 4294901760
        %2547 = vmatmul.f32.gmra.mxu0 %v2546
        %v2548 = vpop.f32.mrf.mxu0
        %v2549 = vadd.f32 %v2158, %v2548
        %v2550 = vand.u32 %v771, 4294901760
        %2551 = vmatmul.f32.gmra.mxu0 %v2550
        %v2552 = vpop.f32.mrf.mxu0
        %v2553 = vadd.f32 %v2164, %v2552
        %v2554 = vand.u32 %v774, 4294901760
        %2555 = vmatmul.f32.gmra.mxu0 %v2554
        %v2556 = vpop.f32.mrf.mxu0
        %v2557 = vadd.f32 %v2170, %v2556
        %v2558 = vand.u32 %v777, 4294901760
        %2559 = vmatmul.f32.gmra.mxu0 %v2558
        %v2560 = vpop.f32.mrf.mxu0
        %v2561 = vadd.f32 %v2176, %v2560
        %v2562 = vand.u32 %v780, 4294901760
        %2563 = vmatmul.f32.gmra.mxu0 %v2562
        %v2564 = vpop.f32.mrf.mxu0
        %v2565 = vadd.f32 %v2182, %v2564
        %v2566 = vand.u32 %v783, 4294901760
        %2567 = vmatmul.f32.gmra.mxu0 %v2566
        %v2568 = vpop.f32.mrf.mxu0
        %v2569 = vadd.f32 %v2188, %v2568
        %v2570 = vand.u32 %v786, 4294901760
        %2571 = vmatmul.f32.gmra.mxu0 %v2570
        %v2572 = vpop.f32.mrf.mxu0
        %v2573 = vadd.f32 %v2194, %v2572
        %v2574 = vand.u32 %v789, 4294901760
        %2575 = vmatmul.f32.gmra.mxu0 %v2574
        %v2576 = vpop.f32.mrf.mxu0
        %v2577 = vadd.f32 %v2200, %v2576
        %v2578 = vand.u32 %v792, 4294901760
        %2579 = vmatmul.f32.gmra.mxu0 %v2578
        %v2580 = vpop.f32.mrf.mxu0
        %v2581 = vadd.f32 %v2206, %v2580
        %v2582 = vand.u32 %v795, 4294901760
        %2583 = vmatmul.f32.gmra.mxu0 %v2582
        %v2584 = vpop.f32.mrf.mxu0
        %v2585 = vadd.f32 %v2212, %v2584
        %v2586 = vand.u32 %v798, 4294901760
        %2587 = vmatmul.f32.gmra.mxu0 %v2586
        %v2588 = vpop.f32.mrf.mxu0
        %v2589 = vadd.f32 %v2218, %v2588
        %v2590 = vand.u32 %v801, 4294901760
        %2591 = vmatmul.f32.gmra.mxu0 %v2590
        %v2592 = vpop.f32.mrf.mxu0
        %v2593 = vadd.f32 %v2224, %v2592
        %v2594 = vand.u32 %v804, 4294901760
        %2595 = vmatmul.f32.gmra.mxu0 %v2594
        %v2596 = vpop.f32.mrf.mxu0
        %v2597 = vadd.f32 %v2230, %v2596
        %v2598 = vand.u32 %v807, 4294901760
        %2599 = vmatmul.f32.gmra.mxu0 %v2598
        %v2600 = vpop.f32.mrf.mxu0
        %v2601 = vadd.f32 %v2236, %v2600
        %v2602 = vand.u32 %v810, 4294901760
        %2603 = vmatmul.f32.gmra.mxu0 %v2602
        %v2604 = vpop.f32.mrf.mxu0
        %v2605 = vadd.f32 %v2242, %v2604
        %v2606 = vand.u32 %v813, 4294901760
        %2607 = vmatmul.f32.gmra.mxu0 %v2606
        %v2608 = vpop.f32.mrf.mxu0
        %v2609 = vadd.f32 %v2248, %v2608
        %v2610 = vand.u32 %v816, 4294901760
        %2611 = vmatmul.f32.gmra.mxu0 %v2610
        %v2612 = vpop.f32.mrf.mxu0
        %v2613 = vadd.f32 %v2254, %v2612
        %v2614 = vand.u32 %v819, 4294901760
        %2615 = vmatmul.f32.gmra.mxu0 %v2614
        %v2616 = vpop.f32.mrf.mxu0
        %v2617 = vadd.f32 %v2260, %v2616
        %v2618 = vand.u32 %v822, 4294901760
        %2619 = vmatmul.f32.gmra.mxu0 %v2618
        %v2620 = vpop.f32.mrf.mxu0
        %v2621 = vadd.f32 %v2266, %v2620
        %v2622 = vand.u32 %v825, 4294901760
        %2623 = vmatmul.f32.gmra.mxu0 %v2622
        %v2624 = vpop.f32.mrf.mxu0
        %v2625 = vadd.f32 %v2272, %v2624
        %v2626 = vand.u32 %v828, 4294901760
        %2627 = vmatmul.f32.gmra.mxu0 %v2626
        %v2628 = vpop.f32.mrf.mxu0
        %v2629 = vadd.f32 %v2278, %v2628
        %v2630 = vand.u32 %v831, 4294901760
        %2631 = vmatmul.f32.gmra.mxu0 %v2630
        %v2632 = vpop.f32.mrf.mxu0
        %v2633 = vadd.f32 %v2284, %v2632
        %v2634 = vand.u32 %v834, 4294901760
        %2635 = vmatmul.f32.gmra.mxu0 %v2634
        %v2636 = vpop.f32.mrf.mxu0
        %v2637 = vadd.f32 %v2290, %v2636
        %v2638 = vand.u32 %v837, 4294901760
        %2639 = vmatmul.f32.gmra.mxu0 %v2638
        %v2640 = vpop.f32.mrf.mxu0
        %v2641 = vadd.f32 %v2296, %v2640
        %v2642 = vand.u32 %v840, 4294901760
        %2643 = vmatmul.f32.gmra.mxu0 %v2642
        %v2644 = vpop.f32.mrf.mxu0
        %v2645 = vadd.f32 %v2302, %v2644
        %v2646 = vand.u32 %v843, 4294901760
        %2647 = vmatmul.f32.gmra.mxu0 %v2646
        %v2648 = vpop.f32.mrf.mxu0
        %v2649 = vadd.f32 %v2308, %v2648
        %v2650 = vand.u32 %v846, 4294901760
        %2651 = vmatmul.f32.gmra.mxu0 %v2650
        %v2652 = vpop.f32.mrf.mxu0
        %v2653 = vadd.f32 %v2314, %v2652
        %v2654 = vand.u32 %v849, 4294901760
        %2655 = vmatmul.f32.gmra.mxu0 %v2654
        %v2656 = vpop.f32.mrf.mxu0
        %v2657 = vadd.f32 %v2320, %v2656
        %v2658 = vand.u32 %v852, 4294901760
        %2659 = vmatmul.f32.gmra.mxu0 %v2658
        %v2660 = vpop.f32.mrf.mxu0
        %v2661 = vadd.f32 %v2326, %v2660
        %v2662 = vand.u32 %v855, 4294901760
        %2663 = vmatmul.f32.gmra.mxu0 %v2662
        %v2664 = vpop.f32.mrf.mxu0
        %v2665 = vadd.f32 %v2332, %v2664
        %v2666 = vand.u32 %v858, 4294901760
        %2667 = vmatmul.f32.gmra.mxu0 %v2666
        %v2668 = vpop.f32.mrf.mxu0
        %v2669 = vadd.f32 %v2338, %v2668
        %v2670 = vand.u32 %v861, 4294901760
        %2671 = vmatmul.f32.gmra.mxu0 %v2670
        %v2672 = vpop.f32.mrf.mxu0
        %v2673 = vadd.f32 %v2344, %v2672
        %v2674 = vand.u32 %v864, 4294901760
        %2675 = vmatmul.f32.gmra.mxu0 %v2674
        %v2676 = vpop.f32.mrf.mxu0
        %v2677 = vadd.f32 %v2350, %v2676
        %v2678 = vand.u32 %v867, 4294901760
        %2679 = vmatmul.f32.gmra.mxu0 %v2678
        %v2680 = vpop.f32.mrf.mxu0
        %v2681 = vadd.f32 %v2356, %v2680
        %v2682 = vand.u32 %v870, 4294901760
        %2683 = vmatmul.f32.gmra.mxu0 %v2682
        %v2684 = vpop.f32.mrf.mxu0
        %v2685 = vadd.f32 %v2362, %v2684
        %v2686 = vand.u32 %v873, 4294901760
        %2687 = vmatmul.f32.gmra.mxu0 %v2686
        %v2688 = vpop.f32.mrf.mxu0
        %v2689 = vadd.f32 %v2368, %v2688
        %v2690 = vand.u32 %v876, 4294901760
        %2691 = vmatmul.f32.gmra.mxu0 %v2690
        %v2692 = vpop.f32.mrf.mxu0
        %v2693 = vadd.f32 %v2374, %v2692
        %v2694 = vand.u32 %v879, 4294901760
        %2695 = vmatmul.f32.gmra.mxu0 %v2694
        %v2696 = vpop.f32.mrf.mxu0
        %v2697 = vadd.f32 %v2380, %v2696
        %v2698 = vand.u32 %v882, 4294901760
        %2699 = vmatmul.f32.gmra.mxu0 %v2698
        %v2700 = vpop.f32.mrf.mxu0
        %v2701 = vadd.f32 %v2386, %v2700
        %v2702 = vand.u32 %v885, 4294901760
        %2703 = vmatmul.f32.gmra.mxu0 %v2702
        %v2704 = vpop.f32.mrf.mxu0
        %v2705 = vadd.f32 %v2392, %v2704
        %v2706 = vand.u32 %v888, 4294901760
        %2707 = vmatmul.f32.gmra.mxu0 %v2706
        %v2708 = vpop.f32.mrf.mxu0
        %v2709 = vadd.f32 %v2398, %v2708
        %v2710 = vand.u32 %v891, 4294901760
        %2711 = vmatmul.f32.gmra.mxu0 %v2710
        %v2712 = vpop.f32.mrf.mxu0
        %v2713 = vadd.f32 %v2404, %v2712
        %v2714 = vand.u32 %v894, 4294901760
        %2715 = vmatmul.f32.gmra.mxu0 %v2714
        %v2716 = vpop.f32.mrf.mxu0
        %v2717 = vadd.f32 %v2410, %v2716
        %v2718 = vand.u32 %v897, 4294901760
        %2719 = vmatmul.f32.gmra.mxu0 %v2718
        %v2720 = vpop.f32.mrf.mxu0
        %v2721 = vadd.f32 %v2416, %v2720
        %v2722 = vand.u32 %v900, 4294901760
        %2723 = vmatmul.f32.gmra.mxu0 %v2722
        %v2724 = vpop.f32.mrf.mxu0
        %v2725 = vadd.f32 %v2422, %v2724
        %v2726 = vand.u32 %v903, 4294901760
        %2727 = vmatmul.f32.gmra.mxu0 %v2726
        %v2728 = vpop.f32.mrf.mxu0
        %v2729 = vadd.f32 %v2428, %v2728
        %v2730 = vand.u32 %v906, 4294901760
        %2731 = vmatmul.f32.gmra.mxu0 %v2730
        %v2732 = vpop.f32.mrf.mxu0
        %v2733 = vadd.f32 %v2434, %v2732
        %v2734 = vand.u32 %v909, 4294901760
        %2735 = vmatmul.f32.gmra.mxu0 %v2734
        %v2736 = vpop.f32.mrf.mxu0
        %v2737 = vadd.f32 %v2440, %v2736
        %v2738 = vand.u32 %v912, 4294901760
        %2739 = vmatmul.f32.gmra.mxu0 %v2738
        %v2740 = vpop.f32.mrf.mxu0
        %v2741 = vadd.f32 %v2446, %v2740
        %v2742 = vand.u32 %v915, 4294901760
        %2743 = vmatmul.f32.gmra.mxu0 %v2742
        %v2744 = vpop.f32.mrf.mxu0
        %v2745 = vadd.f32 %v2452, %v2744
        %v2746 = vand.u32 %v918, 4294901760
        %2747 = vmatmul.f32.gmra.mxu0 %v2746
        %v2748 = vpop.f32.mrf.mxu0
        %v2749 = vadd.f32 %v2458, %v2748
        %v2750 = vand.u32 %v921, 4294901760
        %2751 = vmatmul.f32.gmra.mxu0 %v2750
        %v2752 = vpop.f32.mrf.mxu0
        %v2753 = vadd.f32 %v2464, %v2752
        %v2754 = vand.u32 %v924, 4294901760
        %2755 = vmatmul.f32.gmra.mxu0 %v2754
        %v2756 = vpop.f32.mrf.mxu0
        %v2757 = vadd.f32 %v2470, %v2756
        %v2758 = vand.u32 %v927, 4294901760
        %2759 = vmatmul.f32.gmra.mxu0 %v2758
        %v2760 = vpop.f32.mrf.mxu0
        %v2761 = vadd.f32 %v2476, %v2760
        %v2762 = vand.u32 %v930, 4294901760
        %2763 = vmatmul.f32.gmra.mxu0 %v2762
        %v2764 = vpop.f32.mrf.mxu0
        %v2765 = vadd.f32 %v2482, %v2764
        %v2766 = vand.u32 %v933, 4294901760
        %2767 = vmatmul.f32.gmra.mxu0 %v2766
        %v2768 = vpop.f32.mrf.mxu0
        %v2769 = vadd.f32 %v2488, %v2768
        %v2770 = vand.u32 %v936, 4294901760
        %2771 = vmatmul.f32.gmra.mxu0 %v2770
        %v2772 = vpop.f32.mrf.mxu0
        %v2773 = vadd.f32 %v2494, %v2772
        %2774 = vdwg.mxu0
        %2775 = vmatpush.msra.mxu0 0.0
        %2776 = vmatpush.msra.mxu0 0.0
        %2777 = vmatpush.msra.mxu0 0.0
        %2778 = vmatpush.msra.mxu0 0.0
        %2779 = vmatpush.msra.mxu0 0.0
        %2780 = vmatpush.msra.mxu0 0.0
        %2781 = vmatpush.msra.mxu0 0.0
        %2782 = vmatpush.msra.mxu0 0.0
        %2783 = vmatpush.msra.mxu0 0.0
        %2784 = vmatpush.msra.mxu0 0.0
        %2785 = vmatpush.msra.mxu0 0.0
        %2786 = vmatpush.msra.mxu0 0.0
        %2787 = vmatpush.msra.mxu0 0.0
        %2788 = vmatpush.msra.mxu0 0.0
        %v2789 = vand.u32 %v740, 4294901760
        %2790 = vmatpush.msra.mxu0 %v2789
        %v2791 = vand.u32 %v739, 4294901760
        %2792 = vmatpush.msra.mxu0 %v2791
        %v2793 = vand.u32 %v747, 4294901760
        %2794 = vmatmul.f32.gmra.mxu0 %v2793
        %v2795 = vpop.f32.mrf.mxu0
        %v2796 = vadd.f32 %v2521, %v2795
        %v2797 = vand.u32 %v750, 4294901760
        %2798 = vmatmul.f32.gmra.mxu0 %v2797
        %v2799 = vpop.f32.mrf.mxu0
        %v2800 = vadd.f32 %v2525, %v2799
        %v2801 = vand.u32 %v753, 4294901760
        %2802 = vmatmul.f32.gmra.mxu0 %v2801
        %v2803 = vpop.f32.mrf.mxu0
        %v2804 = vadd.f32 %v2529, %v2803
        %v2805 = vand.u32 %v756, 4294901760
        %2806 = vmatmul.f32.gmra.mxu0 %v2805
        %v2807 = vpop.f32.mrf.mxu0
        %v2808 = vadd.f32 %v2533, %v2807
        %v2809 = vand.u32 %v759, 4294901760
        %2810 = vmatmul.f32.gmra.mxu0 %v2809
        %v2811 = vpop.f32.mrf.mxu0
        %v2812 = vadd.f32 %v2537, %v2811
        %v2813 = vand.u32 %v762, 4294901760
        %2814 = vmatmul.f32.gmra.mxu0 %v2813
        %v2815 = vpop.f32.mrf.mxu0
        %v2816 = vadd.f32 %v2541, %v2815
        %v2817 = vand.u32 %v765, 4294901760
        %2818 = vmatmul.f32.gmra.mxu0 %v2817
        %v2819 = vpop.f32.mrf.mxu0
        %v2820 = vadd.f32 %v2545, %v2819
        %v2821 = vand.u32 %v768, 4294901760
        %2822 = vmatmul.f32.gmra.mxu0 %v2821
        %v2823 = vpop.f32.mrf.mxu0
        %v2824 = vadd.f32 %v2549, %v2823
        %v2825 = vand.u32 %v771, 4294901760
        %2826 = vmatmul.f32.gmra.mxu0 %v2825
        %v2827 = vpop.f32.mrf.mxu0
        %v2828 = vadd.f32 %v2553, %v2827
        %v2829 = vand.u32 %v774, 4294901760
        %2830 = vmatmul.f32.gmra.mxu0 %v2829
        %v2831 = vpop.f32.mrf.mxu0
        %v2832 = vadd.f32 %v2557, %v2831
        %v2833 = vand.u32 %v777, 4294901760
        %2834 = vmatmul.f32.gmra.mxu0 %v2833
        %v2835 = vpop.f32.mrf.mxu0
        %v2836 = vadd.f32 %v2561, %v2835
        %v2837 = vand.u32 %v780, 4294901760
        %2838 = vmatmul.f32.gmra.mxu0 %v2837
        %v2839 = vpop.f32.mrf.mxu0
        %v2840 = vadd.f32 %v2565, %v2839
        %v2841 = vand.u32 %v783, 4294901760
        %2842 = vmatmul.f32.gmra.mxu0 %v2841
        %v2843 = vpop.f32.mrf.mxu0
        %v2844 = vadd.f32 %v2569, %v2843
        %v2845 = vand.u32 %v786, 4294901760
        %2846 = vmatmul.f32.gmra.mxu0 %v2845
        %v2847 = vpop.f32.mrf.mxu0
        %v2848 = vadd.f32 %v2573, %v2847
        %v2849 = vand.u32 %v789, 4294901760
        %2850 = vmatmul.f32.gmra.mxu0 %v2849
        %v2851 = vpop.f32.mrf.mxu0
        %v2852 = vadd.f32 %v2577, %v2851
        %v2853 = vand.u32 %v792, 4294901760
        %2854 = vmatmul.f32.gmra.mxu0 %v2853
        %v2855 = vpop.f32.mrf.mxu0
        %v2856 = vadd.f32 %v2581, %v2855
        %v2857 = vand.u32 %v795, 4294901760
        %2858 = vmatmul.f32.gmra.mxu0 %v2857
        %v2859 = vpop.f32.mrf.mxu0
        %v2860 = vadd.f32 %v2585, %v2859
        %v2861 = vand.u32 %v798, 4294901760
        %2862 = vmatmul.f32.gmra.mxu0 %v2861
        %v2863 = vpop.f32.mrf.mxu0
        %v2864 = vadd.f32 %v2589, %v2863
        %v2865 = vand.u32 %v801, 4294901760
        %2866 = vmatmul.f32.gmra.mxu0 %v2865
        %v2867 = vpop.f32.mrf.mxu0
        %v2868 = vadd.f32 %v2593, %v2867
        %v2869 = vand.u32 %v804, 4294901760
        %2870 = vmatmul.f32.gmra.mxu0 %v2869
        %v2871 = vpop.f32.mrf.mxu0
        %v2872 = vadd.f32 %v2597, %v2871
        %v2873 = vand.u32 %v807, 4294901760
        %2874 = vmatmul.f32.gmra.mxu0 %v2873
        %v2875 = vpop.f32.mrf.mxu0
        %v2876 = vadd.f32 %v2601, %v2875
        %v2877 = vand.u32 %v810, 4294901760
        %2878 = vmatmul.f32.gmra.mxu0 %v2877
        %v2879 = vpop.f32.mrf.mxu0
        %v2880 = vadd.f32 %v2605, %v2879
        %v2881 = vand.u32 %v813, 4294901760
        %2882 = vmatmul.f32.gmra.mxu0 %v2881
        %v2883 = vpop.f32.mrf.mxu0
        %v2884 = vadd.f32 %v2609, %v2883
        %v2885 = vand.u32 %v816, 4294901760
        %2886 = vmatmul.f32.gmra.mxu0 %v2885
        %v2887 = vpop.f32.mrf.mxu0
        %v2888 = vadd.f32 %v2613, %v2887
        %v2889 = vand.u32 %v819, 4294901760
        %2890 = vmatmul.f32.gmra.mxu0 %v2889
        %v2891 = vpop.f32.mrf.mxu0
        %v2892 = vadd.f32 %v2617, %v2891
        %v2893 = vand.u32 %v822, 4294901760
        %2894 = vmatmul.f32.gmra.mxu0 %v2893
        %v2895 = vpop.f32.mrf.mxu0
        %v2896 = vadd.f32 %v2621, %v2895
        %v2897 = vand.u32 %v825, 4294901760
        %2898 = vmatmul.f32.gmra.mxu0 %v2897
        %v2899 = vpop.f32.mrf.mxu0
        %v2900 = vadd.f32 %v2625, %v2899
        %v2901 = vand.u32 %v828, 4294901760
        %2902 = vmatmul.f32.gmra.mxu0 %v2901
        %v2903 = vpop.f32.mrf.mxu0
        %v2904 = vadd.f32 %v2629, %v2903
        %v2905 = vand.u32 %v831, 4294901760
        %2906 = vmatmul.f32.gmra.mxu0 %v2905
        %v2907 = vpop.f32.mrf.mxu0
        %v2908 = vadd.f32 %v2633, %v2907
        %v2909 = vand.u32 %v834, 4294901760
        %2910 = vmatmul.f32.gmra.mxu0 %v2909
        %v2911 = vpop.f32.mrf.mxu0
        %v2912 = vadd.f32 %v2637, %v2911
        %v2913 = vand.u32 %v837, 4294901760
        %2914 = vmatmul.f32.gmra.mxu0 %v2913
        %v2915 = vpop.f32.mrf.mxu0
        %v2916 = vadd.f32 %v2641, %v2915
        %v2917 = vand.u32 %v840, 4294901760
        %2918 = vmatmul.f32.gmra.mxu0 %v2917
        %v2919 = vpop.f32.mrf.mxu0
        %v2920 = vadd.f32 %v2645, %v2919
        %v2921 = vand.u32 %v843, 4294901760
        %2922 = vmatmul.f32.gmra.mxu0 %v2921
        %v2923 = vpop.f32.mrf.mxu0
        %v2924 = vadd.f32 %v2649, %v2923
        %v2925 = vand.u32 %v846, 4294901760
        %2926 = vmatmul.f32.gmra.mxu0 %v2925
        %v2927 = vpop.f32.mrf.mxu0
        %v2928 = vadd.f32 %v2653, %v2927
        %v2929 = vand.u32 %v849, 4294901760
        %2930 = vmatmul.f32.gmra.mxu0 %v2929
        %v2931 = vpop.f32.mrf.mxu0
        %v2932 = vadd.f32 %v2657, %v2931
        %v2933 = vand.u32 %v852, 4294901760
        %2934 = vmatmul.f32.gmra.mxu0 %v2933
        %v2935 = vpop.f32.mrf.mxu0
        %v2936 = vadd.f32 %v2661, %v2935
        %v2937 = vand.u32 %v855, 4294901760
        %2938 = vmatmul.f32.gmra.mxu0 %v2937
        %v2939 = vpop.f32.mrf.mxu0
        %v2940 = vadd.f32 %v2665, %v2939
        %v2941 = vand.u32 %v858, 4294901760
        %2942 = vmatmul.f32.gmra.mxu0 %v2941
        %v2943 = vpop.f32.mrf.mxu0
        %v2944 = vadd.f32 %v2669, %v2943
        %v2945 = vand.u32 %v861, 4294901760
        %2946 = vmatmul.f32.gmra.mxu0 %v2945
        %v2947 = vpop.f32.mrf.mxu0
        %v2948 = vadd.f32 %v2673, %v2947
        %v2949 = vand.u32 %v864, 4294901760
        %2950 = vmatmul.f32.gmra.mxu0 %v2949
        %v2951 = vpop.f32.mrf.mxu0
        %v2952 = vadd.f32 %v2677, %v2951
        %v2953 = vand.u32 %v867, 4294901760
        %2954 = vmatmul.f32.gmra.mxu0 %v2953
        %v2955 = vpop.f32.mrf.mxu0
        %v2956 = vadd.f32 %v2681, %v2955
        %v2957 = vand.u32 %v870, 4294901760
        %2958 = vmatmul.f32.gmra.mxu0 %v2957
        %v2959 = vpop.f32.mrf.mxu0
        %v2960 = vadd.f32 %v2685, %v2959
        %v2961 = vand.u32 %v873, 4294901760
        %2962 = vmatmul.f32.gmra.mxu0 %v2961
        %v2963 = vpop.f32.mrf.mxu0
        %v2964 = vadd.f32 %v2689, %v2963
        %v2965 = vand.u32 %v876, 4294901760
        %2966 = vmatmul.f32.gmra.mxu0 %v2965
        %v2967 = vpop.f32.mrf.mxu0
        %v2968 = vadd.f32 %v2693, %v2967
        %v2969 = vand.u32 %v879, 4294901760
        %2970 = vmatmul.f32.gmra.mxu0 %v2969
        %v2971 = vpop.f32.mrf.mxu0
        %v2972 = vadd.f32 %v2697, %v2971
        %v2973 = vand.u32 %v882, 4294901760
        %2974 = vmatmul.f32.gmra.mxu0 %v2973
        %v2975 = vpop.f32.mrf.mxu0
        %v2976 = vadd.f32 %v2701, %v2975
        %v2977 = vand.u32 %v885, 4294901760
        %2978 = vmatmul.f32.gmra.mxu0 %v2977
        %v2979 = vpop.f32.mrf.mxu0
        %v2980 = vadd.f32 %v2705, %v2979
        %v2981 = vand.u32 %v888, 4294901760
        %2982 = vmatmul.f32.gmra.mxu0 %v2981
        %v2983 = vpop.f32.mrf.mxu0
        %v2984 = vadd.f32 %v2709, %v2983
        %v2985 = vand.u32 %v891, 4294901760
        %2986 = vmatmul.f32.gmra.mxu0 %v2985
        %v2987 = vpop.f32.mrf.mxu0
        %v2988 = vadd.f32 %v2713, %v2987
        %v2989 = vand.u32 %v894, 4294901760
        %2990 = vmatmul.f32.gmra.mxu0 %v2989
        %v2991 = vpop.f32.mrf.mxu0
        %v2992 = vadd.f32 %v2717, %v2991
        %v2993 = vand.u32 %v897, 4294901760
        %2994 = vmatmul.f32.gmra.mxu0 %v2993
        %v2995 = vpop.f32.mrf.mxu0
        %v2996 = vadd.f32 %v2721, %v2995
        %v2997 = vand.u32 %v900, 4294901760
        %2998 = vmatmul.f32.gmra.mxu0 %v2997
        %v2999 = vpop.f32.mrf.mxu0
        %v3000 = vadd.f32 %v2725, %v2999
        %v3001 = vand.u32 %v903, 4294901760
        %3002 = vmatmul.f32.gmra.mxu0 %v3001
        %v3003 = vpop.f32.mrf.mxu0
        %v3004 = vadd.f32 %v2729, %v3003
        %v3005 = vand.u32 %v906, 4294901760
        %3006 = vmatmul.f32.gmra.mxu0 %v3005
        %v3007 = vpop.f32.mrf.mxu0
        %v3008 = vadd.f32 %v2733, %v3007
        %v3009 = vand.u32 %v909, 4294901760
        %3010 = vmatmul.f32.gmra.mxu0 %v3009
        %v3011 = vpop.f32.mrf.mxu0
        %v3012 = vadd.f32 %v2737, %v3011
        %v3013 = vand.u32 %v912, 4294901760
        %3014 = vmatmul.f32.gmra.mxu0 %v3013
        %v3015 = vpop.f32.mrf.mxu0
        %v3016 = vadd.f32 %v2741, %v3015
        %v3017 = vand.u32 %v915, 4294901760
        %3018 = vmatmul.f32.gmra.mxu0 %v3017
        %v3019 = vpop.f32.mrf.mxu0
        %v3020 = vadd.f32 %v2745, %v3019
        %v3021 = vand.u32 %v918, 4294901760
        %3022 = vmatmul.f32.gmra.mxu0 %v3021
        %v3023 = vpop.f32.mrf.mxu0
        %v3024 = vadd.f32 %v2749, %v3023
        %v3025 = vand.u32 %v921, 4294901760
        %3026 = vmatmul.f32.gmra.mxu0 %v3025
        %v3027 = vpop.f32.mrf.mxu0
        %v3028 = vadd.f32 %v2753, %v3027
        %v3029 = vand.u32 %v924, 4294901760
        %3030 = vmatmul.f32.gmra.mxu0 %v3029
        %v3031 = vpop.f32.mrf.mxu0
        %v3032 = vadd.f32 %v2757, %v3031
        %v3033 = vand.u32 %v927, 4294901760
        %3034 = vmatmul.f32.gmra.mxu0 %v3033
        %v3035 = vpop.f32.mrf.mxu0
        %v3036 = vadd.f32 %v2761, %v3035
        %v3037 = vand.u32 %v930, 4294901760
        %3038 = vmatmul.f32.gmra.mxu0 %v3037
        %v3039 = vpop.f32.mrf.mxu0
        %v3040 = vadd.f32 %v2765, %v3039
        %v3041 = vand.u32 %v933, 4294901760
        %3042 = vmatmul.f32.gmra.mxu0 %v3041
        %v3043 = vpop.f32.mrf.mxu0
        %v3044 = vadd.f32 %v2769, %v3043
        %v3045 = vand.u32 %v936, 4294901760
        %3046 = vmatmul.f32.gmra.mxu0 %v3045
        %v3047 = vpop.f32.mrf.mxu0
        %v3048 = vadd.f32 %v2773, %v3047
        %3049 = vdwg.mxu0
        %v3050 = vmax.f32 %v2796, 0.0
        %v3051 = vmax.f32 %v2800, 0.0
        %v3052 = vmax.f32 %v2804, 0.0
        %v3053 = vmax.f32 %v2808, 0.0
        %v3054 = vmax.f32 %v2812, 0.0
        %v3055 = vmax.f32 %v2816, 0.0
        %v3056 = vmax.f32 %v2820, 0.0
        %v3057 = vmax.f32 %v2824, 0.0
        %v3058 = vmax.f32 %v2828, 0.0
        %v3059 = vmax.f32 %v2832, 0.0
        %v3060 = vmax.f32 %v2836, 0.0
        %v3061 = vmax.f32 %v2840, 0.0
        %v3062 = vmax.f32 %v2844, 0.0
        %v3063 = vmax.f32 %v2848, 0.0
        %v3064 = vmax.f32 %v2852, 0.0
        %v3065 = vmax.f32 %v2856, 0.0
        %v3066 = vmax.f32 %v2860, 0.0
        %v3067 = vmax.f32 %v2864, 0.0
        %v3068 = vmax.f32 %v2868, 0.0
        %v3069 = vmax.f32 %v2872, 0.0
        %v3070 = vmax.f32 %v2876, 0.0
        %v3071 = vmax.f32 %v2880, 0.0
        %v3072 = vmax.f32 %v2884, 0.0
        %v3073 = vmax.f32 %v2888, 0.0
        %v3074 = vmax.f32 %v2892, 0.0
        %v3075 = vmax.f32 %v2896, 0.0
        %v3076 = vmax.f32 %v2900, 0.0
        %v3077 = vmax.f32 %v2904, 0.0
        %v3078 = vmax.f32 %v2908, 0.0
        %v3079 = vmax.f32 %v2912, 0.0
        %v3080 = vmax.f32 %v2916, 0.0
        %v3081 = vmax.f32 %v2920, 0.0
        %v3082 = vmax.f32 %v2924, 0.0
        %v3083 = vmax.f32 %v2928, 0.0
        %v3084 = vmax.f32 %v2932, 0.0
        %v3085 = vmax.f32 %v2936, 0.0
        %v3086 = vmax.f32 %v2940, 0.0
        %v3087 = vmax.f32 %v2944, 0.0
        %v3088 = vmax.f32 %v2948, 0.0
        %v3089 = vmax.f32 %v2952, 0.0
        %v3090 = vmax.f32 %v2956, 0.0
        %v3091 = vmax.f32 %v2960, 0.0
        %v3092 = vmax.f32 %v2964, 0.0
        %v3093 = vmax.f32 %v2968, 0.0
        %v3094 = vmax.f32 %v2972, 0.0
        %v3095 = vmax.f32 %v2976, 0.0
        %v3096 = vmax.f32 %v2980, 0.0
        %v3097 = vmax.f32 %v2984, 0.0
        %v3098 = vmax.f32 %v2988, 0.0
        %v3099 = vmax.f32 %v2992, 0.0
        %v3100 = vmax.f32 %v2996, 0.0
        %v3101 = vmax.f32 %v3000, 0.0
        %v3102 = vmax.f32 %v3004, 0.0
        %v3103 = vmax.f32 %v3008, 0.0
        %v3104 = vmax.f32 %v3012, 0.0
        %v3105 = vmax.f32 %v3016, 0.0
        %v3106 = vmax.f32 %v3020, 0.0
        %v3107 = vmax.f32 %v3024, 0.0
        %v3108 = vmax.f32 %v3028, 0.0
        %v3109 = vmax.f32 %v3032, 0.0
        %v3110 = vmax.f32 %v3036, 0.0
        %v3111 = vmax.f32 %v3040, 0.0
        %v3112 = vmax.f32 %v3044, 0.0
        %v3113 = vmax.f32 %v3048, 0.0
        %v3114 = vld [vmem:[#allocation2] sm:$0xff]
        %v3115 = vld [vmem:[#allocation2 + $0x8] sm:$0xff]
        %v3116 = vld [vmem:[#allocation2 + $0x10] sm:$0xff]
        %v3117 = vld [vmem:[#allocation2 + $0x18] sm:$0xff]
        %v3118 = vld [vmem:[#allocation2 + $0x20] sm:$0xff]
        %v3119 = vld [vmem:[#allocation2 + $0x28] sm:$0xff]
        %v3120 = vld [vmem:[#allocation2 + $0x30] sm:$0xff]
        %v3121 = vld [vmem:[#allocation2 + $0x38] sm:$0xff]
        %v3122 = vsel %vm745, %v3050, -inf
        %v3123 = vsel %vm745, %v3058, -inf
        %v3124 = vmax.f32 %v3122, %v3123
        %v3125 = vsel %vm745, %v3066, -inf
        %v3126 = vmax.f32 %v3124, %v3125
        %v3127 = vsel %vm745, %v3074, -inf
        %v3128 = vmax.f32 %v3126, %v3127
        %v3129 = vsel %vm745, %v3082, -inf
        %v3130 = vmax.f32 %v3128, %v3129
        %v3131 = vsel %vm745, %v3090, -inf
        %v3132 = vmax.f32 %v3130, %v3131
        %v3133 = vsel %vm745, %v3098, -inf
        %v3134 = vmax.f32 %v3132, %v3133
        %v3135 = vsel %vm745, %v3106, -inf
        %v3136 = vmax.f32 %v3134, %v3135
        %v3137 = vsel %vm745, %v3051, -inf
        %v3138 = vsel %vm745, %v3059, -inf
        %v3139 = vmax.f32 %v3137, %v3138
        %v3140 = vsel %vm745, %v3067, -inf
        %v3141 = vmax.f32 %v3139, %v3140
        %v3142 = vsel %vm745, %v3075, -inf
        %v3143 = vmax.f32 %v3141, %v3142
        %v3144 = vsel %vm745, %v3083, -inf
        %v3145 = vmax.f32 %v3143, %v3144
        %v3146 = vsel %vm745, %v3091, -inf
        %v3147 = vmax.f32 %v3145, %v3146
        %v3148 = vsel %vm745, %v3099, -inf
        %v3149 = vmax.f32 %v3147, %v3148
        %v3150 = vsel %vm745, %v3107, -inf
        %v3151 = vmax.f32 %v3149, %v3150
        %v3152 = vsel %vm745, %v3052, -inf
        %v3153 = vsel %vm745, %v3060, -inf
        %v3154 = vmax.f32 %v3152, %v3153
        %v3155 = vsel %vm745, %v3068, -inf
        %v3156 = vmax.f32 %v3154, %v3155
        %v3157 = vsel %vm745, %v3076, -inf
        %v3158 = vmax.f32 %v3156, %v3157
        %v3159 = vsel %vm745, %v3084, -inf
        %v3160 = vmax.f32 %v3158, %v3159
        %v3161 = vsel %vm745, %v3092, -inf
        %v3162 = vmax.f32 %v3160, %v3161
        %v3163 = vsel %vm745, %v3100, -inf
        %v3164 = vmax.f32 %v3162, %v3163
        %v3165 = vsel %vm745, %v3108, -inf
        %v3166 = vmax.f32 %v3164, %v3165
        %v3167 = vsel %vm745, %v3053, -inf
        %v3168 = vsel %vm745, %v3061, -inf
        %v3169 = vmax.f32 %v3167, %v3168
        %v3170 = vsel %vm745, %v3069, -inf
        %v3171 = vmax.f32 %v3169, %v3170
        %v3172 = vsel %vm745, %v3077, -inf
        %v3173 = vmax.f32 %v3171, %v3172
        %v3174 = vsel %vm745, %v3085, -inf
        %v3175 = vmax.f32 %v3173, %v3174
        %v3176 = vsel %vm745, %v3093, -inf
        %v3177 = vmax.f32 %v3175, %v3176
        %v3178 = vsel %vm745, %v3101, -inf
        %v3179 = vmax.f32 %v3177, %v3178
        %v3180 = vsel %vm745, %v3109, -inf
        %v3181 = vmax.f32 %v3179, %v3180
        %v3182 = vsel %vm745, %v3054, -inf
        %v3183 = vsel %vm745, %v3062, -inf
        %v3184 = vmax.f32 %v3182, %v3183
        %v3185 = vsel %vm745, %v3070, -inf
        %v3186 = vmax.f32 %v3184, %v3185
        %v3187 = vsel %vm745, %v3078, -inf
        %v3188 = vmax.f32 %v3186, %v3187
        %v3189 = vsel %vm745, %v3086, -inf
        %v3190 = vmax.f32 %v3188, %v3189
        %v3191 = vsel %vm745, %v3094, -inf
        %v3192 = vmax.f32 %v3190, %v3191
        %v3193 = vsel %vm745, %v3102, -inf
        %v3194 = vmax.f32 %v3192, %v3193
        %v3195 = vsel %vm745, %v3110, -inf
        %v3196 = vmax.f32 %v3194, %v3195
        %v3197 = vsel %vm745, %v3055, -inf
        %v3198 = vsel %vm745, %v3063, -inf
        %v3199 = vmax.f32 %v3197, %v3198
        %v3200 = vsel %vm745, %v3071, -inf
        %v3201 = vmax.f32 %v3199, %v3200
        %v3202 = vsel %vm745, %v3079, -inf
        %v3203 = vmax.f32 %v3201, %v3202
        %v3204 = vsel %vm745, %v3087, -inf
        %v3205 = vmax.f32 %v3203, %v3204
        %v3206 = vsel %vm745, %v3095, -inf
        %v3207 = vmax.f32 %v3205, %v3206
        %v3208 = vsel %vm745, %v3103, -inf
        %v3209 = vmax.f32 %v3207, %v3208
        %v3210 = vsel %vm745, %v3111, -inf
        %v3211 = vmax.f32 %v3209, %v3210
        %v3212 = vsel %vm745, %v3056, -inf
        %v3213 = vsel %vm745, %v3064, -inf
        %v3214 = vmax.f32 %v3212, %v3213
        %v3215 = vsel %vm745, %v3072, -inf
        %v3216 = vmax.f32 %v3214, %v3215
        %v3217 = vsel %vm745, %v3080, -inf
        %v3218 = vmax.f32 %v3216, %v3217
        %v3219 = vsel %vm745, %v3088, -inf
        %v3220 = vmax.f32 %v3218, %v3219
        %v3221 = vsel %vm745, %v3096, -inf
        %v3222 = vmax.f32 %v3220, %v3221
        %v3223 = vsel %vm745, %v3104, -inf
        %v3224 = vmax.f32 %v3222, %v3223
        %v3225 = vsel %vm745, %v3112, -inf
        %v3226 = vmax.f32 %v3224, %v3225
        %v3227 = vsel %vm745, %v3057, -inf
        %v3228 = vsel %vm745, %v3065, -inf
        %v3229 = vmax.f32 %v3227, %v3228
        %v3230 = vsel %vm745, %v3073, -inf
        %v3231 = vmax.f32 %v3229, %v3230
        %v3232 = vsel %vm745, %v3081, -inf
        %v3233 = vmax.f32 %v3231, %v3232
        %v3234 = vsel %vm745, %v3089, -inf
        %v3235 = vmax.f32 %v3233, %v3234
        %v3236 = vsel %vm745, %v3097, -inf
        %v3237 = vmax.f32 %v3235, %v3236
        %v3238 = vsel %vm745, %v3105, -inf
        %v3239 = vmax.f32 %v3237, %v3238
        %v3240 = vsel %vm745, %v3113, -inf
        %v3241 = vmax.f32 %v3239, %v3240
        %v3242 = vmax.f32 %v3114, %v3136
        %v3243 = vmax.f32 %v3115, %v3151
        %v3244 = vmax.f32 %v3116, %v3166
        %v3245 = vmax.f32 %v3117, %v3181
        %v3246 = vmax.f32 %v3118, %v3196
        %v3247 = vmax.f32 %v3119, %v3211
        %v3248 = vmax.f32 %v3120, %v3226
        %v3249 = vmax.f32 %v3121, %v3241
        %3250 = vst.msk [vmem:[#allocation2] sm:$0xff] %vm745, %v3242
        %3251 = vst.msk [vmem:[#allocation2 + $0x8] sm:$0xff] %vm745, %v3243
        %3252 = vst.msk [vmem:[#allocation2 + $0x10] sm:$0xff] %vm745, %v3244
        %3253 = vst.msk [vmem:[#allocation2 + $0x18] sm:$0xff] %vm745, %v3245
        %3254 = vst.msk [vmem:[#allocation2 + $0x20] sm:$0xff] %vm745, %v3246
        %3255 = vst.msk [vmem:[#allocation2 + $0x28] sm:$0xff] %vm745, %v3247
        %3256 = vst.msk [vmem:[#allocation2 + $0x30] sm:$0xff] %vm745, %v3248
        %3257 = vst.msk [vmem:[#allocation2 + $0x38] sm:$0xff] %vm745, %v3249
        %v3258 = vld [vmem:[#allocation3] sm:$0xff]
        %v3259 = vld [vmem:[#allocation3 + $0x8] sm:$0xff]
        %v3260 = vld [vmem:[#allocation3 + $0x10] sm:$0xff]
        %v3261 = vld [vmem:[#allocation3 + $0x18] sm:$0xff]
        %v3262 = vld [vmem:[#allocation3 + $0x20] sm:$0xff]
        %v3263 = vld [vmem:[#allocation3 + $0x28] sm:$0xff]
        %v3264 = vld [vmem:[#allocation3 + $0x30] sm:$0xff]
        %v3265 = vld [vmem:[#allocation3 + $0x38] sm:$0xff]
        %v3266 = vsel %vm745, %v3050, 0.0
        %v3267 = vsel %vm745, %v3058, 0.0
        %v3268 = vadd.f32 %v3266, %v3267
        %v3269 = vsel %vm745, %v3066, 0.0
        %v3270 = vadd.f32 %v3268, %v3269
        %v3271 = vsel %vm745, %v3074, 0.0
        %v3272 = vadd.f32 %v3270, %v3271
        %v3273 = vsel %vm745, %v3082, 0.0
        %v3274 = vadd.f32 %v3272, %v3273
        %v3275 = vsel %vm745, %v3090, 0.0
        %v3276 = vadd.f32 %v3274, %v3275
        %v3277 = vsel %vm745, %v3098, 0.0
        %v3278 = vadd.f32 %v3276, %v3277
        %v3279 = vsel %vm745, %v3106, 0.0
        %v3280 = vadd.f32 %v3278, %v3279
        %v3281 = vsel %vm745, %v3051, 0.0
        %v3282 = vsel %vm745, %v3059, 0.0
        %v3283 = vadd.f32 %v3281, %v3282
        %v3284 = vsel %vm745, %v3067, 0.0
        %v3285 = vadd.f32 %v3283, %v3284
        %v3286 = vsel %vm745, %v3075, 0.0
        %v3287 = vadd.f32 %v3285, %v3286
        %v3288 = vsel %vm745, %v3083, 0.0
        %v3289 = vadd.f32 %v3287, %v3288
        %v3290 = vsel %vm745, %v3091, 0.0
        %v3291 = vadd.f32 %v3289, %v3290
        %v3292 = vsel %vm745, %v3099, 0.0
        %v3293 = vadd.f32 %v3291, %v3292
        %v3294 = vsel %vm745, %v3107, 0.0
        %v3295 = vadd.f32 %v3293, %v3294
        %v3296 = vsel %vm745, %v3052, 0.0
        %v3297 = vsel %vm745, %v3060, 0.0
        %v3298 = vadd.f32 %v3296, %v3297
        %v3299 = vsel %vm745, %v3068, 0.0
        %v3300 = vadd.f32 %v3298, %v3299
        %v3301 = vsel %vm745, %v3076, 0.0
        %v3302 = vadd.f32 %v3300, %v3301
        %v3303 = vsel %vm745, %v3084, 0.0
        %v3304 = vadd.f32 %v3302, %v3303
        %v3305 = vsel %vm745, %v3092, 0.0
        %v3306 = vadd.f32 %v3304, %v3305
        %v3307 = vsel %vm745, %v3100, 0.0
        %v3308 = vadd.f32 %v3306, %v3307
        %v3309 = vsel %vm745, %v3108, 0.0
        %v3310 = vadd.f32 %v3308, %v3309
        %v3311 = vsel %vm745, %v3053, 0.0
        %v3312 = vsel %vm745, %v3061, 0.0
        %v3313 = vadd.f32 %v3311, %v3312
        %v3314 = vsel %vm745, %v3069, 0.0
        %v3315 = vadd.f32 %v3313, %v3314
        %v3316 = vsel %vm745, %v3077, 0.0
        %v3317 = vadd.f32 %v3315, %v3316
        %v3318 = vsel %vm745, %v3085, 0.0
        %v3319 = vadd.f32 %v3317, %v3318
        %v3320 = vsel %vm745, %v3093, 0.0
        %v3321 = vadd.f32 %v3319, %v3320
        %v3322 = vsel %vm745, %v3101, 0.0
        %v3323 = vadd.f32 %v3321, %v3322
        %v3324 = vsel %vm745, %v3109, 0.0
        %v3325 = vadd.f32 %v3323, %v3324
        %v3326 = vsel %vm745, %v3054, 0.0
        %v3327 = vsel %vm745, %v3062, 0.0
        %v3328 = vadd.f32 %v3326, %v3327
        %v3329 = vsel %vm745, %v3070, 0.0
        %v3330 = vadd.f32 %v3328, %v3329
        %v3331 = vsel %vm745, %v3078, 0.0
        %v3332 = vadd.f32 %v3330, %v3331
        %v3333 = vsel %vm745, %v3086, 0.0
        %v3334 = vadd.f32 %v3332, %v3333
        %v3335 = vsel %vm745, %v3094, 0.0
        %v3336 = vadd.f32 %v3334, %v3335
        %v3337 = vsel %vm745, %v3102, 0.0
        %v3338 = vadd.f32 %v3336, %v3337
        %v3339 = vsel %vm745, %v3110, 0.0
        %v3340 = vadd.f32 %v3338, %v3339
        %v3341 = vsel %vm745, %v3055, 0.0
        %v3342 = vsel %vm745, %v3063, 0.0
        %v3343 = vadd.f32 %v3341, %v3342
        %v3344 = vsel %vm745, %v3071, 0.0
        %v3345 = vadd.f32 %v3343, %v3344
        %v3346 = vsel %vm745, %v3079, 0.0
        %v3347 = vadd.f32 %v3345, %v3346
        %v3348 = vsel %vm745, %v3087, 0.0
        %v3349 = vadd.f32 %v3347, %v3348
        %v3350 = vsel %vm745, %v3095, 0.0
        %v3351 = vadd.f32 %v3349, %v3350
        %v3352 = vsel %vm745, %v3103, 0.0
        %v3353 = vadd.f32 %v3351, %v3352
        %v3354 = vsel %vm745, %v3111, 0.0
        %v3355 = vadd.f32 %v3353, %v3354
        %v3356 = vsel %vm745, %v3056, 0.0
        %v3357 = vsel %vm745, %v3064, 0.0
        %v3358 = vadd.f32 %v3356, %v3357
        %v3359 = vsel %vm745, %v3072, 0.0
        %v3360 = vadd.f32 %v3358, %v3359
        %v3361 = vsel %vm745, %v3080, 0.0
        %v3362 = vadd.f32 %v3360, %v3361
        %v3363 = vsel %vm745, %v3088, 0.0
        %v3364 = vadd.f32 %v3362, %v3363
        %v3365 = vsel %vm745, %v3096, 0.0
        %v3366 = vadd.f32 %v3364, %v3365
        %v3367 = vsel %vm745, %v3104, 0.0
        %v3368 = vadd.f32 %v3366, %v3367
        %v3369 = vsel %vm745, %v3112, 0.0
        %v3370 = vadd.f32 %v3368, %v3369
        %v3371 = vsel %vm745, %v3057, 0.0
        %v3372 = vsel %vm745, %v3065, 0.0
        %v3373 = vadd.f32 %v3371, %v3372
        %v3374 = vsel %vm745, %v3073, 0.0
        %v3375 = vadd.f32 %v3373, %v3374
        %v3376 = vsel %vm745, %v3081, 0.0
        %v3377 = vadd.f32 %v3375, %v3376
        %v3378 = vsel %vm745, %v3089, 0.0
        %v3379 = vadd.f32 %v3377, %v3378
        %v3380 = vsel %vm745, %v3097, 0.0
        %v3381 = vadd.f32 %v3379, %v3380
        %v3382 = vsel %vm745, %v3105, 0.0
        %v3383 = vadd.f32 %v3381, %v3382
        %v3384 = vsel %vm745, %v3113, 0.0
        %v3385 = vadd.f32 %v3383, %v3384
        %v3386 = vadd.f32 %v3258, %v3280
        %v3387 = vadd.f32 %v3259, %v3295
        %v3388 = vadd.f32 %v3260, %v3310
        %v3389 = vadd.f32 %v3261, %v3325
        %v3390 = vadd.f32 %v3262, %v3340
        %v3391 = vadd.f32 %v3263, %v3355
        %v3392 = vadd.f32 %v3264, %v3370
        %v3393 = vadd.f32 %v3265, %v3385
        %3394 = vst.msk [vmem:[#allocation3] sm:$0xff] %vm745, %v3386
        %3395 = vst.msk [vmem:[#allocation3 + $0x8] sm:$0xff] %vm745, %v3387
        %3396 = vst.msk [vmem:[#allocation3 + $0x10] sm:$0xff] %vm745, %v3388
        %3397 = vst.msk [vmem:[#allocation3 + $0x18] sm:$0xff] %vm745, %v3389
        %3398 = vst.msk [vmem:[#allocation3 + $0x20] sm:$0xff] %vm745, %v3390
        %3399 = vst.msk [vmem:[#allocation3 + $0x28] sm:$0xff] %vm745, %v3391
        %3400 = vst.msk [vmem:[#allocation3 + $0x30] sm:$0xff] %vm745, %v3392
        %3401 = vst.msk [vmem:[#allocation3 + $0x38] sm:$0xff] %vm745, %v3393
        %p3402 = scmp.eq.s32.totalorder %s33, 1
        // Predicated region
        $region61: #{tpu_custom_call.1} parent=39 // pred_check
          %p3403 = pneg %p3402
        $region62: #{tpu_custom_call.1} parent=39 // pred_check_branch
          %3405 = sbr.rel (%p3403) target = $region64
        $region63: #{tpu_custom_call.1} parent=39 // pred_region
          %v3406 = vld [vmem:[#allocation2] sm:$0xff]
          %v3407 = vld [vmem:[#allocation2 + $0x8] sm:$0xff]
          %v3408 = vld [vmem:[#allocation2 + $0x10] sm:$0xff]
          %v3409 = vld [vmem:[#allocation2 + $0x18] sm:$0xff]
          %v3410 = vld [vmem:[#allocation2 + $0x20] sm:$0xff]
          %v3411 = vld [vmem:[#allocation2 + $0x28] sm:$0xff]
          %v3412 = vld [vmem:[#allocation2 + $0x30] sm:$0xff]
          %v3413 = vld [vmem:[#allocation2 + $0x38] sm:$0xff]
          %vm3414 = vcmask 64512
          %v3415 = vsel %vm3414, %v3406, -inf
          %v3416 = vrot.slane %v3415, 4
          %v3417 = vmax.f32 %v3415, %v3416
          %v3418 = vrot.slane %v3417, 2
          %v3419 = vmax.f32 %v3417, %v3418
          %v3420 = vrot.slane %v3419, 1
          %v3421 = vmax.f32 %v3419, %v3420
          %v3422 = vsel %vm3414, %v3407, -inf
          %v3423 = vrot.slane %v3422, 4
          %v3424 = vmax.f32 %v3422, %v3423
          %v3425 = vrot.slane %v3424, 2
          %v3426 = vmax.f32 %v3424, %v3425
          %v3427 = vrot.slane %v3426, 1
          %v3428 = vmax.f32 %v3426, %v3427
          %v3429 = vsel %vm3414, %v3408, -inf
          %v3430 = vrot.slane %v3429, 4
          %v3431 = vmax.f32 %v3429, %v3430
          %v3432 = vrot.slane %v3431, 2
          %v3433 = vmax.f32 %v3431, %v3432
          %v3434 = vrot.slane %v3433, 1
          %v3435 = vmax.f32 %v3433, %v3434
          %v3436 = vsel %vm3414, %v3409, -inf
          %v3437 = vrot.slane %v3436, 4
          %v3438 = vmax.f32 %v3436, %v3437
          %v3439 = vrot.slane %v3438, 2
          %v3440 = vmax.f32 %v3438, %v3439
          %v3441 = vrot.slane %v3440, 1
          %v3442 = vmax.f32 %v3440, %v3441
          %v3443 = vsel %vm3414, %v3410, -inf
          %v3444 = vrot.slane %v3443, 4
          %v3445 = vmax.f32 %v3443, %v3444
          %v3446 = vrot.slane %v3445, 2
          %v3447 = vmax.f32 %v3445, %v3446
          %v3448 = vrot.slane %v3447, 1
          %v3449 = vmax.f32 %v3447, %v3448
          %v3450 = vsel %vm3414, %v3411, -inf
          %v3451 = vrot.slane %v3450, 4
          %v3452 = vmax.f32 %v3450, %v3451
          %v3453 = vrot.slane %v3452, 2
          %v3454 = vmax.f32 %v3452, %v3453
          %v3455 = vrot.slane %v3454, 1
          %v3456 = vmax.f32 %v3454, %v3455
          %v3457 = vsel %vm3414, %v3412, -inf
          %v3458 = vrot.slane %v3457, 4
          %v3459 = vmax.f32 %v3457, %v3458
          %v3460 = vrot.slane %v3459, 2
          %v3461 = vmax.f32 %v3459, %v3460
          %v3462 = vrot.slane %v3461, 1
          %v3463 = vmax.f32 %v3461, %v3462
          %v3464 = vsel %vm3414, %v3413, -inf
          %v3465 = vrot.slane %v3464, 4
          %v3466 = vmax.f32 %v3464, %v3465
          %v3467 = vrot.slane %v3466, 2
          %v3468 = vmax.f32 %v3466, %v3467
          %v3469 = vrot.slane %v3468, 1
          %v3470 = vmax.f32 %v3468, %v3469
          %v3471 = vld [vmem:[#allocation3] sm:$0xff]
          %v3472 = vld [vmem:[#allocation3 + $0x8] sm:$0xff]
          %v3473 = vld [vmem:[#allocation3 + $0x10] sm:$0xff]
          %v3474 = vld [vmem:[#allocation3 + $0x18] sm:$0xff]
          %v3475 = vld [vmem:[#allocation3 + $0x20] sm:$0xff]
          %v3476 = vld [vmem:[#allocation3 + $0x28] sm:$0xff]
          %v3477 = vld [vmem:[#allocation3 + $0x30] sm:$0xff]
          %v3478 = vld [vmem:[#allocation3 + $0x38] sm:$0xff]
          %vm3479 = vcmask 130112
          %v3480 = vsel %vm3479, %v3471, 0.0
          %v3481 = vrot.slane %v3480, 4
          %v3482 = vadd.f32 %v3480, %v3481
          %v3483 = vrot.slane %v3482, 2
          %v3484 = vadd.f32 %v3482, %v3483
          %v3485 = vrot.slane %v3484, 1
          %v3486 = vadd.f32 %v3484, %v3485
          %v3487 = vsel %vm3479, %v3472, 0.0
          %v3488 = vrot.slane %v3487, 4
          %v3489 = vadd.f32 %v3487, %v3488
          %v3490 = vrot.slane %v3489, 2
          %v3491 = vadd.f32 %v3489, %v3490
          %v3492 = vrot.slane %v3491, 1
          %v3493 = vadd.f32 %v3491, %v3492
          %v3494 = vsel %vm3479, %v3473, 0.0
          %v3495 = vrot.slane %v3494, 4
          %v3496 = vadd.f32 %v3494, %v3495
          %v3497 = vrot.slane %v3496, 2
          %v3498 = vadd.f32 %v3496, %v3497
          %v3499 = vrot.slane %v3498, 1
          %v3500 = vadd.f32 %v3498, %v3499
          %v3501 = vsel %vm3479, %v3474, 0.0
          %v3502 = vrot.slane %v3501, 4
          %v3503 = vadd.f32 %v3501, %v3502
          %v3504 = vrot.slane %v3503, 2
          %v3505 = vadd.f32 %v3503, %v3504
          %v3506 = vrot.slane %v3505, 1
          %v3507 = vadd.f32 %v3505, %v3506
          %v3508 = vsel %vm3479, %v3475, 0.0
          %v3509 = vrot.slane %v3508, 4
          %v3510 = vadd.f32 %v3508, %v3509
          %v3511 = vrot.slane %v3510, 2
          %v3512 = vadd.f32 %v3510, %v3511
          %v3513 = vrot.slane %v3512, 1
          %v3514 = vadd.f32 %v3512, %v3513
          %v3515 = vsel %vm3479, %v3476, 0.0
          %v3516 = vrot.slane %v3515, 4
          %v3517 = vadd.f32 %v3515, %v3516
          %v3518 = vrot.slane %v3517, 2
          %v3519 = vadd.f32 %v3517, %v3518
          %v3520 = vrot.slane %v3519, 1
          %v3521 = vadd.f32 %v3519, %v3520
          %v3522 = vsel %vm3479, %v3477, 0.0
          %v3523 = vrot.slane %v3522, 4
          %v3524 = vadd.f32 %v3522, %v3523
          %v3525 = vrot.slane %v3524, 2
          %v3526 = vadd.f32 %v3524, %v3525
          %v3527 = vrot.slane %v3526, 1
          %v3528 = vadd.f32 %v3526, %v3527
          %v3529 = vsel %vm3479, %v3478, 0.0
          %v3530 = vrot.slane %v3529, 4
          %v3531 = vadd.f32 %v3529, %v3530
          %v3532 = vrot.slane %v3531, 2
          %v3533 = vadd.f32 %v3531, %v3532
          %v3534 = vrot.slane %v3533, 1
          %v3535 = vadd.f32 %v3533, %v3534
          %v3536 = vmul.f32 %v3486, 0.0078125
          %v3537 = vmul.f32 %v3493, 0.0078125
          %v3538 = vmul.f32 %v3500, 0.0078125
          %v3539 = vmul.f32 %v3507, 0.0078125
          %v3540 = vmul.f32 %v3514, 0.0078125
          %v3541 = vmul.f32 %v3521, 0.0078125
          %v3542 = vmul.f32 %v3528, 0.0078125
          %v3543 = vmul.f32 %v3535, 0.0078125
          %vm3552 = vcmask 1041409
          %v3553 = vsel %vm3552, %v3428, %v3421
          %vm3554 = vcmask 1042434
          %v3555 = vsel %vm3554, %v3435, %v3553
          %vm3556 = vcmask 1043459
          %v3557 = vsel %vm3556, %v3442, %v3555
          %vm3558 = vcmask 1044484
          %v3559 = vsel %vm3558, %v3449, %v3557
          %vm3560 = vcmask 1045509
          %v3561 = vsel %vm3560, %v3456, %v3559
          %vm3562 = vcmask 1046534
          %v3563 = vsel %vm3562, %v3463, %v3561
          %vm3564 = vcmask 1047559
          %v3565 = vsel %vm3564, %v3470, %v3563
          %v3575 = vsel %vm3552, %v3537, %v3536
          %v3576 = vsel %vm3554, %v3538, %v3575
          %v3577 = vsel %vm3556, %v3539, %v3576
          %v3578 = vsel %vm3558, %v3540, %v3577
          %v3579 = vsel %vm3560, %v3541, %v3578
          %v3580 = vsel %vm3562, %v3542, %v3579
          %v3581 = vsel %vm3564, %v3543, %v3580
          %v3583 = vsel %vm3414, %v3565, %v3581
          %3584 = vst.msk [vmem:[%s362] sm:$0xff] %vm745, %v3583
        $region64: #{tpu_custom_call.1} parent=39 // pred_fallthru
          _
        %s3585 = sand.u32 %s179, 1
        %s3586 = scalar_lea.sflag [#allocation6], %s3585
        %s3587 = sand.u32 %s179, 1
        %s3588 = smul.addr %s3587, 8
        %s3589 = scalar_lea.vmem [#allocation12], %s3588
        // Predicated region
        $region65: #{tpu_custom_call.1} parent=39 // pred_check
          %p3590 = pneg %p189
        $region66: #{tpu_custom_call.1} parent=39 // pred_check_branch
          %3592 = sbr.rel (%p3590) target = $region68
        $region67: #{tpu_custom_call.1} parent=39 // pred_region
          %3594 = vsyncadd %s3586, 0
          %s3595 = smul.addr %s31, 2
          %s3596 = sadd.s32 %s32, %s3595
          %s3597 = smul.addr %s3596, 8
          %s3598 = scalar_lea.hbm %s5, %s3597
          %s3600 = sshll.u32 %s3589, 4
          %s3601 = int_to_ptr.vmem [resolvable:$true] %s3600
          %s3602 = sshll.u32 %s3598, 4
          %s3603 = int_to_ptr.hbm [resolvable:$true] %s3602
          %3605 = dma.vmem_to_hbm [thread:$0]  %s3601, 128, %s3603, %s3586
        $region68: #{tpu_custom_call.1} parent=39 // pred_fallthru
          _
      $region40: #{tpu_custom_call.1} parent=5 // pred_fallthru
        _
      %p3606 = scmp.le.s32.totalorder 2, %s21
      // Predicated region
      $region69: #{tpu_custom_call.1} parent=5 // pred_check
        %p3607 = pneg %p3606
      $region70: #{tpu_custom_call.1} parent=5 // pred_check_branch
        %3609 = sbr.rel (%p3607) target = $region72
      $region71: #{tpu_custom_call.1} parent=5 // pred_region
        %s3610 = ssub.s32 %s21, 2
        // Predicated region
        $region73: #{tpu_custom_call.1} parent=71 // pred_check
          %p3611 = pneg %p195
        $region74: #{tpu_custom_call.1} parent=71 // pred_check_branch
          %3613 = sbr.rel (%p3611) target = $region76
        $region75: #{tpu_custom_call.1} parent=71 // pred_region
          %s3614 = sand.u32 %s180, 1
          %s3615 = scalar_lea.sflag [#allocation6], %s3614
          %s3616 = sand.u32 %s180, 1
          %s3617 = smul.addr %s3616, 8
          %s3618 = scalar_lea.vmem [#allocation12], %s3617
          %3620 = dma.done %s3615, 128
        $region76: #{tpu_custom_call.1} parent=71 // pred_fallthru
          _
      $region72: #{tpu_custom_call.1} parent=5 // pred_fallthru
        _
    $region6: #{tpu_custom_call.1} parent=1 // loop_footer
      %s25 = sadd.s32 1, %s21
    $region7: #{tpu_custom_call.1} parent=1 // loop_footer_branch
      %20 = sbr.rel target = $region3
    $region8: #{tpu_custom_call.1} parent=1 // loop_exit
      _
    %3621 = vsyncpa [#allocation5], 1
    %s3622 = scalar_lea.sflag [#allocation5], 1
    %3623 = vsyncpa %s3622, 1
    %3624 = vsyncpa [#allocation8], 1
    %s3625 = scalar_lea.sflag [#allocation8], 1
    %3626 = vsyncpa %s3625, 1
    %3627 = vsyncpa [#allocation11], 1
    %3628 = vsyncpa [#allocation6], 1
    %s3629 = scalar_lea.sflag [#allocation6], 1
    %3630 = vsyncpa %s3629, 1

</llo_original>
